<compile_context>
chip_gen: v7x
topology: tpu7x:2x2x1
jax: 0.10.0
libtpu: 0.0.40
codegen_flags: <defaults>
</compile_context>

<pallas_src>
import math

import jax
import jax.numpy as jnp
from jax.experimental import pallas as pl
from jax.experimental.pallas import tpu as pltpu

_MIB = 1 << 20
# Below this many multiply-accumulates, pallas_call/grid + padding overhead
# dominates and the 256x256 MXU is mostly idle -> fall back to plain XLA.
_PALLAS_MIN_MACS = 1 << 22  # ~4M MACs


def _round_up(x: int, m: int) -> int:
    return (x + m - 1) // m * m


def _sublane_multiple(dtype) -> int:
    # Sub-32-bit dtypes pack along sublanes: 8 (f32), 16 (bf16), 32 (int8/fp8).
    return {4: 8, 2: 16, 1: 32}.get(jnp.dtype(dtype).itemsize, 8)


def _maybe_pad2(a, rows: int, cols: int):
    r, c = a.shape
    if r == rows and c == cols:
        return a  # skip the extra read+write pass when already tile-aligned
    return jnp.pad(a, ((0, rows - r), (0, cols - c)))


# ----------------------------------------------------------------------------
# Kernels
# ----------------------------------------------------------------------------
def _linear_kernel_fused(x_ref, w_ref, b_ref, o_ref):
    # Single-K fast path: whole contraction in one tile -> no scratch, no gates.
    out = jnp.dot(x_ref[...], w_ref[...], preferred_element_type=jnp.float32)
    o_ref[...] = (out + b_ref[...]).astype(o_ref.dtype)


def _linear_kernel_acc(x_ref, w_ref, b_ref, o_ref, acc_ref):
    # x_ref: (tm, tk), w_ref: (tk, tn) [(I,O)-major], b_ref: (1, tn) f32,
    # o_ref: (tm, tn), acc_ref: (tm, tn) f32 resident accumulator.
    k = pl.program_id(2)

    @pl.when(k == 0)
    def _():
        acc_ref[...] = jnp.zeros_like(acc_ref)

    acc_ref[...] += jnp.dot(x_ref[...], w_ref[...],
                            preferred_element_type=jnp.float32)

    @pl.when(k == pl.num_programs(2) - 1)
    def _():
        o_ref[...] = (acc_ref[...] + b_ref[...]).astype(o_ref.dtype)


# ----------------------------------------------------------------------------
# Wrappers
# ----------------------------------------------------------------------------
def feature_transformer_wio(x, w_io, bias, *, use_bf16_matmul=False):
    """y = x @ w_io + bias, with the weight already in (input_dim, output_dim)
    layout (transpose hoisted out of the hot path)."""
    *lead, in_dim = x.shape
    k_dim, out_dim = w_io.shape
    assert k_dim == in_dim, (k_dim, in_dim)

    m = math.prod(lead) if lead else 1
    out_dtype = x.dtype

    if m == 0:  # empty-batch guard (avoids a zero-extent grid)
        return jnp.zeros((*lead, out_dim), out_dtype)

    # Small-problem bypass: fixed kernel overhead + K/N padding dominate.
    if m * in_dim * out_dim < _PALLAS_MIN_MACS:
        y = jnp.dot(x.reshape(m, in_dim), w_io,
                    preferred_element_type=jnp.float32)
        y = y + bias.astype(jnp.float32)
        return y.astype(out_dtype).reshape(*lead, out_dim)

    # bf16 MXU path (f32 accumulate) is opt-in: precision tradeoff vs f32 Linear.
    dot_dtype = jnp.bfloat16 if use_bf16_matmul else x.dtype
    in_bytes = jnp.dtype(dot_dtype).itemsize
    out_bytes = jnp.dtype(out_dtype).itemsize

    # Tile sizes: as large as comfortably fits the VMEM budget on every
    # generation (v7x has only 64 MiB physical VMEM); min() fallback keeps
    # small dims at their (sublane,128)-aligned padded extent.
    tm = min(512, _round_up(m, _sublane_multiple(dot_dtype)))
    tn = min(512, _round_up(out_dim, 128))
    tk = min(1024, _round_up(in_dim, 128))

    mp = _round_up(m, tm)
    # v7x has 2 TensorCores sharded over the "parallel" grid axes: make sure at
    # least 2 parallel blocks exist whenever out_dim permits (split N, not M).
    if mp // tm == 1 and _round_up(out_dim, tn) // tn == 1 and tn > 128:
        tn = max(128, _round_up(-(-out_dim // 2), 128))
    kp = _round_up(in_dim, tk)
    np_ = _round_up(out_dim, tn)

    grid_m, grid_n, grid_k = mp // tm, np_ // tn, kp // tk

    x_p = _maybe_pad2(x.reshape(m, in_dim).astype(dot_dtype), mp, kp)
    w_p = _maybe_pad2(w_io.astype(dot_dtype), kp, np_)
    b_p = bias.astype(jnp.float32)
    if np_ != out_dim:
        b_p = jnp.pad(b_p, (0, np_ - out_dim))
    b_p = b_p.reshape(1, np_)

    # Advisory cost estimate accounting for HBM re-reads.
    cost = pl.CostEstimate(
        flops=2 * m * in_dim * out_dim,
        transcendentals=0,
        bytes_accessed=(mp * kp * in_bytes * grid_n
                        + kp * np_ * in_bytes * grid_m
                        + np_ * 4
                        + mp * np_ * out_bytes),
    )

    # Double-buffered x/W/out tiles + f32 accumulator + bias + margin; clamp to
    # a range that is safe on v5e (16 MiB default) and v7x (64 MiB physical).
    working = (2 * (tm * tk + tk * tn) * in_bytes
               + 2 * tm * tn * out_bytes
               + tm * tn * 4 + 2 * tn * 4)
    vmem_limit = int(min(max(working + 8 * _MIB, 32 * _MIB), 48 * _MIB))

    if grid_k == 1:
        kernel = _linear_kernel_fused
        grid_spec = pltpu.PrefetchScalarGridSpec(
            num_scalar_prefetch=0,
            grid=(grid_m, grid_n),
            in_specs=[
                pl.BlockSpec((tm, tk), lambda i, j: (i, 0)),  # x tile
                pl.BlockSpec((tk, tn), lambda i, j: (0, j)),  # W (I,O) tile
                pl.BlockSpec((1, tn), lambda i, j: (0, j)),   # bias tile
            ],
            out_specs=pl.BlockSpec((tm, tn), lambda i, j: (i, j)),
        )
        dims = ("parallel", "parallel")
    else:
        kernel = _linear_kernel_acc
        grid_spec = pltpu.PrefetchScalarGridSpec(
            num_scalar_prefetch=0,
            grid=(grid_m, grid_n, grid_k),
            in_specs=[
                pl.BlockSpec((tm, tk), lambda i, j, k: (i, k)),  # x tile
                pl.BlockSpec((tk, tn), lambda i, j, k: (k, j)),  # W (I,O) tile
                pl.BlockSpec((1, tn), lambda i, j, k: (0, j)),   # bias tile
            ],
            out_specs=pl.BlockSpec((tm, tn), lambda i, j, k: (i, j)),
            scratch_shapes=[pltpu.VMEM((tm, tn), jnp.float32)],
        )
        dims = ("parallel", "parallel", "arbitrary")

    out = pl.pallas_call(
        kernel,
        out_shape=jax.ShapeDtypeStruct((mp, np_), out_dtype),
        grid_spec=grid_spec,
        compiler_params=pltpu.CompilerParams(
            dimension_semantics=dims,
            vmem_limit_bytes=vmem_limit,
        ),
        cost_estimate=cost,
    )(x_p, w_p, b_p)

    if mp != m or np_ != out_dim:
        out = out[:m, :out_dim]
    return out.reshape(*lead, out_dim)


def feature_transformer(x, weight, bias, *, use_bf16_matmul=False):
    """torch.nn.Linear forward: y = x @ weight.T + bias, weight of shape (out, in).

    For repeated calls, store the weight pre-transposed in (in, out) layout and
    call feature_transformer_wio directly (hoists the transpose off the hot path).
    """
    return feature_transformer_wio(x, weight.T, bias,
                                   use_bf16_matmul=use_bf16_matmul)


def init_linear_params(key, input_dim, output_dim, dtype=jnp.float32):
    # Mirrors torch.nn.Linear's uniform(-1/sqrt(fan_in), 1/sqrt(fan_in)) init.
    kw, kb = jax.random.split(key)
    bound = 1.0 / (input_dim ** 0.5)
    weight = jax.random.uniform(kw, (output_dim, input_dim), dtype,
                                minval=-bound, maxval=bound)
    bias = jax.random.uniform(kb, (output_dim,), dtype,
                              minval=-bound, maxval=bound)
    return weight, bias


if __name__ == "__main__":
    jax.config.update("jax_default_matmul_precision", "highest")
    key = jax.random.PRNGKey(0)
    k1, k2, k3, k4, k5, k6 = jax.random.split(key, 6)

    # --- Test A: module-sized small shape (takes the small-problem bypass) ----
    batch, seq, in_dim, out_dim = 2, 8, 32, 64
    x_a = jax.random.normal(k1, (batch, seq, in_dim), jnp.float32)
    w_a, b_a = init_linear_params(k2, in_dim, out_dim)
    y_a = jax.block_until_ready(feature_transformer(x_a, w_a, b_a))
    ref_a = x_a @ w_a.T + b_a
    assert y_a.shape == (batch, seq, out_dim)
    assert jnp.allclose(y_a, ref_a, atol=1e-4, rtol=1e-4)

    # --- Test B: exercises the Pallas single-K fused kernel -------------------
    batch, seq, in_dim, out_dim = 2, 128, 256, 512
    x_b = jax.random.normal(k3, (batch, seq, in_dim), jnp.float32)
    w_b, b_b = init_linear_params(k4, in_dim, out_dim)
    y_b = jax.block_until_ready(feature_transformer(x_b, w_b, b_b))
    ref_b = x_b @ w_b.T + b_b
    assert y_b.shape == (batch, seq, out_dim)
    assert jnp.allclose(y_b, ref_b, atol=2e-3, rtol=2e-3)

    # bf16 MXU path (opt-in, f32 accumulate) — looser tolerance by construction.
    y_b16 = jax.block_until_ready(
        feature_transformer(x_b, w_b, b_b, use_bf16_matmul=True))
    assert jnp.allclose(y_b16, ref_b, atol=5e-2, rtol=5e-2)

    # --- Test C: exercises the Pallas multi-K accumulator kernel --------------
    batch, seq, in_dim, out_dim = 2, 64, 2048, 1024
    x_c = jax.random.normal(k5, (batch, seq, in_dim), jnp.float32)
    w_c, b_c = init_linear_params(k6, in_dim, out_dim)
    y_c = jax.block_until_ready(feature_transformer(x_c, w_c, b_c))
    ref_c = x_c @ w_c.T + b_c
    assert y_c.shape == (batch, seq, out_dim)
    assert jnp.allclose(y_c, ref_c, atol=2e-3, rtol=2e-3)

    print("KERNEL_OK")
</pallas_src>

<mosaic_0001>
module attributes {stable_mosaic.version = 11 : i64} {
  func.func @_linear_kernel_fused(%arg0: i32, %arg1: i32, %arg2: memref<256x256xf32, #tpu.memory_space<vmem>>, %arg3: memref<256x256xf32, #tpu.memory_space<vmem>>, %arg4: memref<1x256xf32, #tpu.memory_space<vmem>>, %arg5: memref<256x256xf32, #tpu.memory_space<vmem>>) attributes {dimension_semantics = [#tpu.dimension_semantics<parallel>, #tpu.dimension_semantics<parallel>], iteration_bounds = array<i64: 1, 2>, scalar_prefetch = 0 : i64, scratch_operands = 0 : i64, tpu.core_type = #tpu.core_type<tc>, window_params = [{transform_indices = @transform_0, window_bounds = array<i64: 256, 256>}, {transform_indices = @transform_1, window_bounds = array<i64: 256, 256>}, {transform_indices = @transform_2, window_bounds = array<i64: 1, 256>}, {transform_indices = @transform_3, window_bounds = array<i64: 256, 256>}]} {
    %c0 = arith.constant 0 : index
    %c0_0 = arith.constant 0 : index
    %0 = vector.load %arg2[%c0, %c0_0] : memref<256x256xf32, #tpu.memory_space<vmem>>, vector<256x256xf32>
    %c0_1 = arith.constant 0 : index
    %c0_2 = arith.constant 0 : index
    %1 = vector.load %arg3[%c0_1, %c0_2] : memref<256x256xf32, #tpu.memory_space<vmem>>, vector<256x256xf32>
    %cst = arith.constant dense<0.000000e+00> : vector<256x256xf32>
    %2 = tpu.matmul %0, %1, %cst {dimension_numbers = #tpu.dot_dimension_numbers<[1], [0], [0], [1], [0, 0, 1, 1], [], []>, precision = #tpu.contract_precision<fp32>} : vector<256x256xf32>, vector<256x256xf32>, vector<256x256xf32> -> vector<256x256xf32>
    %c0_3 = arith.constant 0 : index
    %c0_4 = arith.constant 0 : index
    %3 = vector.load %arg4[%c0_3, %c0_4] : memref<1x256xf32, #tpu.memory_space<vmem>>, vector<1x256xf32>
    %4 = vector.broadcast %3 : vector<1x256xf32> to vector<256x256xf32>
    %5 = arith.addf %2, %4 : vector<256x256xf32>
    %c0_5 = arith.constant 0 : index
    %c0_6 = arith.constant 0 : index
    %6 = vector.load %arg5[%c0_5, %c0_6] : memref<256x256xf32, #tpu.memory_space<vmem>>, vector<256x256xf32>
    tpu.vector_store %arg5[%c0_5, %c0_6], %5 {strides = array<i32>} : memref<256x256xf32, #tpu.memory_space<vmem>>, vector<256x256xf32>,
    return
  }
  func.func @transform_0(%arg0: i32, %arg1: i32) -> (i32, i32) {
    %c0_i32 = arith.constant 0 : i32
    %c0_i32_0 = arith.constant 0 : i32
    return %arg0, %c0_i32 : i32, i32
  }
  func.func @transform_1(%arg0: i32, %arg1: i32) -> (i32, i32) {
    %c0_i32 = arith.constant 0 : i32
    %c0_i32_0 = arith.constant 0 : i32
    return %c0_i32, %arg1 : i32, i32
  }
  func.func @transform_2(%arg0: i32, %arg1: i32) -> (i32, i32) {
    %c0_i32 = arith.constant 0 : i32
    %c0_i32_0 = arith.constant 0 : i32
    return %c0_i32, %arg1 : i32, i32
  }
  func.func @transform_3(%arg0: i32, %arg1: i32) -> (i32, i32) {
    %c0_i32 = arith.constant 0 : i32
    return %arg0, %arg1 : i32, i32
  }
}

</mosaic_0001>

<llo_original>
// kernel: tpu_custom_call.1
$region0: #{tpu_custom_call.1}
  #allocation0 [shape = 'u32[]', space=smem, size = 0x4, offset = 0x4, fixed_abs, tag = 'smem constant byte address 0x4 - core index']
  #allocation1 [shape = 'u32[144,128]{1,0:T(1,128)}', space=vmem, size = 0x12000, scoped, tag = 'internal scratch']
  %s0 = inlined_call_operand.hbm [shape: f32[256,256], index: 0, kind: input, shape index: {}]
  %s1 = inlined_call_operand.hbm [shape: f32[256,512], index: 1, kind: input, shape index: {}]
  %s2 = inlined_call_operand.vmem [shape: f32[1,512], index: 2, kind: input, shape index: {}]
  %s3 = inlined_call_operand.hbm [shape: f32[256,512], index: 3, kind: output, shape index: {}]
  %s4 = sld [smem:[#allocation0]]
  $region53: #{tpu_custom_call.1} parent=0
    _
  %s6 = ssub.s32 1, %s4
  %s7 = scalar_select 0, %s6, %s4
  $region1: #{tpu_custom_call.1} parent=0
    #allocation2 [shape = 'u8[262144]{0}', space=vmem, size = 0x40000, scoped, tag = 'input window, operand 0, single buffered']
    #allocation3 [shape = 's32[2]{0}', space=sflag, size = 0x8, scoped, tag = 'scoped memory for tpu_custom_call.1']
    #allocation4 [shape = 's32[2]{0}', space=sflag, size = 0x8, scoped, tag = 'scoped memory for tpu_custom_call.1']
    #allocation5 [shape = 'u8[524288]{0}', space=vmem, size = 0x80000, scoped, tag = 'input window, operand 1']
    #allocation6 [shape = 's32[2]{0}', space=sflag, size = 0x8, scoped, tag = 'scoped memory for tpu_custom_call.1']
    #allocation7 [shape = 'u8[524288]{0}', space=vmem, size = 0x80000, scoped, tag = 'output window, operand 0']
    %8 = vsyncpa [#allocation3], 0
    %9 = vsyncpa [#allocation6], 0
    %s10 = scalar_lea.sflag [#allocation6], 1
    %11 = vsyncpa %s10, 0
    %12 = vsyncpa [#allocation4], 0
    %s13 = scalar_lea.sflag [#allocation4], 1
    %14 = vsyncpa %s13, 0
    loop: start=0, step=1, limit=4
    $region2: #{tpu_custom_call.1} parent=1 // loop_pre_header
      _
    $region3: #{tpu_custom_call.1} parent=1 // loop_header
      %s16 = sphi 0, %s20
      %p17 = scmp.ge.s32.totalorder %s16, 4
      %s23 = sphi 0, %s35
      %s24 = sphi 0, %s31
      %s25 = sphi 0, %s23
      %s26 = sphi 0, %s24
      %s27 = sphi 0, %s25
      %s28 = sphi 0, %s26
      %s38 = sphi 0, %s40
      %s41 = sphi 0, %s38
      %s42 = sphi 0, %s41
      %s58 = sphi 0, %s42
      %s64 = sphi 0, %s66
      %s67 = sphi 0, %s64
      %s68 = sphi 0, %s67
      %s84 = sphi 0, %s68
      %s90 = sphi 0, %s92
      %s93 = sphi 0, %s90
      %s94 = sphi 0, %s93
      %s110 = sphi 0, %s94
      %s118 = sphi 0, %s120
      %s121 = sphi 0, %s118
      %s122 = sphi 0, %s121
      %s138 = sphi 0, %s122
    $region4: #{tpu_custom_call.1} parent=1 // loop_header_branch
      %19 = sbr.rel (%p17) target = $region8
    $region5: #{tpu_custom_call.1} parent=1 // loop_body
      %s21 = ssub.s32 %s16, 1
      %s22 = ssub.s32 %s16, 2
      %s29 = sadd.s32 1, %s24
      %p30 = scmp.ge.s32.totalorder %s29, 2
      %s31 = scalar_select %p30, 0, %s29
      %s32 = sadd.s32 1, %s23
      %s33 = scalar_select %p30, %s32, %s23
      %p34 = scmp.ge.s32.totalorder %s33, 1
      %s35 = scalar_select %p34, 0, %s33
      %s36 = ssub.s32 %s23, %s35
      %p37 = scmp.eq.s32.totalorder %s36, 0
      %s39 = sadd.s32 %s38, 1
      %s40 = scalar_select %p37, %s38, %s39
      %p43 = pneg %p37
      %p44 = scmp.eq.s32.totalorder %s16, 1
      %p45 = por %p43, %p44
      %p46 = scmp.ne.s32.totalorder %s38, %s41
      %p47 = scmp.eq.s32.totalorder %s16, 0
      %p48 = por %p46, %p47
      %p49 = scmp.ne.s32.totalorder %s38, %s41
      %p50 = scmp.eq.s32.totalorder %s21, 1
      %p51 = por %p49, %p50
      %p52 = scmp.ne.s32.totalorder %s41, %s42
      %p53 = scmp.eq.s32.totalorder %s21, 0
      %p54 = por %p52, %p53
      %p55 = scmp.ne.s32.totalorder %s41, %s42
      %p56 = scmp.eq.s32.totalorder %s22, 1
      %p57 = por %p55, %p56
      %p59 = scmp.ne.s32.totalorder %s42, %s58
      %p60 = scmp.eq.s32.totalorder %s22, 0
      %p61 = por %p59, %p60
      %s62 = ssub.s32 %s24, %s31
      %p63 = scmp.eq.s32.totalorder %s62, 0
      %s65 = sadd.s32 %s64, 1
      %s66 = scalar_select %p63, %s64, %s65
      %p69 = pneg %p63
      %p70 = scmp.eq.s32.totalorder %s16, 1
      %p71 = por %p69, %p70
      %p72 = scmp.ne.s32.totalorder %s64, %s67
      %p73 = scmp.eq.s32.totalorder %s16, 0
      %p74 = por %p72, %p73
      %p75 = scmp.ne.s32.totalorder %s64, %s67
      %p76 = scmp.eq.s32.totalorder %s21, 1
      %p77 = por %p75, %p76
      %p78 = scmp.ne.s32.totalorder %s67, %s68
      %p79 = scmp.eq.s32.totalorder %s21, 0
      %p80 = por %p78, %p79
      %p81 = scmp.ne.s32.totalorder %s67, %s68
      %p82 = scmp.eq.s32.totalorder %s22, 1
      %p83 = por %p81, %p82
      %p85 = scmp.ne.s32.totalorder %s68, %s84
      %p86 = scmp.eq.s32.totalorder %s22, 0
      %p87 = por %p85, %p86
      %s88 = ssub.s32 %s24, %s31
      %p89 = scmp.eq.s32.totalorder %s88, 0
      %s91 = sadd.s32 %s90, 1
      %s92 = scalar_select %p89, %s90, %s91
      %p95 = pneg %p89
      %p96 = scmp.eq.s32.totalorder %s16, 1
      %p97 = por %p95, %p96
      %p98 = scmp.ne.s32.totalorder %s90, %s93
      %p99 = scmp.eq.s32.totalorder %s16, 0
      %p100 = por %p98, %p99
      %p101 = scmp.ne.s32.totalorder %s90, %s93
      %p102 = scmp.eq.s32.totalorder %s21, 1
      %p103 = por %p101, %p102
      %p104 = scmp.ne.s32.totalorder %s93, %s94
      %p105 = scmp.eq.s32.totalorder %s21, 0
      %p106 = por %p104, %p105
      %p107 = scmp.ne.s32.totalorder %s93, %s94
      %p108 = scmp.eq.s32.totalorder %s22, 1
      %p109 = por %p107, %p108
      %p111 = scmp.ne.s32.totalorder %s94, %s110
      %p112 = scmp.eq.s32.totalorder %s22, 0
      %p113 = por %p111, %p112
      %s114 = ssub.s32 %s23, %s35
      %s115 = ssub.s32 %s24, %s31
      %s116 = sor.u32 %s114, %s115
      %p117 = scmp.eq.s32.totalorder %s116, 0
      %s119 = sadd.s32 %s118, 1
      %s120 = scalar_select %p117, %s118, %s119
      %p123 = pneg %p117
      %p124 = scmp.eq.s32.totalorder %s16, 1
      %p125 = por %p123, %p124
      %p126 = scmp.ne.s32.totalorder %s118, %s121
      %p127 = scmp.eq.s32.totalorder %s16, 0
      %p128 = por %p126, %p127
      %p129 = scmp.ne.s32.totalorder %s118, %s121
      %p130 = scmp.eq.s32.totalorder %s21, 1
      %p131 = por %p129, %p130
      %p132 = scmp.ne.s32.totalorder %s121, %s122
      %p133 = scmp.eq.s32.totalorder %s21, 0
      %p134 = por %p132, %p133
      %p135 = scmp.ne.s32.totalorder %s121, %s122
      %p136 = scmp.eq.s32.totalorder %s22, 1
      %p137 = por %p135, %p136
      %p139 = scmp.ne.s32.totalorder %s122, %s138
      %p140 = scmp.eq.s32.totalorder %s22, 0
      %p141 = por %p139, %p140
      %p142 = scmp.le.s32.totalorder 1, %s16
      %p143 = scmp.lt.s32.totalorder %s16, 3
      %p144 = pnand %p142, %p143
      %p145 = pneg %p144
      // Predicated region
      $region9: #{tpu_custom_call.1} parent=5 // pred_check
        _
      $region10: #{tpu_custom_call.1} parent=5 // pred_check_branch
        %147 = sbr.rel (%p144) target = $region12
      $region11: #{tpu_custom_call.1} parent=5 // pred_region
        %s148 = ssub.s32 %s16, 1
        // Predicated region
        $region13: #{tpu_custom_call.1} parent=11 // pred_check
          %p149 = pneg %p54
        $region14: #{tpu_custom_call.1} parent=11 // pred_check_branch
          %151 = sbr.rel (%p149) target = $region16
        $region15: #{tpu_custom_call.1} parent=11 // pred_region
          %s152 = smul.u32 32, %s25
          %s154 = ssub.s32 8192, 8192
          %155 = vsyncadd [#allocation3], %s154
          %s156 = smul.addr %s152, 2
          %s157 = smul.addr %s156, 128
          %s158 = scalar_lea.hbm %s0, %s157
          %s159 = sshll.u32 [#allocation2], 4
          %s160 = int_to_ptr.vmem [resolvable:$true] %s159
          %165 = dma.hbm_to_vmem [thread:$0]  %s158, 8192, %s160, [#allocation3], 256, 256, 16
        $region16: #{tpu_custom_call.1} parent=11 // pred_fallthru
          _
      $region12: #{tpu_custom_call.1} parent=5 // pred_fallthru
        _
      %p166 = scmp.lt.s32.totalorder %s16, 2
      // Predicated region
      $region17: #{tpu_custom_call.1} parent=5 // pred_check
        %p167 = pneg %p166
      $region18: #{tpu_custom_call.1} parent=5 // pred_check_branch
        %169 = sbr.rel (%p167) target = $region20
      $region19: #{tpu_custom_call.1} parent=5 // pred_region
        // Predicated region
        $region21: #{tpu_custom_call.1} parent=19 // pred_check
          %p170 = pneg %p74
        $region22: #{tpu_custom_call.1} parent=19 // pred_check_branch
          %172 = sbr.rel (%p170) target = $region24
        $region23: #{tpu_custom_call.1} parent=19 // pred_region
          %s173 = sand.u32 %s64, 1
          %s174 = scalar_lea.sflag [#allocation6], %s173
          %s175 = sand.u32 %s64, 1
          %s176 = smul.addr %s175, 512
          %s177 = scalar_lea.vmem [#allocation5], %s176
          %s178 = smul.u32 2, %s24
          %s180 = ssub.s32 8192, 8192
          %181 = vsyncadd %s174, %s180
          %s182 = smul.addr %s178, 128
          %s183 = scalar_lea.hbm %s1, %s182
          %s184 = sshll.u32 %s177, 4
          %s185 = int_to_ptr.vmem [resolvable:$true] %s184
          %190 = dma.hbm_to_vmem [thread:$0]  %s183, 8192, %s185, %s174, 512, 256, 16
        $region24: #{tpu_custom_call.1} parent=19 // pred_fallthru
          _
        // Predicated region
        $region25: #{tpu_custom_call.1} parent=19 // pred_check
          %p191 = pneg %p100
        $region26: #{tpu_custom_call.1} parent=19 // pred_check_branch
          %193 = sbr.rel (%p191) target = $region28
        $region27: #{tpu_custom_call.1} parent=19 // pred_region
          %s194 = smul.u32 2, %s24
          %p195 = scmp.lt.s32.totalorder %s194, 3
          %s196 = scalar_select %p195, %s194, 3
          %s197 = scalar_lea.vmem %s2, %s196
          %s198 = smul.u32 2, %s24
        $region28: #{tpu_custom_call.1} parent=19 // pred_fallthru
          _
      $region20: #{tpu_custom_call.1} parent=5 // pred_fallthru
        _
      %p199 = scmp.le.s32.totalorder 1, %s16
      %p200 = scmp.lt.s32.totalorder %s16, 3
      %p201 = pnand %p199, %p200
      %p202 = pneg %p201
      // Predicated region
      $region29: #{tpu_custom_call.1} parent=5 // pred_check
        _
      $region30: #{tpu_custom_call.1} parent=5 // pred_check_branch
        %204 = sbr.rel (%p201) target = $region32
      $region31: #{tpu_custom_call.1} parent=5 // pred_region
        %s205 = ssub.s32 %s16, 1
        // Predicated region
        $region33: #{tpu_custom_call.1} parent=31 // pred_check
          %p206 = pneg %p54
        $region34: #{tpu_custom_call.1} parent=31 // pred_check_branch
          %208 = sbr.rel (%p206) target = $region36
        $region35: #{tpu_custom_call.1} parent=31 // pred_region
          %209 = dma.done [#allocation3], 8192
        $region36: #{tpu_custom_call.1} parent=31 // pred_fallthru
          _
        %s210 = sand.u32 %s67, 1
        %s211 = scalar_lea.sflag [#allocation6], %s210
        %s212 = sand.u32 %s67, 1
        %s213 = smul.addr %s212, 512
        %s214 = scalar_lea.vmem [#allocation5], %s213
        // Predicated region
        $region37: #{tpu_custom_call.1} parent=31 // pred_check
          %p215 = pneg %p80
        $region38: #{tpu_custom_call.1} parent=31 // pred_check_branch
          %217 = sbr.rel (%p215) target = $region40
        $region39: #{tpu_custom_call.1} parent=31 // pred_region
          %218 = dma.done %s211, 8192
        $region40: #{tpu_custom_call.1} parent=31 // pred_fallthru
          _
        %p219 = pneg %p54
        %p220 = pneg %p51
        %s221 = sand.u32 %s67, 1
        %s222 = scalar_lea.sflag [#allocation6], %s221
        %s223 = sand.u32 %s67, 1
        %s224 = smul.addr %s223, 512
        %s225 = scalar_lea.vmem [#allocation5], %s224
        %p226 = pneg %p80
        %p227 = pneg %p77
        %s228 = smul.u32 2, %s26
        %p229 = scmp.lt.s32.totalorder %s228, 3
        %s230 = scalar_select %p229, %s228, 3
        %s231 = scalar_lea.vmem %s2, %s230
        %p232 = pneg %p106
        %p233 = pneg %p103
        %p234 = pneg %p134
        %p235 = pneg %p131
        %s236 = sand.u32 %s121, 1
        %s237 = scalar_lea.sflag [#allocation4], %s236
        %s238 = sand.u32 %s121, 1
        %s239 = smul.addr %s238, 512
        %s240 = scalar_lea.vmem [#allocation7], %s239
        %s241 = smul.u32 32, %s25
        %s242 = smul.u32 2, %s26
        %s243 = smul.u32 2, %s26
        %p244 = scmp.lt.s32.totalorder %s243, 3
        %s245 = scalar_select %p244, %s243, 3
        %s246 = scalar_lea.vmem %s2, %s245
        %s247 = smul.u32 2, %s26
        %s248 = smul.u32 32, %s25
        %s249 = smul.u32 2, %s26
        %v250 = vld [vmem:[#allocation2] sm:$0xff]
        %v251 = vld [vmem:[#allocation2 + $0x8] sm:$0xff]
        %v252 = vld [vmem:[#allocation2 + $0x10] sm:$0xff]
        %v253 = vld [vmem:[#allocation2 + $0x18] sm:$0xff]
        %v254 = vld [vmem:[#allocation2 + $0x20] sm:$0xff]
        %v255 = vld [vmem:[#allocation2 + $0x28] sm:$0xff]
        %v256 = vld [vmem:[#allocation2 + $0x30] sm:$0xff]
        %v257 = vld [vmem:[#allocation2 + $0x38] sm:$0xff]
        %v258 = vld [vmem:[#allocation2 + $0x40] sm:$0xff]
        %v259 = vld [vmem:[#allocation2 + $0x48] sm:$0xff]
        %v260 = vld [vmem:[#allocation2 + $0x50] sm:$0xff]
        %v261 = vld [vmem:[#allocation2 + $0x58] sm:$0xff]
        %v262 = vld [vmem:[#allocation2 + $0x60] sm:$0xff]
        %v263 = vld [vmem:[#allocation2 + $0x68] sm:$0xff]
        %v264 = vld [vmem:[#allocation2 + $0x70] sm:$0xff]
        %v265 = vld [vmem:[#allocation2 + $0x78] sm:$0xff]
        %v266 = vld [vmem:[#allocation2 + $0x80] sm:$0xff]
        %v267 = vld [vmem:[#allocation2 + $0x88] sm:$0xff]
        %v268 = vld [vmem:[#allocation2 + $0x90] sm:$0xff]
        %v269 = vld [vmem:[#allocation2 + $0x98] sm:$0xff]
        %v270 = vld [vmem:[#allocation2 + $0xa0] sm:$0xff]
        %v271 = vld [vmem:[#allocation2 + $0xa8] sm:$0xff]
        %v272 = vld [vmem:[#allocation2 + $0xb0] sm:$0xff]
        %v273 = vld [vmem:[#allocation2 + $0xb8] sm:$0xff]
        %v274 = vld [vmem:[#allocation2 + $0xc0] sm:$0xff]
        %v275 = vld [vmem:[#allocation2 + $0xc8] sm:$0xff]
        %v276 = vld [vmem:[#allocation2 + $0xd0] sm:$0xff]
        %v277 = vld [vmem:[#allocation2 + $0xd8] sm:$0xff]
        %v278 = vld [vmem:[#allocation2 + $0xe0] sm:$0xff]
        %v279 = vld [vmem:[#allocation2 + $0xe8] sm:$0xff]
        %v280 = vld [vmem:[#allocation2 + $0xf0] sm:$0xff]
        %v281 = vld [vmem:[#allocation2 + $0xf8] sm:$0xff]
        %v282 = vld [vmem:[#allocation2 + $0x100] sm:$0xff]
        %v283 = vld [vmem:[#allocation2 + $0x108] sm:$0xff]
        %v284 = vld [vmem:[#allocation2 + $0x110] sm:$0xff]
        %v285 = vld [vmem:[#allocation2 + $0x118] sm:$0xff]
        %v286 = vld [vmem:[#allocation2 + $0x120] sm:$0xff]
        %v287 = vld [vmem:[#allocation2 + $0x128] sm:$0xff]
        %v288 = vld [vmem:[#allocation2 + $0x130] sm:$0xff]
        %v289 = vld [vmem:[#allocation2 + $0x138] sm:$0xff]
        %v290 = vld [vmem:[#allocation2 + $0x140] sm:$0xff]
        %v291 = vld [vmem:[#allocation2 + $0x148] sm:$0xff]
        %v292 = vld [vmem:[#allocation2 + $0x150] sm:$0xff]
        %v293 = vld [vmem:[#allocation2 + $0x158] sm:$0xff]
        %v294 = vld [vmem:[#allocation2 + $0x160] sm:$0xff]
        %v295 = vld [vmem:[#allocation2 + $0x168] sm:$0xff]
        %v296 = vld [vmem:[#allocation2 + $0x170] sm:$0xff]
        %v297 = vld [vmem:[#allocation2 + $0x178] sm:$0xff]
        %v298 = vld [vmem:[#allocation2 + $0x180] sm:$0xff]
        %v299 = vld [vmem:[#allocation2 + $0x188] sm:$0xff]
        %v300 = vld [vmem:[#allocation2 + $0x190] sm:$0xff]
        %v301 = vld [vmem:[#allocation2 + $0x198] sm:$0xff]
        %v302 = vld [vmem:[#allocation2 + $0x1a0] sm:$0xff]
        %v303 = vld [vmem:[#allocation2 + $0x1a8] sm:$0xff]
        %v304 = vld [vmem:[#allocation2 + $0x1b0] sm:$0xff]
        %v305 = vld [vmem:[#allocation2 + $0x1b8] sm:$0xff]
        %v306 = vld [vmem:[#allocation2 + $0x1c0] sm:$0xff]
        %v307 = vld [vmem:[#allocation2 + $0x1c8] sm:$0xff]
        %v308 = vld [vmem:[#allocation2 + $0x1d0] sm:$0xff]
        %v309 = vld [vmem:[#allocation2 + $0x1d8] sm:$0xff]
        %v310 = vld [vmem:[#allocation2 + $0x1e0] sm:$0xff]
        %v311 = vld [vmem:[#allocation2 + $0x1e8] sm:$0xff]
        %v312 = vld [vmem:[#allocation2 + $0x1f0] sm:$0xff]
        %v313 = vld [vmem:[#allocation2 + $0x1f8] sm:$0xff]
        %v314 = vld [vmem:[%s214] sm:$0xff]
        %v315 = vld [vmem:[%s214 + $0x8] sm:$0xff]
        %v316 = vld [vmem:[%s214 + $0x10] sm:$0xff]
        %v317 = vld [vmem:[%s214 + $0x18] sm:$0xff]
        %v318 = vld [vmem:[%s214 + $0x20] sm:$0xff]
        %v319 = vld [vmem:[%s214 + $0x28] sm:$0xff]
        %v320 = vld [vmem:[%s214 + $0x30] sm:$0xff]
        %v321 = vld [vmem:[%s214 + $0x38] sm:$0xff]
        %v322 = vld [vmem:[%s214 + $0x40] sm:$0xff]
        %v323 = vld [vmem:[%s214 + $0x48] sm:$0xff]
        %v324 = vld [vmem:[%s214 + $0x50] sm:$0xff]
        %v325 = vld [vmem:[%s214 + $0x58] sm:$0xff]
        %v326 = vld [vmem:[%s214 + $0x60] sm:$0xff]
        %v327 = vld [vmem:[%s214 + $0x68] sm:$0xff]
        %v328 = vld [vmem:[%s214 + $0x70] sm:$0xff]
        %v329 = vld [vmem:[%s214 + $0x78] sm:$0xff]
        %v330 = vld [vmem:[%s214 + $0x80] sm:$0xff]
        %v331 = vld [vmem:[%s214 + $0x88] sm:$0xff]
        %v332 = vld [vmem:[%s214 + $0x90] sm:$0xff]
        %v333 = vld [vmem:[%s214 + $0x98] sm:$0xff]
        %v334 = vld [vmem:[%s214 + $0xa0] sm:$0xff]
        %v335 = vld [vmem:[%s214 + $0xa8] sm:$0xff]
        %v336 = vld [vmem:[%s214 + $0xb0] sm:$0xff]
        %v337 = vld [vmem:[%s214 + $0xb8] sm:$0xff]
        %v338 = vld [vmem:[%s214 + $0xc0] sm:$0xff]
        %v339 = vld [vmem:[%s214 + $0xc8] sm:$0xff]
        %v340 = vld [vmem:[%s214 + $0xd0] sm:$0xff]
        %v341 = vld [vmem:[%s214 + $0xd8] sm:$0xff]
        %v342 = vld [vmem:[%s214 + $0xe0] sm:$0xff]
        %v343 = vld [vmem:[%s214 + $0xe8] sm:$0xff]
        %v344 = vld [vmem:[%s214 + $0xf0] sm:$0xff]
        %v345 = vld [vmem:[%s214 + $0xf8] sm:$0xff]
        %v346 = vld [vmem:[%s214 + $0x100] sm:$0xff]
        %v347 = vld [vmem:[%s214 + $0x108] sm:$0xff]
        %v348 = vld [vmem:[%s214 + $0x110] sm:$0xff]
        %v349 = vld [vmem:[%s214 + $0x118] sm:$0xff]
        %v350 = vld [vmem:[%s214 + $0x120] sm:$0xff]
        %v351 = vld [vmem:[%s214 + $0x128] sm:$0xff]
        %v352 = vld [vmem:[%s214 + $0x130] sm:$0xff]
        %v353 = vld [vmem:[%s214 + $0x138] sm:$0xff]
        %v354 = vld [vmem:[%s214 + $0x140] sm:$0xff]
        %v355 = vld [vmem:[%s214 + $0x148] sm:$0xff]
        %v356 = vld [vmem:[%s214 + $0x150] sm:$0xff]
        %v357 = vld [vmem:[%s214 + $0x158] sm:$0xff]
        %v358 = vld [vmem:[%s214 + $0x160] sm:$0xff]
        %v359 = vld [vmem:[%s214 + $0x168] sm:$0xff]
        %v360 = vld [vmem:[%s214 + $0x170] sm:$0xff]
        %v361 = vld [vmem:[%s214 + $0x178] sm:$0xff]
        %v362 = vld [vmem:[%s214 + $0x180] sm:$0xff]
        %v363 = vld [vmem:[%s214 + $0x188] sm:$0xff]
        %v364 = vld [vmem:[%s214 + $0x190] sm:$0xff]
        %v365 = vld [vmem:[%s214 + $0x198] sm:$0xff]
        %v366 = vld [vmem:[%s214 + $0x1a0] sm:$0xff]
        %v367 = vld [vmem:[%s214 + $0x1a8] sm:$0xff]
        %v368 = vld [vmem:[%s214 + $0x1b0] sm:$0xff]
        %v369 = vld [vmem:[%s214 + $0x1b8] sm:$0xff]
        %v370 = vld [vmem:[%s214 + $0x1c0] sm:$0xff]
        %v371 = vld [vmem:[%s214 + $0x1c8] sm:$0xff]
        %v372 = vld [vmem:[%s214 + $0x1d0] sm:$0xff]
        %v373 = vld [vmem:[%s214 + $0x1d8] sm:$0xff]
        %v374 = vld [vmem:[%s214 + $0x1e0] sm:$0xff]
        %v375 = vld [vmem:[%s214 + $0x1e8] sm:$0xff]
        %v376 = vld [vmem:[%s214 + $0x1f0] sm:$0xff]
        %v377 = vld [vmem:[%s214 + $0x1f8] sm:$0xff]
        %v378 = vld [vmem:[%s246] sm:$0x3]
        %v380 = vlaneseq
        %v381 = vshrl.u32 %v380, 7
        %v382 = vsub.s32 0, %v381
        %v383 = vrot.slane %v378, %v382
        %v384 = vlaneseq
        %v385 = vshrl.u32 %v384, 7
        %v386 = vsub.s32 1, %v385
        %v387 = vrot.slane %v378, %v386
        %v390 = vand.u32 %v315, 4294901760
        %391 = vmatprep.subr.mxu0 %v390
        %v392 = vand.u32 %v314, 4294901760
        %393 = vmatpush1.msra.mxu0 %v392
        %v394 = vand.u32 %v317, 4294901760
        %395 = vmatprep.subr.mxu0 %v394
        %v396 = vand.u32 %v316, 4294901760
        %397 = vmatpush1.msra.mxu0 %v396
        %v398 = vand.u32 %v319, 4294901760
        %399 = vmatprep.subr.mxu0 %v398
        %v400 = vand.u32 %v318, 4294901760
        %401 = vmatpush1.msra.mxu0 %v400
        %v402 = vand.u32 %v321, 4294901760
        %403 = vmatprep.subr.mxu0 %v402
        %v404 = vand.u32 %v320, 4294901760
        %405 = vmatpush1.msra.mxu0 %v404
        %v406 = vand.u32 %v323, 4294901760
        %407 = vmatprep.subr.mxu0 %v406
        %v408 = vand.u32 %v322, 4294901760
        %409 = vmatpush1.msra.mxu0 %v408
        %v410 = vand.u32 %v325, 4294901760
        %411 = vmatprep.subr.mxu0 %v410
        %v412 = vand.u32 %v324, 4294901760
        %413 = vmatpush1.msra.mxu0 %v412
        %v414 = vand.u32 %v327, 4294901760
        %415 = vmatprep.subr.mxu0 %v414
        %v416 = vand.u32 %v326, 4294901760
        %417 = vmatpush1.msra.mxu0 %v416
        %v418 = vand.u32 %v329, 4294901760
        %419 = vmatprep.subr.mxu0 %v418
        %v420 = vand.u32 %v328, 4294901760
        %421 = vmatpush1.msra.mxu0 %v420
        %v422 = vand.u32 %v331, 4294901760
        %423 = vmatprep.subr.mxu0 %v422
        %v424 = vand.u32 %v330, 4294901760
        %425 = vmatpush1.msra.mxu0 %v424
        %v426 = vand.u32 %v333, 4294901760
        %427 = vmatprep.subr.mxu0 %v426
        %v428 = vand.u32 %v332, 4294901760
        %429 = vmatpush1.msra.mxu0 %v428
        %v430 = vand.u32 %v335, 4294901760
        %431 = vmatprep.subr.mxu0 %v430
        %v432 = vand.u32 %v334, 4294901760
        %433 = vmatpush1.msra.mxu0 %v432
        %v434 = vand.u32 %v337, 4294901760
        %435 = vmatprep.subr.mxu0 %v434
        %v436 = vand.u32 %v336, 4294901760
        %437 = vmatpush1.msra.mxu0 %v436
        %v438 = vand.u32 %v339, 4294901760
        %439 = vmatprep.subr.mxu0 %v438
        %v440 = vand.u32 %v338, 4294901760
        %441 = vmatpush1.msra.mxu0 %v440
        %v442 = vand.u32 %v341, 4294901760
        %443 = vmatprep.subr.mxu0 %v442
        %v444 = vand.u32 %v340, 4294901760
        %445 = vmatpush1.msra.mxu0 %v444
        %v446 = vand.u32 %v343, 4294901760
        %447 = vmatprep.subr.mxu0 %v446
        %v448 = vand.u32 %v342, 4294901760
        %449 = vmatpush1.msra.mxu0 %v448
        %v450 = vand.u32 %v345, 4294901760
        %451 = vmatprep.subr.mxu0 %v450
        %v452 = vand.u32 %v344, 4294901760
        %453 = vmatpush1.msra.mxu0 %v452
        %v454 = vand.u32 %v347, 4294901760
        %455 = vmatprep.subr.mxu0 %v454
        %v456 = vand.u32 %v346, 4294901760
        %457 = vmatpush1.msra.mxu0 %v456
        %v458 = vand.u32 %v349, 4294901760
        %459 = vmatprep.subr.mxu0 %v458
        %v460 = vand.u32 %v348, 4294901760
        %461 = vmatpush1.msra.mxu0 %v460
        %v462 = vand.u32 %v351, 4294901760
        %463 = vmatprep.subr.mxu0 %v462
        %v464 = vand.u32 %v350, 4294901760
        %465 = vmatpush1.msra.mxu0 %v464
        %v466 = vand.u32 %v353, 4294901760
        %467 = vmatprep.subr.mxu0 %v466
        %v468 = vand.u32 %v352, 4294901760
        %469 = vmatpush1.msra.mxu0 %v468
        %v470 = vand.u32 %v355, 4294901760
        %471 = vmatprep.subr.mxu0 %v470
        %v472 = vand.u32 %v354, 4294901760
        %473 = vmatpush1.msra.mxu0 %v472
        %v474 = vand.u32 %v357, 4294901760
        %475 = vmatprep.subr.mxu0 %v474
        %v476 = vand.u32 %v356, 4294901760
        %477 = vmatpush1.msra.mxu0 %v476
        %v478 = vand.u32 %v359, 4294901760
        %479 = vmatprep.subr.mxu0 %v478
        %v480 = vand.u32 %v358, 4294901760
        %481 = vmatpush1.msra.mxu0 %v480
        %v482 = vand.u32 %v361, 4294901760
        %483 = vmatprep.subr.mxu0 %v482
        %v484 = vand.u32 %v360, 4294901760
        %485 = vmatpush1.msra.mxu0 %v484
        %v486 = vand.u32 %v363, 4294901760
        %487 = vmatprep.subr.mxu0 %v486
        %v488 = vand.u32 %v362, 4294901760
        %489 = vmatpush1.msra.mxu0 %v488
        %v490 = vand.u32 %v365, 4294901760
        %491 = vmatprep.subr.mxu0 %v490
        %v492 = vand.u32 %v364, 4294901760
        %493 = vmatpush1.msra.mxu0 %v492
        %v494 = vand.u32 %v367, 4294901760
        %495 = vmatprep.subr.mxu0 %v494
        %v496 = vand.u32 %v366, 4294901760
        %497 = vmatpush1.msra.mxu0 %v496
        %v498 = vand.u32 %v369, 4294901760
        %499 = vmatprep.subr.mxu0 %v498
        %v500 = vand.u32 %v368, 4294901760
        %501 = vmatpush1.msra.mxu0 %v500
        %v502 = vand.u32 %v371, 4294901760
        %503 = vmatprep.subr.mxu0 %v502
        %v504 = vand.u32 %v370, 4294901760
        %505 = vmatpush1.msra.mxu0 %v504
        %v506 = vand.u32 %v373, 4294901760
        %507 = vmatprep.subr.mxu0 %v506
        %v508 = vand.u32 %v372, 4294901760
        %509 = vmatpush1.msra.mxu0 %v508
        %v510 = vand.u32 %v375, 4294901760
        %511 = vmatprep.subr.mxu0 %v510
        %v512 = vand.u32 %v374, 4294901760
        %513 = vmatpush1.msra.mxu0 %v512
        %v514 = vand.u32 %v377, 4294901760
        %515 = vmatprep.subr.mxu0 %v514
        %v516 = vand.u32 %v376, 4294901760
        %517 = vmatpush1.msra.mxu0 %v516
        %v518 = vand.u32 %v251, 4294901760
        %v519 = vsub.f32 %v251, %v518
        %v520 = vand.u32 %v519, 4294901760
        %v521 = vsub.f32 %v519, %v520
        %v522 = vand.u32 %v521, 4294901760
        %523 = vmatprep.mubr.f32.mxu0 %v522
        %v524 = vand.u32 %v250, 4294901760
        %v525 = vsub.f32 %v250, %v524
        %v526 = vand.u32 %v525, 4294901760
        %v527 = vsub.f32 %v525, %v526
        %v528 = vand.u32 %v527, 4294901760
        %529 = vmatmul.mubr.f32.gmra.mrb[0].mxu0 %v528
        %v530 = vpop.f32.mrb[0].mxu0
        %v531 = vadd.f32 %v383, %v530
        %v532 = vpop.f32.mrb[0].mxu0
        %v533 = vadd.f32 %v387, %v532
        %v534 = vand.u32 %v253, 4294901760
        %v535 = vsub.f32 %v253, %v534
        %v536 = vand.u32 %v535, 4294901760
        %v537 = vsub.f32 %v535, %v536
        %v538 = vand.u32 %v537, 4294901760
        %539 = vmatprep.mubr.f32.mxu0 %v538
        %v540 = vand.u32 %v252, 4294901760
        %v541 = vsub.f32 %v252, %v540
        %v542 = vand.u32 %v541, 4294901760
        %v543 = vsub.f32 %v541, %v542
        %v544 = vand.u32 %v543, 4294901760
        %545 = vmatmul.mubr.f32.gmra.mrb[0].mxu0 %v544
        %v546 = vpop.f32.mrb[0].mxu0
        %v547 = vadd.f32 %v383, %v546
        %v548 = vpop.f32.mrb[0].mxu0
        %v549 = vadd.f32 %v387, %v548
        %v550 = vand.u32 %v255, 4294901760
        %v551 = vsub.f32 %v255, %v550
        %v552 = vand.u32 %v551, 4294901760
        %v553 = vsub.f32 %v551, %v552
        %v554 = vand.u32 %v553, 4294901760
        %555 = vmatprep.mubr.f32.mxu0 %v554
        %v556 = vand.u32 %v254, 4294901760
        %v557 = vsub.f32 %v254, %v556
        %v558 = vand.u32 %v557, 4294901760
        %v559 = vsub.f32 %v557, %v558
        %v560 = vand.u32 %v559, 4294901760
        %561 = vmatmul.mubr.f32.gmra.mrb[0].mxu0 %v560
        %v562 = vpop.f32.mrb[0].mxu0
        %v563 = vadd.f32 %v383, %v562
        %v564 = vpop.f32.mrb[0].mxu0
        %v565 = vadd.f32 %v387, %v564
        %v566 = vand.u32 %v257, 4294901760
        %v567 = vsub.f32 %v257, %v566
        %v568 = vand.u32 %v567, 4294901760
        %v569 = vsub.f32 %v567, %v568
        %v570 = vand.u32 %v569, 4294901760
        %571 = vmatprep.mubr.f32.mxu0 %v570
        %v572 = vand.u32 %v256, 4294901760
        %v573 = vsub.f32 %v256, %v572
        %v574 = vand.u32 %v573, 4294901760
        %v575 = vsub.f32 %v573, %v574
        %v576 = vand.u32 %v575, 4294901760
        %577 = vmatmul.mubr.f32.gmra.mrb[0].mxu0 %v576
        %v578 = vpop.f32.mrb[0].mxu0
        %v579 = vadd.f32 %v383, %v578
        %v580 = vpop.f32.mrb[0].mxu0
        %v581 = vadd.f32 %v387, %v580
        %v582 = vand.u32 %v259, 4294901760
        %v583 = vsub.f32 %v259, %v582
        %v584 = vand.u32 %v583, 4294901760
        %v585 = vsub.f32 %v583, %v584
        %v586 = vand.u32 %v585, 4294901760
        %587 = vmatprep.mubr.f32.mxu0 %v586
        %v588 = vand.u32 %v258, 4294901760
        %v589 = vsub.f32 %v258, %v588
        %v590 = vand.u32 %v589, 4294901760
        %v591 = vsub.f32 %v589, %v590
        %v592 = vand.u32 %v591, 4294901760
        %593 = vmatmul.mubr.f32.gmra.mrb[0].mxu0 %v592
        %v594 = vpop.f32.mrb[0].mxu0
        %v595 = vadd.f32 %v383, %v594
        %v596 = vpop.f32.mrb[0].mxu0
        %v597 = vadd.f32 %v387, %v596
        %v598 = vand.u32 %v261, 4294901760
        %v599 = vsub.f32 %v261, %v598
        %v600 = vand.u32 %v599, 4294901760
        %v601 = vsub.f32 %v599, %v600
        %v602 = vand.u32 %v601, 4294901760
        %603 = vmatprep.mubr.f32.mxu0 %v602
        %v604 = vand.u32 %v260, 4294901760
        %v605 = vsub.f32 %v260, %v604
        %v606 = vand.u32 %v605, 4294901760
        %v607 = vsub.f32 %v605, %v606
        %v608 = vand.u32 %v607, 4294901760
        %609 = vmatmul.mubr.f32.gmra.mrb[0].mxu0 %v608
        %v610 = vpop.f32.mrb[0].mxu0
        %v611 = vadd.f32 %v383, %v610
        %v612 = vpop.f32.mrb[0].mxu0
        %v613 = vadd.f32 %v387, %v612
        %v614 = vand.u32 %v263, 4294901760
        %v615 = vsub.f32 %v263, %v614
        %v616 = vand.u32 %v615, 4294901760
        %v617 = vsub.f32 %v615, %v616
        %v618 = vand.u32 %v617, 4294901760
        %619 = vmatprep.mubr.f32.mxu0 %v618
        %v620 = vand.u32 %v262, 4294901760
        %v621 = vsub.f32 %v262, %v620
        %v622 = vand.u32 %v621, 4294901760
        %v623 = vsub.f32 %v621, %v622
        %v624 = vand.u32 %v623, 4294901760
        %625 = vmatmul.mubr.f32.gmra.mrb[0].mxu0 %v624
        %v626 = vpop.f32.mrb[0].mxu0
        %v627 = vadd.f32 %v383, %v626
        %v628 = vpop.f32.mrb[0].mxu0
        %v629 = vadd.f32 %v387, %v628
        %v630 = vand.u32 %v265, 4294901760
        %v631 = vsub.f32 %v265, %v630
        %v632 = vand.u32 %v631, 4294901760
        %v633 = vsub.f32 %v631, %v632
        %v634 = vand.u32 %v633, 4294901760
        %635 = vmatprep.mubr.f32.mxu0 %v634
        %v636 = vand.u32 %v264, 4294901760
        %v637 = vsub.f32 %v264, %v636
        %v638 = vand.u32 %v637, 4294901760
        %v639 = vsub.f32 %v637, %v638
        %v640 = vand.u32 %v639, 4294901760
        %641 = vmatmul.mubr.f32.gmra.mrb[0].mxu0 %v640
        %v642 = vpop.f32.mrb[0].mxu0
        %v643 = vadd.f32 %v383, %v642
        %v644 = vpop.f32.mrb[0].mxu0
        %v645 = vadd.f32 %v387, %v644
        %v646 = vand.u32 %v267, 4294901760
        %v647 = vsub.f32 %v267, %v646
        %v648 = vand.u32 %v647, 4294901760
        %v649 = vsub.f32 %v647, %v648
        %v650 = vand.u32 %v649, 4294901760
        %651 = vmatprep.mubr.f32.mxu0 %v650
        %v652 = vand.u32 %v266, 4294901760
        %v653 = vsub.f32 %v266, %v652
        %v654 = vand.u32 %v653, 4294901760
        %v655 = vsub.f32 %v653, %v654
        %v656 = vand.u32 %v655, 4294901760
        %657 = vmatmul.mubr.f32.gmra.mrb[0].mxu0 %v656
        %v658 = vpop.f32.mrb[0].mxu0
        %v659 = vadd.f32 %v383, %v658
        %v660 = vpop.f32.mrb[0].mxu0
        %v661 = vadd.f32 %v387, %v660
        %v662 = vand.u32 %v269, 4294901760
        %v663 = vsub.f32 %v269, %v662
        %v664 = vand.u32 %v663, 4294901760
        %v665 = vsub.f32 %v663, %v664
        %v666 = vand.u32 %v665, 4294901760
        %667 = vmatprep.mubr.f32.mxu0 %v666
        %v668 = vand.u32 %v268, 4294901760
        %v669 = vsub.f32 %v268, %v668
        %v670 = vand.u32 %v669, 4294901760
        %v671 = vsub.f32 %v669, %v670
        %v672 = vand.u32 %v671, 4294901760
        %673 = vmatmul.mubr.f32.gmra.mrb[0].mxu0 %v672
        %v674 = vpop.f32.mrb[0].mxu0
        %v675 = vadd.f32 %v383, %v674
        %v676 = vpop.f32.mrb[0].mxu0
        %v677 = vadd.f32 %v387, %v676
        %v678 = vand.u32 %v271, 4294901760
        %v679 = vsub.f32 %v271, %v678
        %v680 = vand.u32 %v679, 4294901760
        %v681 = vsub.f32 %v679, %v680
        %v682 = vand.u32 %v681, 4294901760
        %683 = vmatprep.mubr.f32.mxu0 %v682
        %v684 = vand.u32 %v270, 4294901760
        %v685 = vsub.f32 %v270, %v684
        %v686 = vand.u32 %v685, 4294901760
        %v687 = vsub.f32 %v685, %v686
        %v688 = vand.u32 %v687, 4294901760
        %689 = vmatmul.mubr.f32.gmra.mrb[0].mxu0 %v688
        %v690 = vpop.f32.mrb[0].mxu0
        %v691 = vadd.f32 %v383, %v690
        %v692 = vpop.f32.mrb[0].mxu0
        %v693 = vadd.f32 %v387, %v692
        %v694 = vand.u32 %v273, 4294901760
        %v695 = vsub.f32 %v273, %v694
        %v696 = vand.u32 %v695, 4294901760
        %v697 = vsub.f32 %v695, %v696
        %v698 = vand.u32 %v697, 4294901760
        %699 = vmatprep.mubr.f32.mxu0 %v698
        %v700 = vand.u32 %v272, 4294901760
        %v701 = vsub.f32 %v272, %v700
        %v702 = vand.u32 %v701, 4294901760
        %v703 = vsub.f32 %v701, %v702
        %v704 = vand.u32 %v703, 4294901760
        %705 = vmatmul.mubr.f32.gmra.mrb[0].mxu0 %v704
        %v706 = vpop.f32.mrb[0].mxu0
        %v707 = vadd.f32 %v383, %v706
        %v708 = vpop.f32.mrb[0].mxu0
        %v709 = vadd.f32 %v387, %v708
        %v710 = vand.u32 %v275, 4294901760
        %v711 = vsub.f32 %v275, %v710
        %v712 = vand.u32 %v711, 4294901760
        %v713 = vsub.f32 %v711, %v712
        %v714 = vand.u32 %v713, 4294901760
        %715 = vmatprep.mubr.f32.mxu0 %v714
        %v716 = vand.u32 %v274, 4294901760
        %v717 = vsub.f32 %v274, %v716
        %v718 = vand.u32 %v717, 4294901760
        %v719 = vsub.f32 %v717, %v718
        %v720 = vand.u32 %v719, 4294901760
        %721 = vmatmul.mubr.f32.gmra.mrb[0].mxu0 %v720
        %v722 = vpop.f32.mrb[0].mxu0
        %v723 = vadd.f32 %v383, %v722
        %v724 = vpop.f32.mrb[0].mxu0
        %v725 = vadd.f32 %v387, %v724
        %v726 = vand.u32 %v277, 4294901760
        %v727 = vsub.f32 %v277, %v726
        %v728 = vand.u32 %v727, 4294901760
        %v729 = vsub.f32 %v727, %v728
        %v730 = vand.u32 %v729, 4294901760
        %731 = vmatprep.mubr.f32.mxu0 %v730
        %v732 = vand.u32 %v276, 4294901760
        %v733 = vsub.f32 %v276, %v732
        %v734 = vand.u32 %v733, 4294901760
        %v735 = vsub.f32 %v733, %v734
        %v736 = vand.u32 %v735, 4294901760
        %737 = vmatmul.mubr.f32.gmra.mrb[0].mxu0 %v736
        %v738 = vpop.f32.mrb[0].mxu0
        %v739 = vadd.f32 %v383, %v738
        %v740 = vpop.f32.mrb[0].mxu0
        %v741 = vadd.f32 %v387, %v740
        %v742 = vand.u32 %v279, 4294901760
        %v743 = vsub.f32 %v279, %v742
        %v744 = vand.u32 %v743, 4294901760
        %v745 = vsub.f32 %v743, %v744
        %v746 = vand.u32 %v745, 4294901760
        %747 = vmatprep.mubr.f32.mxu0 %v746
        %v748 = vand.u32 %v278, 4294901760
        %v749 = vsub.f32 %v278, %v748
        %v750 = vand.u32 %v749, 4294901760
        %v751 = vsub.f32 %v749, %v750
        %v752 = vand.u32 %v751, 4294901760
        %753 = vmatmul.mubr.f32.gmra.mrb[0].mxu0 %v752
        %v754 = vpop.f32.mrb[0].mxu0
        %v755 = vadd.f32 %v383, %v754
        %v756 = vpop.f32.mrb[0].mxu0
        %v757 = vadd.f32 %v387, %v756
        %v758 = vand.u32 %v281, 4294901760
        %v759 = vsub.f32 %v281, %v758
        %v760 = vand.u32 %v759, 4294901760
        %v761 = vsub.f32 %v759, %v760
        %v762 = vand.u32 %v761, 4294901760
        %763 = vmatprep.mubr.f32.mxu0 %v762
        %v764 = vand.u32 %v280, 4294901760
        %v765 = vsub.f32 %v280, %v764
        %v766 = vand.u32 %v765, 4294901760
        %v767 = vsub.f32 %v765, %v766
        %v768 = vand.u32 %v767, 4294901760
        %769 = vmatmul.mubr.f32.gmra.mrb[0].mxu0 %v768
        %v770 = vpop.f32.mrb[0].mxu0
        %v771 = vadd.f32 %v383, %v770
        %v772 = vpop.f32.mrb[0].mxu0
        %v773 = vadd.f32 %v387, %v772
        %v774 = vand.u32 %v283, 4294901760
        %v775 = vsub.f32 %v283, %v774
        %v776 = vand.u32 %v775, 4294901760
        %v777 = vsub.f32 %v775, %v776
        %v778 = vand.u32 %v777, 4294901760
        %779 = vmatprep.mubr.f32.mxu0 %v778
        %v780 = vand.u32 %v282, 4294901760
        %v781 = vsub.f32 %v282, %v780
        %v782 = vand.u32 %v781, 4294901760
        %v783 = vsub.f32 %v781, %v782
        %v784 = vand.u32 %v783, 4294901760
        %785 = vmatmul.mubr.f32.gmra.mrb[0].mxu0 %v784
        %v786 = vpop.f32.mrb[0].mxu0
        %v787 = vadd.f32 %v383, %v786
        %v788 = vpop.f32.mrb[0].mxu0
        %v789 = vadd.f32 %v387, %v788
        %v790 = vand.u32 %v285, 4294901760
        %v791 = vsub.f32 %v285, %v790
        %v792 = vand.u32 %v791, 4294901760
        %v793 = vsub.f32 %v791, %v792
        %v794 = vand.u32 %v793, 4294901760
        %795 = vmatprep.mubr.f32.mxu0 %v794
        %v796 = vand.u32 %v284, 4294901760
        %v797 = vsub.f32 %v284, %v796
        %v798 = vand.u32 %v797, 4294901760
        %v799 = vsub.f32 %v797, %v798
        %v800 = vand.u32 %v799, 4294901760
        %801 = vmatmul.mubr.f32.gmra.mrb[0].mxu0 %v800
        %v802 = vpop.f32.mrb[0].mxu0
        %v803 = vadd.f32 %v383, %v802
        %v804 = vpop.f32.mrb[0].mxu0
        %v805 = vadd.f32 %v387, %v804
        %v806 = vand.u32 %v287, 4294901760
        %v807 = vsub.f32 %v287, %v806
        %v808 = vand.u32 %v807, 4294901760
        %v809 = vsub.f32 %v807, %v808
        %v810 = vand.u32 %v809, 4294901760
        %811 = vmatprep.mubr.f32.mxu0 %v810
        %v812 = vand.u32 %v286, 4294901760
        %v813 = vsub.f32 %v286, %v812
        %v814 = vand.u32 %v813, 4294901760
        %v815 = vsub.f32 %v813, %v814
        %v816 = vand.u32 %v815, 4294901760
        %817 = vmatmul.mubr.f32.gmra.mrb[0].mxu0 %v816
        %v818 = vpop.f32.mrb[0].mxu0
        %v819 = vadd.f32 %v383, %v818
        %v820 = vpop.f32.mrb[0].mxu0
        %v821 = vadd.f32 %v387, %v820
        %v822 = vand.u32 %v289, 4294901760
        %v823 = vsub.f32 %v289, %v822
        %v824 = vand.u32 %v823, 4294901760
        %v825 = vsub.f32 %v823, %v824
        %v826 = vand.u32 %v825, 4294901760
        %827 = vmatprep.mubr.f32.mxu0 %v826
        %v828 = vand.u32 %v288, 4294901760
        %v829 = vsub.f32 %v288, %v828
        %v830 = vand.u32 %v829, 4294901760
        %v831 = vsub.f32 %v829, %v830
        %v832 = vand.u32 %v831, 4294901760
        %833 = vmatmul.mubr.f32.gmra.mrb[0].mxu0 %v832
        %v834 = vpop.f32.mrb[0].mxu0
        %v835 = vadd.f32 %v383, %v834
        %v836 = vpop.f32.mrb[0].mxu0
        %v837 = vadd.f32 %v387, %v836
        %v838 = vand.u32 %v291, 4294901760
        %v839 = vsub.f32 %v291, %v838
        %v840 = vand.u32 %v839, 4294901760
        %v841 = vsub.f32 %v839, %v840
        %v842 = vand.u32 %v841, 4294901760
        %843 = vmatprep.mubr.f32.mxu0 %v842
        %v844 = vand.u32 %v290, 4294901760
        %v845 = vsub.f32 %v290, %v844
        %v846 = vand.u32 %v845, 4294901760
        %v847 = vsub.f32 %v845, %v846
        %v848 = vand.u32 %v847, 4294901760
        %849 = vmatmul.mubr.f32.gmra.mrb[0].mxu0 %v848
        %v850 = vpop.f32.mrb[0].mxu0
        %v851 = vadd.f32 %v383, %v850
        %v852 = vpop.f32.mrb[0].mxu0
        %v853 = vadd.f32 %v387, %v852
        %v854 = vand.u32 %v293, 4294901760
        %v855 = vsub.f32 %v293, %v854
        %v856 = vand.u32 %v855, 4294901760
        %v857 = vsub.f32 %v855, %v856
        %v858 = vand.u32 %v857, 4294901760
        %859 = vmatprep.mubr.f32.mxu0 %v858
        %v860 = vand.u32 %v292, 4294901760
        %v861 = vsub.f32 %v292, %v860
        %v862 = vand.u32 %v861, 4294901760
        %v863 = vsub.f32 %v861, %v862
        %v864 = vand.u32 %v863, 4294901760
        %865 = vmatmul.mubr.f32.gmra.mrb[0].mxu0 %v864
        %v866 = vpop.f32.mrb[0].mxu0
        %v867 = vadd.f32 %v383, %v866
        %v868 = vpop.f32.mrb[0].mxu0
        %v869 = vadd.f32 %v387, %v868
        %v870 = vand.u32 %v295, 4294901760
        %v871 = vsub.f32 %v295, %v870
        %v872 = vand.u32 %v871, 4294901760
        %v873 = vsub.f32 %v871, %v872
        %v874 = vand.u32 %v873, 4294901760
        %875 = vmatprep.mubr.f32.mxu0 %v874
        %v876 = vand.u32 %v294, 4294901760
        %v877 = vsub.f32 %v294, %v876
        %v878 = vand.u32 %v877, 4294901760
        %v879 = vsub.f32 %v877, %v878
        %v880 = vand.u32 %v879, 4294901760
        %881 = vmatmul.mubr.f32.gmra.mrb[0].mxu0 %v880
        %v882 = vpop.f32.mrb[0].mxu0
        %v883 = vadd.f32 %v383, %v882
        %v884 = vpop.f32.mrb[0].mxu0
        %v885 = vadd.f32 %v387, %v884
        %v886 = vand.u32 %v297, 4294901760
        %v887 = vsub.f32 %v297, %v886
        %v888 = vand.u32 %v887, 4294901760
        %v889 = vsub.f32 %v887, %v888
        %v890 = vand.u32 %v889, 4294901760
        %891 = vmatprep.mubr.f32.mxu0 %v890
        %v892 = vand.u32 %v296, 4294901760
        %v893 = vsub.f32 %v296, %v892
        %v894 = vand.u32 %v893, 4294901760
        %v895 = vsub.f32 %v893, %v894
        %v896 = vand.u32 %v895, 4294901760
        %897 = vmatmul.mubr.f32.gmra.mrb[0].mxu0 %v896
        %v898 = vpop.f32.mrb[0].mxu0
        %v899 = vadd.f32 %v383, %v898
        %v900 = vpop.f32.mrb[0].mxu0
        %v901 = vadd.f32 %v387, %v900
        %v902 = vand.u32 %v299, 4294901760
        %v903 = vsub.f32 %v299, %v902
        %v904 = vand.u32 %v903, 4294901760
        %v905 = vsub.f32 %v903, %v904
        %v906 = vand.u32 %v905, 4294901760
        %907 = vmatprep.mubr.f32.mxu0 %v906
        %v908 = vand.u32 %v298, 4294901760
        %v909 = vsub.f32 %v298, %v908
        %v910 = vand.u32 %v909, 4294901760
        %v911 = vsub.f32 %v909, %v910
        %v912 = vand.u32 %v911, 4294901760
        %913 = vmatmul.mubr.f32.gmra.mrb[0].mxu0 %v912
        %v914 = vpop.f32.mrb[0].mxu0
        %v915 = vadd.f32 %v383, %v914
        %v916 = vpop.f32.mrb[0].mxu0
        %v917 = vadd.f32 %v387, %v916
        %v918 = vand.u32 %v301, 4294901760
        %v919 = vsub.f32 %v301, %v918
        %v920 = vand.u32 %v919, 4294901760
        %v921 = vsub.f32 %v919, %v920
        %v922 = vand.u32 %v921, 4294901760
        %923 = vmatprep.mubr.f32.mxu0 %v922
        %v924 = vand.u32 %v300, 4294901760
        %v925 = vsub.f32 %v300, %v924
        %v926 = vand.u32 %v925, 4294901760
        %v927 = vsub.f32 %v925, %v926
        %v928 = vand.u32 %v927, 4294901760
        %929 = vmatmul.mubr.f32.gmra.mrb[0].mxu0 %v928
        %v930 = vpop.f32.mrb[0].mxu0
        %v931 = vadd.f32 %v383, %v930
        %v932 = vpop.f32.mrb[0].mxu0
        %v933 = vadd.f32 %v387, %v932
        %v934 = vand.u32 %v303, 4294901760
        %v935 = vsub.f32 %v303, %v934
        %v936 = vand.u32 %v935, 4294901760
        %v937 = vsub.f32 %v935, %v936
        %v938 = vand.u32 %v937, 4294901760
        %939 = vmatprep.mubr.f32.mxu0 %v938
        %v940 = vand.u32 %v302, 4294901760
        %v941 = vsub.f32 %v302, %v940
        %v942 = vand.u32 %v941, 4294901760
        %v943 = vsub.f32 %v941, %v942
        %v944 = vand.u32 %v943, 4294901760
        %945 = vmatmul.mubr.f32.gmra.mrb[0].mxu0 %v944
        %v946 = vpop.f32.mrb[0].mxu0
        %v947 = vadd.f32 %v383, %v946
        %v948 = vpop.f32.mrb[0].mxu0
        %v949 = vadd.f32 %v387, %v948
        %v950 = vand.u32 %v305, 4294901760
        %v951 = vsub.f32 %v305, %v950
        %v952 = vand.u32 %v951, 4294901760
        %v953 = vsub.f32 %v951, %v952
        %v954 = vand.u32 %v953, 4294901760
        %955 = vmatprep.mubr.f32.mxu0 %v954
        %v956 = vand.u32 %v304, 4294901760
        %v957 = vsub.f32 %v304, %v956
        %v958 = vand.u32 %v957, 4294901760
        %v959 = vsub.f32 %v957, %v958
        %v960 = vand.u32 %v959, 4294901760
        %961 = vmatmul.mubr.f32.gmra.mrb[0].mxu0 %v960
        %v962 = vpop.f32.mrb[0].mxu0
        %v963 = vadd.f32 %v383, %v962
        %v964 = vpop.f32.mrb[0].mxu0
        %v965 = vadd.f32 %v387, %v964
        %v966 = vand.u32 %v307, 4294901760
        %v967 = vsub.f32 %v307, %v966
        %v968 = vand.u32 %v967, 4294901760
        %v969 = vsub.f32 %v967, %v968
        %v970 = vand.u32 %v969, 4294901760
        %971 = vmatprep.mubr.f32.mxu0 %v970
        %v972 = vand.u32 %v306, 4294901760
        %v973 = vsub.f32 %v306, %v972
        %v974 = vand.u32 %v973, 4294901760
        %v975 = vsub.f32 %v973, %v974
        %v976 = vand.u32 %v975, 4294901760
        %977 = vmatmul.mubr.f32.gmra.mrb[0].mxu0 %v976
        %v978 = vpop.f32.mrb[0].mxu0
        %v979 = vadd.f32 %v383, %v978
        %v980 = vpop.f32.mrb[0].mxu0
        %v981 = vadd.f32 %v387, %v980
        %v982 = vand.u32 %v309, 4294901760
        %v983 = vsub.f32 %v309, %v982
        %v984 = vand.u32 %v983, 4294901760
        %v985 = vsub.f32 %v983, %v984
        %v986 = vand.u32 %v985, 4294901760
        %987 = vmatprep.mubr.f32.mxu0 %v986
        %v988 = vand.u32 %v308, 4294901760
        %v989 = vsub.f32 %v308, %v988
        %v990 = vand.u32 %v989, 4294901760
        %v991 = vsub.f32 %v989, %v990
        %v992 = vand.u32 %v991, 4294901760
        %993 = vmatmul.mubr.f32.gmra.mrb[0].mxu0 %v992
        %v994 = vpop.f32.mrb[0].mxu0
        %v995 = vadd.f32 %v383, %v994
        %v996 = vpop.f32.mrb[0].mxu0
        %v997 = vadd.f32 %v387, %v996
        %v998 = vand.u32 %v311, 4294901760
        %v999 = vsub.f32 %v311, %v998
        %v1000 = vand.u32 %v999, 4294901760
        %v1001 = vsub.f32 %v999, %v1000
        %v1002 = vand.u32 %v1001, 4294901760
        %1003 = vmatprep.mubr.f32.mxu0 %v1002
        %v1004 = vand.u32 %v310, 4294901760
        %v1005 = vsub.f32 %v310, %v1004
        %v1006 = vand.u32 %v1005, 4294901760
        %v1007 = vsub.f32 %v1005, %v1006
        %v1008 = vand.u32 %v1007, 4294901760
        %1009 = vmatmul.mubr.f32.gmra.mrb[0].mxu0 %v1008
        %v1010 = vpop.f32.mrb[0].mxu0
        %v1011 = vadd.f32 %v383, %v1010
        %v1012 = vpop.f32.mrb[0].mxu0
        %v1013 = vadd.f32 %v387, %v1012
        %v1014 = vand.u32 %v313, 4294901760
        %v1015 = vsub.f32 %v313, %v1014
        %v1016 = vand.u32 %v1015, 4294901760
        %v1017 = vsub.f32 %v1015, %v1016
        %v1018 = vand.u32 %v1017, 4294901760
        %1019 = vmatprep.mubr.f32.mxu0 %v1018
        %v1020 = vand.u32 %v312, 4294901760
        %v1021 = vsub.f32 %v312, %v1020
        %v1022 = vand.u32 %v1021, 4294901760
        %v1023 = vsub.f32 %v1021, %v1022
        %v1024 = vand.u32 %v1023, 4294901760
        %1025 = vmatmul.mubr.f32.gmra.mrb[0].mxu0 %v1024
        %v1026 = vpop.f32.mrb[0].mxu0
        %v1027 = vadd.f32 %v383, %v1026
        %v1028 = vpop.f32.mrb[0].mxu0
        %v1029 = vadd.f32 %v387, %v1028
        %1030 = vdwg.mxu0
        %v1031 = vand.u32 %v315, 4294901760
        %v1032 = vsub.f32 %v315, %v1031
        %v1033 = vand.u32 %v1032, 4294901760
        %v1034 = vsub.f32 %v1032, %v1033
        %v1035 = vand.u32 %v1034, 4294901760
        %1036 = vmatprep.subr.mxu0 %v1035
        %v1037 = vand.u32 %v314, 4294901760
        %v1038 = vsub.f32 %v314, %v1037
        %v1039 = vand.u32 %v1038, 4294901760
        %v1040 = vsub.f32 %v1038, %v1039
        %v1041 = vand.u32 %v1040, 4294901760
        %1042 = vmatpush1.msra.mxu0 %v1041
        %v1043 = vand.u32 %v317, 4294901760
        %v1044 = vsub.f32 %v317, %v1043
        %v1045 = vand.u32 %v1044, 4294901760
        %v1046 = vsub.f32 %v1044, %v1045
        %v1047 = vand.u32 %v1046, 4294901760
        %1048 = vmatprep.subr.mxu0 %v1047
        %v1049 = vand.u32 %v316, 4294901760
        %v1050 = vsub.f32 %v316, %v1049
        %v1051 = vand.u32 %v1050, 4294901760
        %v1052 = vsub.f32 %v1050, %v1051
        %v1053 = vand.u32 %v1052, 4294901760
        %1054 = vmatpush1.msra.mxu0 %v1053
        %v1055 = vand.u32 %v319, 4294901760
        %v1056 = vsub.f32 %v319, %v1055
        %v1057 = vand.u32 %v1056, 4294901760
        %v1058 = vsub.f32 %v1056, %v1057
        %v1059 = vand.u32 %v1058, 4294901760
        %1060 = vmatprep.subr.mxu0 %v1059
        %v1061 = vand.u32 %v318, 4294901760
        %v1062 = vsub.f32 %v318, %v1061
        %v1063 = vand.u32 %v1062, 4294901760
        %v1064 = vsub.f32 %v1062, %v1063
        %v1065 = vand.u32 %v1064, 4294901760
        %1066 = vmatpush1.msra.mxu0 %v1065
        %v1067 = vand.u32 %v321, 4294901760
        %v1068 = vsub.f32 %v321, %v1067
        %v1069 = vand.u32 %v1068, 4294901760
        %v1070 = vsub.f32 %v1068, %v1069
        %v1071 = vand.u32 %v1070, 4294901760
        %1072 = vmatprep.subr.mxu0 %v1071
        %v1073 = vand.u32 %v320, 4294901760
        %v1074 = vsub.f32 %v320, %v1073
        %v1075 = vand.u32 %v1074, 4294901760
        %v1076 = vsub.f32 %v1074, %v1075
        %v1077 = vand.u32 %v1076, 4294901760
        %1078 = vmatpush1.msra.mxu0 %v1077
        %v1079 = vand.u32 %v323, 4294901760
        %v1080 = vsub.f32 %v323, %v1079
        %v1081 = vand.u32 %v1080, 4294901760
        %v1082 = vsub.f32 %v1080, %v1081
        %v1083 = vand.u32 %v1082, 4294901760
        %1084 = vmatprep.subr.mxu0 %v1083
        %v1085 = vand.u32 %v322, 4294901760
        %v1086 = vsub.f32 %v322, %v1085
        %v1087 = vand.u32 %v1086, 4294901760
        %v1088 = vsub.f32 %v1086, %v1087
        %v1089 = vand.u32 %v1088, 4294901760
        %1090 = vmatpush1.msra.mxu0 %v1089
        %v1091 = vand.u32 %v325, 4294901760
        %v1092 = vsub.f32 %v325, %v1091
        %v1093 = vand.u32 %v1092, 4294901760
        %v1094 = vsub.f32 %v1092, %v1093
        %v1095 = vand.u32 %v1094, 4294901760
        %1096 = vmatprep.subr.mxu0 %v1095
        %v1097 = vand.u32 %v324, 4294901760
        %v1098 = vsub.f32 %v324, %v1097
        %v1099 = vand.u32 %v1098, 4294901760
        %v1100 = vsub.f32 %v1098, %v1099
        %v1101 = vand.u32 %v1100, 4294901760
        %1102 = vmatpush1.msra.mxu0 %v1101
        %v1103 = vand.u32 %v327, 4294901760
        %v1104 = vsub.f32 %v327, %v1103
        %v1105 = vand.u32 %v1104, 4294901760
        %v1106 = vsub.f32 %v1104, %v1105
        %v1107 = vand.u32 %v1106, 4294901760
        %1108 = vmatprep.subr.mxu0 %v1107
        %v1109 = vand.u32 %v326, 4294901760
        %v1110 = vsub.f32 %v326, %v1109
        %v1111 = vand.u32 %v1110, 4294901760
        %v1112 = vsub.f32 %v1110, %v1111
        %v1113 = vand.u32 %v1112, 4294901760
        %1114 = vmatpush1.msra.mxu0 %v1113
        %v1115 = vand.u32 %v329, 4294901760
        %v1116 = vsub.f32 %v329, %v1115
        %v1117 = vand.u32 %v1116, 4294901760
        %v1118 = vsub.f32 %v1116, %v1117
        %v1119 = vand.u32 %v1118, 4294901760
        %1120 = vmatprep.subr.mxu0 %v1119
        %v1121 = vand.u32 %v328, 4294901760
        %v1122 = vsub.f32 %v328, %v1121
        %v1123 = vand.u32 %v1122, 4294901760
        %v1124 = vsub.f32 %v1122, %v1123
        %v1125 = vand.u32 %v1124, 4294901760
        %1126 = vmatpush1.msra.mxu0 %v1125
        %v1127 = vand.u32 %v331, 4294901760
        %v1128 = vsub.f32 %v331, %v1127
        %v1129 = vand.u32 %v1128, 4294901760
        %v1130 = vsub.f32 %v1128, %v1129
        %v1131 = vand.u32 %v1130, 4294901760
        %1132 = vmatprep.subr.mxu0 %v1131
        %v1133 = vand.u32 %v330, 4294901760
        %v1134 = vsub.f32 %v330, %v1133
        %v1135 = vand.u32 %v1134, 4294901760
        %v1136 = vsub.f32 %v1134, %v1135
        %v1137 = vand.u32 %v1136, 4294901760
        %1138 = vmatpush1.msra.mxu0 %v1137
        %v1139 = vand.u32 %v333, 4294901760
        %v1140 = vsub.f32 %v333, %v1139
        %v1141 = vand.u32 %v1140, 4294901760
        %v1142 = vsub.f32 %v1140, %v1141
        %v1143 = vand.u32 %v1142, 4294901760
        %1144 = vmatprep.subr.mxu0 %v1143
        %v1145 = vand.u32 %v332, 4294901760
        %v1146 = vsub.f32 %v332, %v1145
        %v1147 = vand.u32 %v1146, 4294901760
        %v1148 = vsub.f32 %v1146, %v1147
        %v1149 = vand.u32 %v1148, 4294901760
        %1150 = vmatpush1.msra.mxu0 %v1149
        %v1151 = vand.u32 %v335, 4294901760
        %v1152 = vsub.f32 %v335, %v1151
        %v1153 = vand.u32 %v1152, 4294901760
        %v1154 = vsub.f32 %v1152, %v1153
        %v1155 = vand.u32 %v1154, 4294901760
        %1156 = vmatprep.subr.mxu0 %v1155
        %v1157 = vand.u32 %v334, 4294901760
        %v1158 = vsub.f32 %v334, %v1157
        %v1159 = vand.u32 %v1158, 4294901760
        %v1160 = vsub.f32 %v1158, %v1159
        %v1161 = vand.u32 %v1160, 4294901760
        %1162 = vmatpush1.msra.mxu0 %v1161
        %v1163 = vand.u32 %v337, 4294901760
        %v1164 = vsub.f32 %v337, %v1163
        %v1165 = vand.u32 %v1164, 4294901760
        %v1166 = vsub.f32 %v1164, %v1165
        %v1167 = vand.u32 %v1166, 4294901760
        %1168 = vmatprep.subr.mxu0 %v1167
        %v1169 = vand.u32 %v336, 4294901760
        %v1170 = vsub.f32 %v336, %v1169
        %v1171 = vand.u32 %v1170, 4294901760
        %v1172 = vsub.f32 %v1170, %v1171
        %v1173 = vand.u32 %v1172, 4294901760
        %1174 = vmatpush1.msra.mxu0 %v1173
        %v1175 = vand.u32 %v339, 4294901760
        %v1176 = vsub.f32 %v339, %v1175
        %v1177 = vand.u32 %v1176, 4294901760
        %v1178 = vsub.f32 %v1176, %v1177
        %v1179 = vand.u32 %v1178, 4294901760
        %1180 = vmatprep.subr.mxu0 %v1179
        %v1181 = vand.u32 %v338, 4294901760
        %v1182 = vsub.f32 %v338, %v1181
        %v1183 = vand.u32 %v1182, 4294901760
        %v1184 = vsub.f32 %v1182, %v1183
        %v1185 = vand.u32 %v1184, 4294901760
        %1186 = vmatpush1.msra.mxu0 %v1185
        %v1187 = vand.u32 %v341, 4294901760
        %v1188 = vsub.f32 %v341, %v1187
        %v1189 = vand.u32 %v1188, 4294901760
        %v1190 = vsub.f32 %v1188, %v1189
        %v1191 = vand.u32 %v1190, 4294901760
        %1192 = vmatprep.subr.mxu0 %v1191
        %v1193 = vand.u32 %v340, 4294901760
        %v1194 = vsub.f32 %v340, %v1193
        %v1195 = vand.u32 %v1194, 4294901760
        %v1196 = vsub.f32 %v1194, %v1195
        %v1197 = vand.u32 %v1196, 4294901760
        %1198 = vmatpush1.msra.mxu0 %v1197
        %v1199 = vand.u32 %v343, 4294901760
        %v1200 = vsub.f32 %v343, %v1199
        %v1201 = vand.u32 %v1200, 4294901760
        %v1202 = vsub.f32 %v1200, %v1201
        %v1203 = vand.u32 %v1202, 4294901760
        %1204 = vmatprep.subr.mxu0 %v1203
        %v1205 = vand.u32 %v342, 4294901760
        %v1206 = vsub.f32 %v342, %v1205
        %v1207 = vand.u32 %v1206, 4294901760
        %v1208 = vsub.f32 %v1206, %v1207
        %v1209 = vand.u32 %v1208, 4294901760
        %1210 = vmatpush1.msra.mxu0 %v1209
        %v1211 = vand.u32 %v345, 4294901760
        %v1212 = vsub.f32 %v345, %v1211
        %v1213 = vand.u32 %v1212, 4294901760
        %v1214 = vsub.f32 %v1212, %v1213
        %v1215 = vand.u32 %v1214, 4294901760
        %1216 = vmatprep.subr.mxu0 %v1215
        %v1217 = vand.u32 %v344, 4294901760
        %v1218 = vsub.f32 %v344, %v1217
        %v1219 = vand.u32 %v1218, 4294901760
        %v1220 = vsub.f32 %v1218, %v1219
        %v1221 = vand.u32 %v1220, 4294901760
        %1222 = vmatpush1.msra.mxu0 %v1221
        %v1223 = vand.u32 %v347, 4294901760
        %v1224 = vsub.f32 %v347, %v1223
        %v1225 = vand.u32 %v1224, 4294901760
        %v1226 = vsub.f32 %v1224, %v1225
        %v1227 = vand.u32 %v1226, 4294901760
        %1228 = vmatprep.subr.mxu0 %v1227
        %v1229 = vand.u32 %v346, 4294901760
        %v1230 = vsub.f32 %v346, %v1229
        %v1231 = vand.u32 %v1230, 4294901760
        %v1232 = vsub.f32 %v1230, %v1231
        %v1233 = vand.u32 %v1232, 4294901760
        %1234 = vmatpush1.msra.mxu0 %v1233
        %v1235 = vand.u32 %v349, 4294901760
        %v1236 = vsub.f32 %v349, %v1235
        %v1237 = vand.u32 %v1236, 4294901760
        %v1238 = vsub.f32 %v1236, %v1237
        %v1239 = vand.u32 %v1238, 4294901760
        %1240 = vmatprep.subr.mxu0 %v1239
        %v1241 = vand.u32 %v348, 4294901760
        %v1242 = vsub.f32 %v348, %v1241
        %v1243 = vand.u32 %v1242, 4294901760
        %v1244 = vsub.f32 %v1242, %v1243
        %v1245 = vand.u32 %v1244, 4294901760
        %1246 = vmatpush1.msra.mxu0 %v1245
        %v1247 = vand.u32 %v351, 4294901760
        %v1248 = vsub.f32 %v351, %v1247
        %v1249 = vand.u32 %v1248, 4294901760
        %v1250 = vsub.f32 %v1248, %v1249
        %v1251 = vand.u32 %v1250, 4294901760
        %1252 = vmatprep.subr.mxu0 %v1251
        %v1253 = vand.u32 %v350, 4294901760
        %v1254 = vsub.f32 %v350, %v1253
        %v1255 = vand.u32 %v1254, 4294901760
        %v1256 = vsub.f32 %v1254, %v1255
        %v1257 = vand.u32 %v1256, 4294901760
        %1258 = vmatpush1.msra.mxu0 %v1257
        %v1259 = vand.u32 %v353, 4294901760
        %v1260 = vsub.f32 %v353, %v1259
        %v1261 = vand.u32 %v1260, 4294901760
        %v1262 = vsub.f32 %v1260, %v1261
        %v1263 = vand.u32 %v1262, 4294901760
        %1264 = vmatprep.subr.mxu0 %v1263
        %v1265 = vand.u32 %v352, 4294901760
        %v1266 = vsub.f32 %v352, %v1265
        %v1267 = vand.u32 %v1266, 4294901760
        %v1268 = vsub.f32 %v1266, %v1267
        %v1269 = vand.u32 %v1268, 4294901760
        %1270 = vmatpush1.msra.mxu0 %v1269
        %v1271 = vand.u32 %v355, 4294901760
        %v1272 = vsub.f32 %v355, %v1271
        %v1273 = vand.u32 %v1272, 4294901760
        %v1274 = vsub.f32 %v1272, %v1273
        %v1275 = vand.u32 %v1274, 4294901760
        %1276 = vmatprep.subr.mxu0 %v1275
        %v1277 = vand.u32 %v354, 4294901760
        %v1278 = vsub.f32 %v354, %v1277
        %v1279 = vand.u32 %v1278, 4294901760
        %v1280 = vsub.f32 %v1278, %v1279
        %v1281 = vand.u32 %v1280, 4294901760
        %1282 = vmatpush1.msra.mxu0 %v1281
        %v1283 = vand.u32 %v357, 4294901760
        %v1284 = vsub.f32 %v357, %v1283
        %v1285 = vand.u32 %v1284, 4294901760
        %v1286 = vsub.f32 %v1284, %v1285
        %v1287 = vand.u32 %v1286, 4294901760
        %1288 = vmatprep.subr.mxu0 %v1287
        %v1289 = vand.u32 %v356, 4294901760
        %v1290 = vsub.f32 %v356, %v1289
        %v1291 = vand.u32 %v1290, 4294901760
        %v1292 = vsub.f32 %v1290, %v1291
        %v1293 = vand.u32 %v1292, 4294901760
        %1294 = vmatpush1.msra.mxu0 %v1293
        %v1295 = vand.u32 %v359, 4294901760
        %v1296 = vsub.f32 %v359, %v1295
        %v1297 = vand.u32 %v1296, 4294901760
        %v1298 = vsub.f32 %v1296, %v1297
        %v1299 = vand.u32 %v1298, 4294901760
        %1300 = vmatprep.subr.mxu0 %v1299
        %v1301 = vand.u32 %v358, 4294901760
        %v1302 = vsub.f32 %v358, %v1301
        %v1303 = vand.u32 %v1302, 4294901760
        %v1304 = vsub.f32 %v1302, %v1303
        %v1305 = vand.u32 %v1304, 4294901760
        %1306 = vmatpush1.msra.mxu0 %v1305
        %v1307 = vand.u32 %v361, 4294901760
        %v1308 = vsub.f32 %v361, %v1307
        %v1309 = vand.u32 %v1308, 4294901760
        %v1310 = vsub.f32 %v1308, %v1309
        %v1311 = vand.u32 %v1310, 4294901760
        %1312 = vmatprep.subr.mxu0 %v1311
        %v1313 = vand.u32 %v360, 4294901760
        %v1314 = vsub.f32 %v360, %v1313
        %v1315 = vand.u32 %v1314, 4294901760
        %v1316 = vsub.f32 %v1314, %v1315
        %v1317 = vand.u32 %v1316, 4294901760
        %1318 = vmatpush1.msra.mxu0 %v1317
        %v1319 = vand.u32 %v363, 4294901760
        %v1320 = vsub.f32 %v363, %v1319
        %v1321 = vand.u32 %v1320, 4294901760
        %v1322 = vsub.f32 %v1320, %v1321
        %v1323 = vand.u32 %v1322, 4294901760
        %1324 = vmatprep.subr.mxu0 %v1323
        %v1325 = vand.u32 %v362, 4294901760
        %v1326 = vsub.f32 %v362, %v1325
        %v1327 = vand.u32 %v1326, 4294901760
        %v1328 = vsub.f32 %v1326, %v1327
        %v1329 = vand.u32 %v1328, 4294901760
        %1330 = vmatpush1.msra.mxu0 %v1329
        %v1331 = vand.u32 %v365, 4294901760
        %v1332 = vsub.f32 %v365, %v1331
        %v1333 = vand.u32 %v1332, 4294901760
        %v1334 = vsub.f32 %v1332, %v1333
        %v1335 = vand.u32 %v1334, 4294901760
        %1336 = vmatprep.subr.mxu0 %v1335
        %v1337 = vand.u32 %v364, 4294901760
        %v1338 = vsub.f32 %v364, %v1337
        %v1339 = vand.u32 %v1338, 4294901760
        %v1340 = vsub.f32 %v1338, %v1339
        %v1341 = vand.u32 %v1340, 4294901760
        %1342 = vmatpush1.msra.mxu0 %v1341
        %v1343 = vand.u32 %v367, 4294901760
        %v1344 = vsub.f32 %v367, %v1343
        %v1345 = vand.u32 %v1344, 4294901760
        %v1346 = vsub.f32 %v1344, %v1345
        %v1347 = vand.u32 %v1346, 4294901760
        %1348 = vmatprep.subr.mxu0 %v1347
        %v1349 = vand.u32 %v366, 4294901760
        %v1350 = vsub.f32 %v366, %v1349
        %v1351 = vand.u32 %v1350, 4294901760
        %v1352 = vsub.f32 %v1350, %v1351
        %v1353 = vand.u32 %v1352, 4294901760
        %1354 = vmatpush1.msra.mxu0 %v1353
        %v1355 = vand.u32 %v369, 4294901760
        %v1356 = vsub.f32 %v369, %v1355
        %v1357 = vand.u32 %v1356, 4294901760
        %v1358 = vsub.f32 %v1356, %v1357
        %v1359 = vand.u32 %v1358, 4294901760
        %1360 = vmatprep.subr.mxu0 %v1359
        %v1361 = vand.u32 %v368, 4294901760
        %v1362 = vsub.f32 %v368, %v1361
        %v1363 = vand.u32 %v1362, 4294901760
        %v1364 = vsub.f32 %v1362, %v1363
        %v1365 = vand.u32 %v1364, 4294901760
        %1366 = vmatpush1.msra.mxu0 %v1365
        %v1367 = vand.u32 %v371, 4294901760
        %v1368 = vsub.f32 %v371, %v1367
        %v1369 = vand.u32 %v1368, 4294901760
        %v1370 = vsub.f32 %v1368, %v1369
        %v1371 = vand.u32 %v1370, 4294901760
        %1372 = vmatprep.subr.mxu0 %v1371
        %v1373 = vand.u32 %v370, 4294901760
        %v1374 = vsub.f32 %v370, %v1373
        %v1375 = vand.u32 %v1374, 4294901760
        %v1376 = vsub.f32 %v1374, %v1375
        %v1377 = vand.u32 %v1376, 4294901760
        %1378 = vmatpush1.msra.mxu0 %v1377
        %v1379 = vand.u32 %v373, 4294901760
        %v1380 = vsub.f32 %v373, %v1379
        %v1381 = vand.u32 %v1380, 4294901760
        %v1382 = vsub.f32 %v1380, %v1381
        %v1383 = vand.u32 %v1382, 4294901760
        %1384 = vmatprep.subr.mxu0 %v1383
        %v1385 = vand.u32 %v372, 4294901760
        %v1386 = vsub.f32 %v372, %v1385
        %v1387 = vand.u32 %v1386, 4294901760
        %v1388 = vsub.f32 %v1386, %v1387
        %v1389 = vand.u32 %v1388, 4294901760
        %1390 = vmatpush1.msra.mxu0 %v1389
        %v1391 = vand.u32 %v375, 4294901760
        %v1392 = vsub.f32 %v375, %v1391
        %v1393 = vand.u32 %v1392, 4294901760
        %v1394 = vsub.f32 %v1392, %v1393
        %v1395 = vand.u32 %v1394, 4294901760
        %1396 = vmatprep.subr.mxu0 %v1395
        %v1397 = vand.u32 %v374, 4294901760
        %v1398 = vsub.f32 %v374, %v1397
        %v1399 = vand.u32 %v1398, 4294901760
        %v1400 = vsub.f32 %v1398, %v1399
        %v1401 = vand.u32 %v1400, 4294901760
        %1402 = vmatpush1.msra.mxu0 %v1401
        %v1403 = vand.u32 %v377, 4294901760
        %v1404 = vsub.f32 %v377, %v1403
        %v1405 = vand.u32 %v1404, 4294901760
        %v1406 = vsub.f32 %v1404, %v1405
        %v1407 = vand.u32 %v1406, 4294901760
        %1408 = vmatprep.subr.mxu0 %v1407
        %v1409 = vand.u32 %v376, 4294901760
        %v1410 = vsub.f32 %v376, %v1409
        %v1411 = vand.u32 %v1410, 4294901760
        %v1412 = vsub.f32 %v1410, %v1411
        %v1413 = vand.u32 %v1412, 4294901760
        %1414 = vmatpush1.msra.mxu0 %v1413
        %v1415 = vand.u32 %v251, 4294901760
        %1416 = vmatprep.mubr.f32.mxu0 %v1415
        %v1417 = vand.u32 %v250, 4294901760
        %1418 = vmatmul.mubr.f32.gmra.mrb[0].mxu0 %v1417
        %v1419 = vpop.f32.mrb[0].mxu0
        %v1420 = vadd.f32 %v531, %v1419
        %v1421 = vpop.f32.mrb[0].mxu0
        %v1422 = vadd.f32 %v533, %v1421
        %v1423 = vand.u32 %v253, 4294901760
        %1424 = vmatprep.mubr.f32.mxu0 %v1423
        %v1425 = vand.u32 %v252, 4294901760
        %1426 = vmatmul.mubr.f32.gmra.mrb[0].mxu0 %v1425
        %v1427 = vpop.f32.mrb[0].mxu0
        %v1428 = vadd.f32 %v547, %v1427
        %v1429 = vpop.f32.mrb[0].mxu0
        %v1430 = vadd.f32 %v549, %v1429
        %v1431 = vand.u32 %v255, 4294901760
        %1432 = vmatprep.mubr.f32.mxu0 %v1431
        %v1433 = vand.u32 %v254, 4294901760
        %1434 = vmatmul.mubr.f32.gmra.mrb[0].mxu0 %v1433
        %v1435 = vpop.f32.mrb[0].mxu0
        %v1436 = vadd.f32 %v563, %v1435
        %v1437 = vpop.f32.mrb[0].mxu0
        %v1438 = vadd.f32 %v565, %v1437
        %v1439 = vand.u32 %v257, 4294901760
        %1440 = vmatprep.mubr.f32.mxu0 %v1439
        %v1441 = vand.u32 %v256, 4294901760
        %1442 = vmatmul.mubr.f32.gmra.mrb[0].mxu0 %v1441
        %v1443 = vpop.f32.mrb[0].mxu0
        %v1444 = vadd.f32 %v579, %v1443
        %v1445 = vpop.f32.mrb[0].mxu0
        %v1446 = vadd.f32 %v581, %v1445
        %v1447 = vand.u32 %v259, 4294901760
        %1448 = vmatprep.mubr.f32.mxu0 %v1447
        %v1449 = vand.u32 %v258, 4294901760
        %1450 = vmatmul.mubr.f32.gmra.mrb[0].mxu0 %v1449
        %v1451 = vpop.f32.mrb[0].mxu0
        %v1452 = vadd.f32 %v595, %v1451
        %v1453 = vpop.f32.mrb[0].mxu0
        %v1454 = vadd.f32 %v597, %v1453
        %v1455 = vand.u32 %v261, 4294901760
        %1456 = vmatprep.mubr.f32.mxu0 %v1455
        %v1457 = vand.u32 %v260, 4294901760
        %1458 = vmatmul.mubr.f32.gmra.mrb[0].mxu0 %v1457
        %v1459 = vpop.f32.mrb[0].mxu0
        %v1460 = vadd.f32 %v611, %v1459
        %v1461 = vpop.f32.mrb[0].mxu0
        %v1462 = vadd.f32 %v613, %v1461
        %v1463 = vand.u32 %v263, 4294901760
        %1464 = vmatprep.mubr.f32.mxu0 %v1463
        %v1465 = vand.u32 %v262, 4294901760
        %1466 = vmatmul.mubr.f32.gmra.mrb[0].mxu0 %v1465
        %v1467 = vpop.f32.mrb[0].mxu0
        %v1468 = vadd.f32 %v627, %v1467
        %v1469 = vpop.f32.mrb[0].mxu0
        %v1470 = vadd.f32 %v629, %v1469
        %v1471 = vand.u32 %v265, 4294901760
        %1472 = vmatprep.mubr.f32.mxu0 %v1471
        %v1473 = vand.u32 %v264, 4294901760
        %1474 = vmatmul.mubr.f32.gmra.mrb[0].mxu0 %v1473
        %v1475 = vpop.f32.mrb[0].mxu0
        %v1476 = vadd.f32 %v643, %v1475
        %v1477 = vpop.f32.mrb[0].mxu0
        %v1478 = vadd.f32 %v645, %v1477
        %v1479 = vand.u32 %v267, 4294901760
        %1480 = vmatprep.mubr.f32.mxu0 %v1479
        %v1481 = vand.u32 %v266, 4294901760
        %1482 = vmatmul.mubr.f32.gmra.mrb[0].mxu0 %v1481
        %v1483 = vpop.f32.mrb[0].mxu0
        %v1484 = vadd.f32 %v659, %v1483
        %v1485 = vpop.f32.mrb[0].mxu0
        %v1486 = vadd.f32 %v661, %v1485
        %v1487 = vand.u32 %v269, 4294901760
        %1488 = vmatprep.mubr.f32.mxu0 %v1487
        %v1489 = vand.u32 %v268, 4294901760
        %1490 = vmatmul.mubr.f32.gmra.mrb[0].mxu0 %v1489
        %v1491 = vpop.f32.mrb[0].mxu0
        %v1492 = vadd.f32 %v675, %v1491
        %v1493 = vpop.f32.mrb[0].mxu0
        %v1494 = vadd.f32 %v677, %v1493
        %v1495 = vand.u32 %v271, 4294901760
        %1496 = vmatprep.mubr.f32.mxu0 %v1495
        %v1497 = vand.u32 %v270, 4294901760
        %1498 = vmatmul.mubr.f32.gmra.mrb[0].mxu0 %v1497
        %v1499 = vpop.f32.mrb[0].mxu0
        %v1500 = vadd.f32 %v691, %v1499
        %v1501 = vpop.f32.mrb[0].mxu0
        %v1502 = vadd.f32 %v693, %v1501
        %v1503 = vand.u32 %v273, 4294901760
        %1504 = vmatprep.mubr.f32.mxu0 %v1503
        %v1505 = vand.u32 %v272, 4294901760
        %1506 = vmatmul.mubr.f32.gmra.mrb[0].mxu0 %v1505
        %v1507 = vpop.f32.mrb[0].mxu0
        %v1508 = vadd.f32 %v707, %v1507
        %v1509 = vpop.f32.mrb[0].mxu0
        %v1510 = vadd.f32 %v709, %v1509
        %v1511 = vand.u32 %v275, 4294901760
        %1512 = vmatprep.mubr.f32.mxu0 %v1511
        %v1513 = vand.u32 %v274, 4294901760
        %1514 = vmatmul.mubr.f32.gmra.mrb[0].mxu0 %v1513
        %v1515 = vpop.f32.mrb[0].mxu0
        %v1516 = vadd.f32 %v723, %v1515
        %v1517 = vpop.f32.mrb[0].mxu0
        %v1518 = vadd.f32 %v725, %v1517
        %v1519 = vand.u32 %v277, 4294901760
        %1520 = vmatprep.mubr.f32.mxu0 %v1519
        %v1521 = vand.u32 %v276, 4294901760
        %1522 = vmatmul.mubr.f32.gmra.mrb[0].mxu0 %v1521
        %v1523 = vpop.f32.mrb[0].mxu0
        %v1524 = vadd.f32 %v739, %v1523
        %v1525 = vpop.f32.mrb[0].mxu0
        %v1526 = vadd.f32 %v741, %v1525
        %v1527 = vand.u32 %v279, 4294901760
        %1528 = vmatprep.mubr.f32.mxu0 %v1527
        %v1529 = vand.u32 %v278, 4294901760
        %1530 = vmatmul.mubr.f32.gmra.mrb[0].mxu0 %v1529
        %v1531 = vpop.f32.mrb[0].mxu0
        %v1532 = vadd.f32 %v755, %v1531
        %v1533 = vpop.f32.mrb[0].mxu0
        %v1534 = vadd.f32 %v757, %v1533
        %v1535 = vand.u32 %v281, 4294901760
        %1536 = vmatprep.mubr.f32.mxu0 %v1535
        %v1537 = vand.u32 %v280, 4294901760
        %1538 = vmatmul.mubr.f32.gmra.mrb[0].mxu0 %v1537
        %v1539 = vpop.f32.mrb[0].mxu0
        %v1540 = vadd.f32 %v771, %v1539
        %v1541 = vpop.f32.mrb[0].mxu0
        %v1542 = vadd.f32 %v773, %v1541
        %v1543 = vand.u32 %v283, 4294901760
        %1544 = vmatprep.mubr.f32.mxu0 %v1543
        %v1545 = vand.u32 %v282, 4294901760
        %1546 = vmatmul.mubr.f32.gmra.mrb[0].mxu0 %v1545
        %v1547 = vpop.f32.mrb[0].mxu0
        %v1548 = vadd.f32 %v787, %v1547
        %v1549 = vpop.f32.mrb[0].mxu0
        %v1550 = vadd.f32 %v789, %v1549
        %v1551 = vand.u32 %v285, 4294901760
        %1552 = vmatprep.mubr.f32.mxu0 %v1551
        %v1553 = vand.u32 %v284, 4294901760
        %1554 = vmatmul.mubr.f32.gmra.mrb[0].mxu0 %v1553
        %v1555 = vpop.f32.mrb[0].mxu0
        %v1556 = vadd.f32 %v803, %v1555
        %v1557 = vpop.f32.mrb[0].mxu0
        %v1558 = vadd.f32 %v805, %v1557
        %v1559 = vand.u32 %v287, 4294901760
        %1560 = vmatprep.mubr.f32.mxu0 %v1559
        %v1561 = vand.u32 %v286, 4294901760
        %1562 = vmatmul.mubr.f32.gmra.mrb[0].mxu0 %v1561
        %v1563 = vpop.f32.mrb[0].mxu0
        %v1564 = vadd.f32 %v819, %v1563
        %v1565 = vpop.f32.mrb[0].mxu0
        %v1566 = vadd.f32 %v821, %v1565
        %v1567 = vand.u32 %v289, 4294901760
        %1568 = vmatprep.mubr.f32.mxu0 %v1567
        %v1569 = vand.u32 %v288, 4294901760
        %1570 = vmatmul.mubr.f32.gmra.mrb[0].mxu0 %v1569
        %v1571 = vpop.f32.mrb[0].mxu0
        %v1572 = vadd.f32 %v835, %v1571
        %v1573 = vpop.f32.mrb[0].mxu0
        %v1574 = vadd.f32 %v837, %v1573
        %v1575 = vand.u32 %v291, 4294901760
        %1576 = vmatprep.mubr.f32.mxu0 %v1575
        %v1577 = vand.u32 %v290, 4294901760
        %1578 = vmatmul.mubr.f32.gmra.mrb[0].mxu0 %v1577
        %v1579 = vpop.f32.mrb[0].mxu0
        %v1580 = vadd.f32 %v851, %v1579
        %v1581 = vpop.f32.mrb[0].mxu0
        %v1582 = vadd.f32 %v853, %v1581
        %v1583 = vand.u32 %v293, 4294901760
        %1584 = vmatprep.mubr.f32.mxu0 %v1583
        %v1585 = vand.u32 %v292, 4294901760
        %1586 = vmatmul.mubr.f32.gmra.mrb[0].mxu0 %v1585
        %v1587 = vpop.f32.mrb[0].mxu0
        %v1588 = vadd.f32 %v867, %v1587
        %v1589 = vpop.f32.mrb[0].mxu0
        %v1590 = vadd.f32 %v869, %v1589
        %v1591 = vand.u32 %v295, 4294901760
        %1592 = vmatprep.mubr.f32.mxu0 %v1591
        %v1593 = vand.u32 %v294, 4294901760
        %1594 = vmatmul.mubr.f32.gmra.mrb[0].mxu0 %v1593
        %v1595 = vpop.f32.mrb[0].mxu0
        %v1596 = vadd.f32 %v883, %v1595
        %v1597 = vpop.f32.mrb[0].mxu0
        %v1598 = vadd.f32 %v885, %v1597
        %v1599 = vand.u32 %v297, 4294901760
        %1600 = vmatprep.mubr.f32.mxu0 %v1599
        %v1601 = vand.u32 %v296, 4294901760
        %1602 = vmatmul.mubr.f32.gmra.mrb[0].mxu0 %v1601
        %v1603 = vpop.f32.mrb[0].mxu0
        %v1604 = vadd.f32 %v899, %v1603
        %v1605 = vpop.f32.mrb[0].mxu0
        %v1606 = vadd.f32 %v901, %v1605
        %v1607 = vand.u32 %v299, 4294901760
        %1608 = vmatprep.mubr.f32.mxu0 %v1607
        %v1609 = vand.u32 %v298, 4294901760
        %1610 = vmatmul.mubr.f32.gmra.mrb[0].mxu0 %v1609
        %v1611 = vpop.f32.mrb[0].mxu0
        %v1612 = vadd.f32 %v915, %v1611
        %v1613 = vpop.f32.mrb[0].mxu0
        %v1614 = vadd.f32 %v917, %v1613
        %v1615 = vand.u32 %v301, 4294901760
        %1616 = vmatprep.mubr.f32.mxu0 %v1615
        %v1617 = vand.u32 %v300, 4294901760
        %1618 = vmatmul.mubr.f32.gmra.mrb[0].mxu0 %v1617
        %v1619 = vpop.f32.mrb[0].mxu0
        %v1620 = vadd.f32 %v931, %v1619
        %v1621 = vpop.f32.mrb[0].mxu0
        %v1622 = vadd.f32 %v933, %v1621
        %v1623 = vand.u32 %v303, 4294901760
        %1624 = vmatprep.mubr.f32.mxu0 %v1623
        %v1625 = vand.u32 %v302, 4294901760
        %1626 = vmatmul.mubr.f32.gmra.mrb[0].mxu0 %v1625
        %v1627 = vpop.f32.mrb[0].mxu0
        %v1628 = vadd.f32 %v947, %v1627
        %v1629 = vpop.f32.mrb[0].mxu0
        %v1630 = vadd.f32 %v949, %v1629
        %v1631 = vand.u32 %v305, 4294901760
        %1632 = vmatprep.mubr.f32.mxu0 %v1631
        %v1633 = vand.u32 %v304, 4294901760
        %1634 = vmatmul.mubr.f32.gmra.mrb[0].mxu0 %v1633
        %v1635 = vpop.f32.mrb[0].mxu0
        %v1636 = vadd.f32 %v963, %v1635
        %v1637 = vpop.f32.mrb[0].mxu0
        %v1638 = vadd.f32 %v965, %v1637
        %v1639 = vand.u32 %v307, 4294901760
        %1640 = vmatprep.mubr.f32.mxu0 %v1639
        %v1641 = vand.u32 %v306, 4294901760
        %1642 = vmatmul.mubr.f32.gmra.mrb[0].mxu0 %v1641
        %v1643 = vpop.f32.mrb[0].mxu0
        %v1644 = vadd.f32 %v979, %v1643
        %v1645 = vpop.f32.mrb[0].mxu0
        %v1646 = vadd.f32 %v981, %v1645
        %v1647 = vand.u32 %v309, 4294901760
        %1648 = vmatprep.mubr.f32.mxu0 %v1647
        %v1649 = vand.u32 %v308, 4294901760
        %1650 = vmatmul.mubr.f32.gmra.mrb[0].mxu0 %v1649
        %v1651 = vpop.f32.mrb[0].mxu0
        %v1652 = vadd.f32 %v995, %v1651
        %v1653 = vpop.f32.mrb[0].mxu0
        %v1654 = vadd.f32 %v997, %v1653
        %v1655 = vand.u32 %v311, 4294901760
        %1656 = vmatprep.mubr.f32.mxu0 %v1655
        %v1657 = vand.u32 %v310, 4294901760
        %1658 = vmatmul.mubr.f32.gmra.mrb[0].mxu0 %v1657
        %v1659 = vpop.f32.mrb[0].mxu0
        %v1660 = vadd.f32 %v1011, %v1659
        %v1661 = vpop.f32.mrb[0].mxu0
        %v1662 = vadd.f32 %v1013, %v1661
        %v1663 = vand.u32 %v313, 4294901760
        %1664 = vmatprep.mubr.f32.mxu0 %v1663
        %v1665 = vand.u32 %v312, 4294901760
        %1666 = vmatmul.mubr.f32.gmra.mrb[0].mxu0 %v1665
        %v1667 = vpop.f32.mrb[0].mxu0
        %v1668 = vadd.f32 %v1027, %v1667
        %v1669 = vpop.f32.mrb[0].mxu0
        %v1670 = vadd.f32 %v1029, %v1669
        %1671 = vdwg.mxu0
        %v1672 = vand.u32 %v315, 4294901760
        %v1673 = vsub.f32 %v315, %v1672
        %1674 = vmatprep.subr.mxu0 %v1673
        %v1675 = vand.u32 %v314, 4294901760
        %v1676 = vsub.f32 %v314, %v1675
        %1677 = vmatpush1.msra.mxu0 %v1676
        %v1678 = vand.u32 %v317, 4294901760
        %v1679 = vsub.f32 %v317, %v1678
        %1680 = vmatprep.subr.mxu0 %v1679
        %v1681 = vand.u32 %v316, 4294901760
        %v1682 = vsub.f32 %v316, %v1681
        %1683 = vmatpush1.msra.mxu0 %v1682
        %v1684 = vand.u32 %v319, 4294901760
        %v1685 = vsub.f32 %v319, %v1684
        %1686 = vmatprep.subr.mxu0 %v1685
        %v1687 = vand.u32 %v318, 4294901760
        %v1688 = vsub.f32 %v318, %v1687
        %1689 = vmatpush1.msra.mxu0 %v1688
        %v1690 = vand.u32 %v321, 4294901760
        %v1691 = vsub.f32 %v321, %v1690
        %1692 = vmatprep.subr.mxu0 %v1691
        %v1693 = vand.u32 %v320, 4294901760
        %v1694 = vsub.f32 %v320, %v1693
        %1695 = vmatpush1.msra.mxu0 %v1694
        %v1696 = vand.u32 %v323, 4294901760
        %v1697 = vsub.f32 %v323, %v1696
        %1698 = vmatprep.subr.mxu0 %v1697
        %v1699 = vand.u32 %v322, 4294901760
        %v1700 = vsub.f32 %v322, %v1699
        %1701 = vmatpush1.msra.mxu0 %v1700
        %v1702 = vand.u32 %v325, 4294901760
        %v1703 = vsub.f32 %v325, %v1702
        %1704 = vmatprep.subr.mxu0 %v1703
        %v1705 = vand.u32 %v324, 4294901760
        %v1706 = vsub.f32 %v324, %v1705
        %1707 = vmatpush1.msra.mxu0 %v1706
        %v1708 = vand.u32 %v327, 4294901760
        %v1709 = vsub.f32 %v327, %v1708
        %1710 = vmatprep.subr.mxu0 %v1709
        %v1711 = vand.u32 %v326, 4294901760
        %v1712 = vsub.f32 %v326, %v1711
        %1713 = vmatpush1.msra.mxu0 %v1712
        %v1714 = vand.u32 %v329, 4294901760
        %v1715 = vsub.f32 %v329, %v1714
        %1716 = vmatprep.subr.mxu0 %v1715
        %v1717 = vand.u32 %v328, 4294901760
        %v1718 = vsub.f32 %v328, %v1717
        %1719 = vmatpush1.msra.mxu0 %v1718
        %v1720 = vand.u32 %v331, 4294901760
        %v1721 = vsub.f32 %v331, %v1720
        %1722 = vmatprep.subr.mxu0 %v1721
        %v1723 = vand.u32 %v330, 4294901760
        %v1724 = vsub.f32 %v330, %v1723
        %1725 = vmatpush1.msra.mxu0 %v1724
        %v1726 = vand.u32 %v333, 4294901760
        %v1727 = vsub.f32 %v333, %v1726
        %1728 = vmatprep.subr.mxu0 %v1727
        %v1729 = vand.u32 %v332, 4294901760
        %v1730 = vsub.f32 %v332, %v1729
        %1731 = vmatpush1.msra.mxu0 %v1730
        %v1732 = vand.u32 %v335, 4294901760
        %v1733 = vsub.f32 %v335, %v1732
        %1734 = vmatprep.subr.mxu0 %v1733
        %v1735 = vand.u32 %v334, 4294901760
        %v1736 = vsub.f32 %v334, %v1735
        %1737 = vmatpush1.msra.mxu0 %v1736
        %v1738 = vand.u32 %v337, 4294901760
        %v1739 = vsub.f32 %v337, %v1738
        %1740 = vmatprep.subr.mxu0 %v1739
        %v1741 = vand.u32 %v336, 4294901760
        %v1742 = vsub.f32 %v336, %v1741
        %1743 = vmatpush1.msra.mxu0 %v1742
        %v1744 = vand.u32 %v339, 4294901760
        %v1745 = vsub.f32 %v339, %v1744
        %1746 = vmatprep.subr.mxu0 %v1745
        %v1747 = vand.u32 %v338, 4294901760
        %v1748 = vsub.f32 %v338, %v1747
        %1749 = vmatpush1.msra.mxu0 %v1748
        %v1750 = vand.u32 %v341, 4294901760
        %v1751 = vsub.f32 %v341, %v1750
        %1752 = vmatprep.subr.mxu0 %v1751
        %v1753 = vand.u32 %v340, 4294901760
        %v1754 = vsub.f32 %v340, %v1753
        %1755 = vmatpush1.msra.mxu0 %v1754
        %v1756 = vand.u32 %v343, 4294901760
        %v1757 = vsub.f32 %v343, %v1756
        %1758 = vmatprep.subr.mxu0 %v1757
        %v1759 = vand.u32 %v342, 4294901760
        %v1760 = vsub.f32 %v342, %v1759
        %1761 = vmatpush1.msra.mxu0 %v1760
        %v1762 = vand.u32 %v345, 4294901760
        %v1763 = vsub.f32 %v345, %v1762
        %1764 = vmatprep.subr.mxu0 %v1763
        %v1765 = vand.u32 %v344, 4294901760
        %v1766 = vsub.f32 %v344, %v1765
        %1767 = vmatpush1.msra.mxu0 %v1766
        %v1768 = vand.u32 %v347, 4294901760
        %v1769 = vsub.f32 %v347, %v1768
        %1770 = vmatprep.subr.mxu0 %v1769
        %v1771 = vand.u32 %v346, 4294901760
        %v1772 = vsub.f32 %v346, %v1771
        %1773 = vmatpush1.msra.mxu0 %v1772
        %v1774 = vand.u32 %v349, 4294901760
        %v1775 = vsub.f32 %v349, %v1774
        %1776 = vmatprep.subr.mxu0 %v1775
        %v1777 = vand.u32 %v348, 4294901760
        %v1778 = vsub.f32 %v348, %v1777
        %1779 = vmatpush1.msra.mxu0 %v1778
        %v1780 = vand.u32 %v351, 4294901760
        %v1781 = vsub.f32 %v351, %v1780
        %1782 = vmatprep.subr.mxu0 %v1781
        %v1783 = vand.u32 %v350, 4294901760
        %v1784 = vsub.f32 %v350, %v1783
        %1785 = vmatpush1.msra.mxu0 %v1784
        %v1786 = vand.u32 %v353, 4294901760
        %v1787 = vsub.f32 %v353, %v1786
        %1788 = vmatprep.subr.mxu0 %v1787
        %v1789 = vand.u32 %v352, 4294901760
        %v1790 = vsub.f32 %v352, %v1789
        %1791 = vmatpush1.msra.mxu0 %v1790
        %v1792 = vand.u32 %v355, 4294901760
        %v1793 = vsub.f32 %v355, %v1792
        %1794 = vmatprep.subr.mxu0 %v1793
        %v1795 = vand.u32 %v354, 4294901760
        %v1796 = vsub.f32 %v354, %v1795
        %1797 = vmatpush1.msra.mxu0 %v1796
        %v1798 = vand.u32 %v357, 4294901760
        %v1799 = vsub.f32 %v357, %v1798
        %1800 = vmatprep.subr.mxu0 %v1799
        %v1801 = vand.u32 %v356, 4294901760
        %v1802 = vsub.f32 %v356, %v1801
        %1803 = vmatpush1.msra.mxu0 %v1802
        %v1804 = vand.u32 %v359, 4294901760
        %v1805 = vsub.f32 %v359, %v1804
        %1806 = vmatprep.subr.mxu0 %v1805
        %v1807 = vand.u32 %v358, 4294901760
        %v1808 = vsub.f32 %v358, %v1807
        %1809 = vmatpush1.msra.mxu0 %v1808
        %v1810 = vand.u32 %v361, 4294901760
        %v1811 = vsub.f32 %v361, %v1810
        %1812 = vmatprep.subr.mxu0 %v1811
        %v1813 = vand.u32 %v360, 4294901760
        %v1814 = vsub.f32 %v360, %v1813
        %1815 = vmatpush1.msra.mxu0 %v1814
        %v1816 = vand.u32 %v363, 4294901760
        %v1817 = vsub.f32 %v363, %v1816
        %1818 = vmatprep.subr.mxu0 %v1817
        %v1819 = vand.u32 %v362, 4294901760
        %v1820 = vsub.f32 %v362, %v1819
        %1821 = vmatpush1.msra.mxu0 %v1820
        %v1822 = vand.u32 %v365, 4294901760
        %v1823 = vsub.f32 %v365, %v1822
        %1824 = vmatprep.subr.mxu0 %v1823
        %v1825 = vand.u32 %v364, 4294901760
        %v1826 = vsub.f32 %v364, %v1825
        %1827 = vmatpush1.msra.mxu0 %v1826
        %v1828 = vand.u32 %v367, 4294901760
        %v1829 = vsub.f32 %v367, %v1828
        %1830 = vmatprep.subr.mxu0 %v1829
        %v1831 = vand.u32 %v366, 4294901760
        %v1832 = vsub.f32 %v366, %v1831
        %1833 = vmatpush1.msra.mxu0 %v1832
        %v1834 = vand.u32 %v369, 4294901760
        %v1835 = vsub.f32 %v369, %v1834
        %1836 = vmatprep.subr.mxu0 %v1835
        %v1837 = vand.u32 %v368, 4294901760
        %v1838 = vsub.f32 %v368, %v1837
        %1839 = vmatpush1.msra.mxu0 %v1838
        %v1840 = vand.u32 %v371, 4294901760
        %v1841 = vsub.f32 %v371, %v1840
        %1842 = vmatprep.subr.mxu0 %v1841
        %v1843 = vand.u32 %v370, 4294901760
        %v1844 = vsub.f32 %v370, %v1843
        %1845 = vmatpush1.msra.mxu0 %v1844
        %v1846 = vand.u32 %v373, 4294901760
        %v1847 = vsub.f32 %v373, %v1846
        %1848 = vmatprep.subr.mxu0 %v1847
        %v1849 = vand.u32 %v372, 4294901760
        %v1850 = vsub.f32 %v372, %v1849
        %1851 = vmatpush1.msra.mxu0 %v1850
        %v1852 = vand.u32 %v375, 4294901760
        %v1853 = vsub.f32 %v375, %v1852
        %1854 = vmatprep.subr.mxu0 %v1853
        %v1855 = vand.u32 %v374, 4294901760
        %v1856 = vsub.f32 %v374, %v1855
        %1857 = vmatpush1.msra.mxu0 %v1856
        %v1858 = vand.u32 %v377, 4294901760
        %v1859 = vsub.f32 %v377, %v1858
        %1860 = vmatprep.subr.mxu0 %v1859
        %v1861 = vand.u32 %v376, 4294901760
        %v1862 = vsub.f32 %v376, %v1861
        %1863 = vmatpush1.msra.mxu0 %v1862
        %v1864 = vand.u32 %v251, 4294901760
        %v1865 = vsub.f32 %v251, %v1864
        %1866 = vmatprep.mubr.f32.mxu0 %v1865
        %v1867 = vand.u32 %v250, 4294901760
        %v1868 = vsub.f32 %v250, %v1867
        %1869 = vmatmul.mubr.f32.gmra.mrb[0].mxu0 %v1868
        %v1870 = vpop.f32.mrb[0].mxu0
        %v1871 = vadd.f32 %v1420, %v1870
        %v1872 = vpop.f32.mrb[0].mxu0
        %v1873 = vadd.f32 %v1422, %v1872
        %v1874 = vand.u32 %v253, 4294901760
        %v1875 = vsub.f32 %v253, %v1874
        %1876 = vmatprep.mubr.f32.mxu0 %v1875
        %v1877 = vand.u32 %v252, 4294901760
        %v1878 = vsub.f32 %v252, %v1877
        %1879 = vmatmul.mubr.f32.gmra.mrb[0].mxu0 %v1878
        %v1880 = vpop.f32.mrb[0].mxu0
        %v1881 = vadd.f32 %v1428, %v1880
        %v1882 = vpop.f32.mrb[0].mxu0
        %v1883 = vadd.f32 %v1430, %v1882
        %v1884 = vand.u32 %v255, 4294901760
        %v1885 = vsub.f32 %v255, %v1884
        %1886 = vmatprep.mubr.f32.mxu0 %v1885
        %v1887 = vand.u32 %v254, 4294901760
        %v1888 = vsub.f32 %v254, %v1887
        %1889 = vmatmul.mubr.f32.gmra.mrb[0].mxu0 %v1888
        %v1890 = vpop.f32.mrb[0].mxu0
        %v1891 = vadd.f32 %v1436, %v1890
        %v1892 = vpop.f32.mrb[0].mxu0
        %v1893 = vadd.f32 %v1438, %v1892
        %v1894 = vand.u32 %v257, 4294901760
        %v1895 = vsub.f32 %v257, %v1894
        %1896 = vmatprep.mubr.f32.mxu0 %v1895
        %v1897 = vand.u32 %v256, 4294901760
        %v1898 = vsub.f32 %v256, %v1897
        %1899 = vmatmul.mubr.f32.gmra.mrb[0].mxu0 %v1898
        %v1900 = vpop.f32.mrb[0].mxu0
        %v1901 = vadd.f32 %v1444, %v1900
        %v1902 = vpop.f32.mrb[0].mxu0
        %v1903 = vadd.f32 %v1446, %v1902
        %v1904 = vand.u32 %v259, 4294901760
        %v1905 = vsub.f32 %v259, %v1904
        %1906 = vmatprep.mubr.f32.mxu0 %v1905
        %v1907 = vand.u32 %v258, 4294901760
        %v1908 = vsub.f32 %v258, %v1907
        %1909 = vmatmul.mubr.f32.gmra.mrb[0].mxu0 %v1908
        %v1910 = vpop.f32.mrb[0].mxu0
        %v1911 = vadd.f32 %v1452, %v1910
        %v1912 = vpop.f32.mrb[0].mxu0
        %v1913 = vadd.f32 %v1454, %v1912
        %v1914 = vand.u32 %v261, 4294901760
        %v1915 = vsub.f32 %v261, %v1914
        %1916 = vmatprep.mubr.f32.mxu0 %v1915
        %v1917 = vand.u32 %v260, 4294901760
        %v1918 = vsub.f32 %v260, %v1917
        %1919 = vmatmul.mubr.f32.gmra.mrb[0].mxu0 %v1918
        %v1920 = vpop.f32.mrb[0].mxu0
        %v1921 = vadd.f32 %v1460, %v1920
        %v1922 = vpop.f32.mrb[0].mxu0
        %v1923 = vadd.f32 %v1462, %v1922
        %v1924 = vand.u32 %v263, 4294901760
        %v1925 = vsub.f32 %v263, %v1924
        %1926 = vmatprep.mubr.f32.mxu0 %v1925
        %v1927 = vand.u32 %v262, 4294901760
        %v1928 = vsub.f32 %v262, %v1927
        %1929 = vmatmul.mubr.f32.gmra.mrb[0].mxu0 %v1928
        %v1930 = vpop.f32.mrb[0].mxu0
        %v1931 = vadd.f32 %v1468, %v1930
        %v1932 = vpop.f32.mrb[0].mxu0
        %v1933 = vadd.f32 %v1470, %v1932
        %v1934 = vand.u32 %v265, 4294901760
        %v1935 = vsub.f32 %v265, %v1934
        %1936 = vmatprep.mubr.f32.mxu0 %v1935
        %v1937 = vand.u32 %v264, 4294901760
        %v1938 = vsub.f32 %v264, %v1937
        %1939 = vmatmul.mubr.f32.gmra.mrb[0].mxu0 %v1938
        %v1940 = vpop.f32.mrb[0].mxu0
        %v1941 = vadd.f32 %v1476, %v1940
        %v1942 = vpop.f32.mrb[0].mxu0
        %v1943 = vadd.f32 %v1478, %v1942
        %v1944 = vand.u32 %v267, 4294901760
        %v1945 = vsub.f32 %v267, %v1944
        %1946 = vmatprep.mubr.f32.mxu0 %v1945
        %v1947 = vand.u32 %v266, 4294901760
        %v1948 = vsub.f32 %v266, %v1947
        %1949 = vmatmul.mubr.f32.gmra.mrb[0].mxu0 %v1948
        %v1950 = vpop.f32.mrb[0].mxu0
        %v1951 = vadd.f32 %v1484, %v1950
        %v1952 = vpop.f32.mrb[0].mxu0
        %v1953 = vadd.f32 %v1486, %v1952
        %v1954 = vand.u32 %v269, 4294901760
        %v1955 = vsub.f32 %v269, %v1954
        %1956 = vmatprep.mubr.f32.mxu0 %v1955
        %v1957 = vand.u32 %v268, 4294901760
        %v1958 = vsub.f32 %v268, %v1957
        %1959 = vmatmul.mubr.f32.gmra.mrb[0].mxu0 %v1958
        %v1960 = vpop.f32.mrb[0].mxu0
        %v1961 = vadd.f32 %v1492, %v1960
        %v1962 = vpop.f32.mrb[0].mxu0
        %v1963 = vadd.f32 %v1494, %v1962
        %v1964 = vand.u32 %v271, 4294901760
        %v1965 = vsub.f32 %v271, %v1964
        %1966 = vmatprep.mubr.f32.mxu0 %v1965
        %v1967 = vand.u32 %v270, 4294901760
        %v1968 = vsub.f32 %v270, %v1967
        %1969 = vmatmul.mubr.f32.gmra.mrb[0].mxu0 %v1968
        %v1970 = vpop.f32.mrb[0].mxu0
        %v1971 = vadd.f32 %v1500, %v1970
        %v1972 = vpop.f32.mrb[0].mxu0
        %v1973 = vadd.f32 %v1502, %v1972
        %v1974 = vand.u32 %v273, 4294901760
        %v1975 = vsub.f32 %v273, %v1974
        %1976 = vmatprep.mubr.f32.mxu0 %v1975
        %v1977 = vand.u32 %v272, 4294901760
        %v1978 = vsub.f32 %v272, %v1977
        %1979 = vmatmul.mubr.f32.gmra.mrb[0].mxu0 %v1978
        %v1980 = vpop.f32.mrb[0].mxu0
        %v1981 = vadd.f32 %v1508, %v1980
        %v1982 = vpop.f32.mrb[0].mxu0
        %v1983 = vadd.f32 %v1510, %v1982
        %v1984 = vand.u32 %v275, 4294901760
        %v1985 = vsub.f32 %v275, %v1984
        %1986 = vmatprep.mubr.f32.mxu0 %v1985
        %v1987 = vand.u32 %v274, 4294901760
        %v1988 = vsub.f32 %v274, %v1987
        %1989 = vmatmul.mubr.f32.gmra.mrb[0].mxu0 %v1988
        %v1990 = vpop.f32.mrb[0].mxu0
        %v1991 = vadd.f32 %v1516, %v1990
        %v1992 = vpop.f32.mrb[0].mxu0
        %v1993 = vadd.f32 %v1518, %v1992
        %v1994 = vand.u32 %v277, 4294901760
        %v1995 = vsub.f32 %v277, %v1994
        %1996 = vmatprep.mubr.f32.mxu0 %v1995
        %v1997 = vand.u32 %v276, 4294901760
        %v1998 = vsub.f32 %v276, %v1997
        %1999 = vmatmul.mubr.f32.gmra.mrb[0].mxu0 %v1998
        %v2000 = vpop.f32.mrb[0].mxu0
        %v2001 = vadd.f32 %v1524, %v2000
        %v2002 = vpop.f32.mrb[0].mxu0
        %v2003 = vadd.f32 %v1526, %v2002
        %v2004 = vand.u32 %v279, 4294901760
        %v2005 = vsub.f32 %v279, %v2004
        %2006 = vmatprep.mubr.f32.mxu0 %v2005
        %v2007 = vand.u32 %v278, 4294901760
        %v2008 = vsub.f32 %v278, %v2007
        %2009 = vmatmul.mubr.f32.gmra.mrb[0].mxu0 %v2008
        %v2010 = vpop.f32.mrb[0].mxu0
        %v2011 = vadd.f32 %v1532, %v2010
        %v2012 = vpop.f32.mrb[0].mxu0
        %v2013 = vadd.f32 %v1534, %v2012
        %v2014 = vand.u32 %v281, 4294901760
        %v2015 = vsub.f32 %v281, %v2014
        %2016 = vmatprep.mubr.f32.mxu0 %v2015
        %v2017 = vand.u32 %v280, 4294901760
        %v2018 = vsub.f32 %v280, %v2017
        %2019 = vmatmul.mubr.f32.gmra.mrb[0].mxu0 %v2018
        %v2020 = vpop.f32.mrb[0].mxu0
        %v2021 = vadd.f32 %v1540, %v2020
        %v2022 = vpop.f32.mrb[0].mxu0
        %v2023 = vadd.f32 %v1542, %v2022
        %v2024 = vand.u32 %v283, 4294901760
        %v2025 = vsub.f32 %v283, %v2024
        %2026 = vmatprep.mubr.f32.mxu0 %v2025
        %v2027 = vand.u32 %v282, 4294901760
        %v2028 = vsub.f32 %v282, %v2027
        %2029 = vmatmul.mubr.f32.gmra.mrb[0].mxu0 %v2028
        %v2030 = vpop.f32.mrb[0].mxu0
        %v2031 = vadd.f32 %v1548, %v2030
        %v2032 = vpop.f32.mrb[0].mxu0
        %v2033 = vadd.f32 %v1550, %v2032
        %v2034 = vand.u32 %v285, 4294901760
        %v2035 = vsub.f32 %v285, %v2034
        %2036 = vmatprep.mubr.f32.mxu0 %v2035
        %v2037 = vand.u32 %v284, 4294901760
        %v2038 = vsub.f32 %v284, %v2037
        %2039 = vmatmul.mubr.f32.gmra.mrb[0].mxu0 %v2038
        %v2040 = vpop.f32.mrb[0].mxu0
        %v2041 = vadd.f32 %v1556, %v2040
        %v2042 = vpop.f32.mrb[0].mxu0
        %v2043 = vadd.f32 %v1558, %v2042
        %v2044 = vand.u32 %v287, 4294901760
        %v2045 = vsub.f32 %v287, %v2044
        %2046 = vmatprep.mubr.f32.mxu0 %v2045
        %v2047 = vand.u32 %v286, 4294901760
        %v2048 = vsub.f32 %v286, %v2047
        %2049 = vmatmul.mubr.f32.gmra.mrb[0].mxu0 %v2048
        %v2050 = vpop.f32.mrb[0].mxu0
        %v2051 = vadd.f32 %v1564, %v2050
        %v2052 = vpop.f32.mrb[0].mxu0
        %v2053 = vadd.f32 %v1566, %v2052
        %v2054 = vand.u32 %v289, 4294901760
        %v2055 = vsub.f32 %v289, %v2054
        %2056 = vmatprep.mubr.f32.mxu0 %v2055
        %v2057 = vand.u32 %v288, 4294901760
        %v2058 = vsub.f32 %v288, %v2057
        %2059 = vmatmul.mubr.f32.gmra.mrb[0].mxu0 %v2058
        %v2060 = vpop.f32.mrb[0].mxu0
        %v2061 = vadd.f32 %v1572, %v2060
        %v2062 = vpop.f32.mrb[0].mxu0
        %v2063 = vadd.f32 %v1574, %v2062
        %v2064 = vand.u32 %v291, 4294901760
        %v2065 = vsub.f32 %v291, %v2064
        %2066 = vmatprep.mubr.f32.mxu0 %v2065
        %v2067 = vand.u32 %v290, 4294901760
        %v2068 = vsub.f32 %v290, %v2067
        %2069 = vmatmul.mubr.f32.gmra.mrb[0].mxu0 %v2068
        %v2070 = vpop.f32.mrb[0].mxu0
        %v2071 = vadd.f32 %v1580, %v2070
        %v2072 = vpop.f32.mrb[0].mxu0
        %v2073 = vadd.f32 %v1582, %v2072
        %v2074 = vand.u32 %v293, 4294901760
        %v2075 = vsub.f32 %v293, %v2074
        %2076 = vmatprep.mubr.f32.mxu0 %v2075
        %v2077 = vand.u32 %v292, 4294901760
        %v2078 = vsub.f32 %v292, %v2077
        %2079 = vmatmul.mubr.f32.gmra.mrb[0].mxu0 %v2078
        %v2080 = vpop.f32.mrb[0].mxu0
        %v2081 = vadd.f32 %v1588, %v2080
        %v2082 = vpop.f32.mrb[0].mxu0
        %v2083 = vadd.f32 %v1590, %v2082
        %v2084 = vand.u32 %v295, 4294901760
        %v2085 = vsub.f32 %v295, %v2084
        %2086 = vmatprep.mubr.f32.mxu0 %v2085
        %v2087 = vand.u32 %v294, 4294901760
        %v2088 = vsub.f32 %v294, %v2087
        %2089 = vmatmul.mubr.f32.gmra.mrb[0].mxu0 %v2088
        %v2090 = vpop.f32.mrb[0].mxu0
        %v2091 = vadd.f32 %v1596, %v2090
        %v2092 = vpop.f32.mrb[0].mxu0
        %v2093 = vadd.f32 %v1598, %v2092
        %v2094 = vand.u32 %v297, 4294901760
        %v2095 = vsub.f32 %v297, %v2094
        %2096 = vmatprep.mubr.f32.mxu0 %v2095
        %v2097 = vand.u32 %v296, 4294901760
        %v2098 = vsub.f32 %v296, %v2097
        %2099 = vmatmul.mubr.f32.gmra.mrb[0].mxu0 %v2098
        %v2100 = vpop.f32.mrb[0].mxu0
        %v2101 = vadd.f32 %v1604, %v2100
        %v2102 = vpop.f32.mrb[0].mxu0
        %v2103 = vadd.f32 %v1606, %v2102
        %v2104 = vand.u32 %v299, 4294901760
        %v2105 = vsub.f32 %v299, %v2104
        %2106 = vmatprep.mubr.f32.mxu0 %v2105
        %v2107 = vand.u32 %v298, 4294901760
        %v2108 = vsub.f32 %v298, %v2107
        %2109 = vmatmul.mubr.f32.gmra.mrb[0].mxu0 %v2108
        %v2110 = vpop.f32.mrb[0].mxu0
        %v2111 = vadd.f32 %v1612, %v2110
        %v2112 = vpop.f32.mrb[0].mxu0
        %v2113 = vadd.f32 %v1614, %v2112
        %v2114 = vand.u32 %v301, 4294901760
        %v2115 = vsub.f32 %v301, %v2114
        %2116 = vmatprep.mubr.f32.mxu0 %v2115
        %v2117 = vand.u32 %v300, 4294901760
        %v2118 = vsub.f32 %v300, %v2117
        %2119 = vmatmul.mubr.f32.gmra.mrb[0].mxu0 %v2118
        %v2120 = vpop.f32.mrb[0].mxu0
        %v2121 = vadd.f32 %v1620, %v2120
        %v2122 = vpop.f32.mrb[0].mxu0
        %v2123 = vadd.f32 %v1622, %v2122
        %v2124 = vand.u32 %v303, 4294901760
        %v2125 = vsub.f32 %v303, %v2124
        %2126 = vmatprep.mubr.f32.mxu0 %v2125
        %v2127 = vand.u32 %v302, 4294901760
        %v2128 = vsub.f32 %v302, %v2127
        %2129 = vmatmul.mubr.f32.gmra.mrb[0].mxu0 %v2128
        %v2130 = vpop.f32.mrb[0].mxu0
        %v2131 = vadd.f32 %v1628, %v2130
        %v2132 = vpop.f32.mrb[0].mxu0
        %v2133 = vadd.f32 %v1630, %v2132
        %v2134 = vand.u32 %v305, 4294901760
        %v2135 = vsub.f32 %v305, %v2134
        %2136 = vmatprep.mubr.f32.mxu0 %v2135
        %v2137 = vand.u32 %v304, 4294901760
        %v2138 = vsub.f32 %v304, %v2137
        %2139 = vmatmul.mubr.f32.gmra.mrb[0].mxu0 %v2138
        %v2140 = vpop.f32.mrb[0].mxu0
        %v2141 = vadd.f32 %v1636, %v2140
        %v2142 = vpop.f32.mrb[0].mxu0
        %v2143 = vadd.f32 %v1638, %v2142
        %v2144 = vand.u32 %v307, 4294901760
        %v2145 = vsub.f32 %v307, %v2144
        %2146 = vmatprep.mubr.f32.mxu0 %v2145
        %v2147 = vand.u32 %v306, 4294901760
        %v2148 = vsub.f32 %v306, %v2147
        %2149 = vmatmul.mubr.f32.gmra.mrb[0].mxu0 %v2148
        %v2150 = vpop.f32.mrb[0].mxu0
        %v2151 = vadd.f32 %v1644, %v2150
        %v2152 = vpop.f32.mrb[0].mxu0
        %v2153 = vadd.f32 %v1646, %v2152
        %v2154 = vand.u32 %v309, 4294901760
        %v2155 = vsub.f32 %v309, %v2154
        %2156 = vmatprep.mubr.f32.mxu0 %v2155
        %v2157 = vand.u32 %v308, 4294901760
        %v2158 = vsub.f32 %v308, %v2157
        %2159 = vmatmul.mubr.f32.gmra.mrb[0].mxu0 %v2158
        %v2160 = vpop.f32.mrb[0].mxu0
        %v2161 = vadd.f32 %v1652, %v2160
        %v2162 = vpop.f32.mrb[0].mxu0
        %v2163 = vadd.f32 %v1654, %v2162
        %v2164 = vand.u32 %v311, 4294901760
        %v2165 = vsub.f32 %v311, %v2164
        %2166 = vmatprep.mubr.f32.mxu0 %v2165
        %v2167 = vand.u32 %v310, 4294901760
        %v2168 = vsub.f32 %v310, %v2167
        %2169 = vmatmul.mubr.f32.gmra.mrb[0].mxu0 %v2168
        %v2170 = vpop.f32.mrb[0].mxu0
        %v2171 = vadd.f32 %v1660, %v2170
        %v2172 = vpop.f32.mrb[0].mxu0
        %v2173 = vadd.f32 %v1662, %v2172
        %v2174 = vand.u32 %v313, 4294901760
        %v2175 = vsub.f32 %v313, %v2174
        %2176 = vmatprep.mubr.f32.mxu0 %v2175
        %v2177 = vand.u32 %v312, 4294901760
        %v2178 = vsub.f32 %v312, %v2177
        %2179 = vmatmul.mubr.f32.gmra.mrb[0].mxu0 %v2178
        %v2180 = vpop.f32.mrb[0].mxu0
        %v2181 = vadd.f32 %v1668, %v2180
        %v2182 = vpop.f32.mrb[0].mxu0
        %v2183 = vadd.f32 %v1670, %v2182
        %2184 = vdwg.mxu0
        %v2185 = vand.u32 %v315, 4294901760
        %2186 = vmatprep.subr.mxu0 %v2185
        %v2187 = vand.u32 %v314, 4294901760
        %2188 = vmatpush1.msra.mxu0 %v2187
        %v2189 = vand.u32 %v317, 4294901760
        %2190 = vmatprep.subr.mxu0 %v2189
        %v2191 = vand.u32 %v316, 4294901760
        %2192 = vmatpush1.msra.mxu0 %v2191
        %v2193 = vand.u32 %v319, 4294901760
        %2194 = vmatprep.subr.mxu0 %v2193
        %v2195 = vand.u32 %v318, 4294901760
        %2196 = vmatpush1.msra.mxu0 %v2195
        %v2197 = vand.u32 %v321, 4294901760
        %2198 = vmatprep.subr.mxu0 %v2197
        %v2199 = vand.u32 %v320, 4294901760
        %2200 = vmatpush1.msra.mxu0 %v2199
        %v2201 = vand.u32 %v323, 4294901760
        %2202 = vmatprep.subr.mxu0 %v2201
        %v2203 = vand.u32 %v322, 4294901760
        %2204 = vmatpush1.msra.mxu0 %v2203
        %v2205 = vand.u32 %v325, 4294901760
        %2206 = vmatprep.subr.mxu0 %v2205
        %v2207 = vand.u32 %v324, 4294901760
        %2208 = vmatpush1.msra.mxu0 %v2207
        %v2209 = vand.u32 %v327, 4294901760
        %2210 = vmatprep.subr.mxu0 %v2209
        %v2211 = vand.u32 %v326, 4294901760
        %2212 = vmatpush1.msra.mxu0 %v2211
        %v2213 = vand.u32 %v329, 4294901760
        %2214 = vmatprep.subr.mxu0 %v2213
        %v2215 = vand.u32 %v328, 4294901760
        %2216 = vmatpush1.msra.mxu0 %v2215
        %v2217 = vand.u32 %v331, 4294901760
        %2218 = vmatprep.subr.mxu0 %v2217
        %v2219 = vand.u32 %v330, 4294901760
        %2220 = vmatpush1.msra.mxu0 %v2219
        %v2221 = vand.u32 %v333, 4294901760
        %2222 = vmatprep.subr.mxu0 %v2221
        %v2223 = vand.u32 %v332, 4294901760
        %2224 = vmatpush1.msra.mxu0 %v2223
        %v2225 = vand.u32 %v335, 4294901760
        %2226 = vmatprep.subr.mxu0 %v2225
        %v2227 = vand.u32 %v334, 4294901760
        %2228 = vmatpush1.msra.mxu0 %v2227
        %v2229 = vand.u32 %v337, 4294901760
        %2230 = vmatprep.subr.mxu0 %v2229
        %v2231 = vand.u32 %v336, 4294901760
        %2232 = vmatpush1.msra.mxu0 %v2231
        %v2233 = vand.u32 %v339, 4294901760
        %2234 = vmatprep.subr.mxu0 %v2233
        %v2235 = vand.u32 %v338, 4294901760
        %2236 = vmatpush1.msra.mxu0 %v2235
        %v2237 = vand.u32 %v341, 4294901760
        %2238 = vmatprep.subr.mxu0 %v2237
        %v2239 = vand.u32 %v340, 4294901760
        %2240 = vmatpush1.msra.mxu0 %v2239
        %v2241 = vand.u32 %v343, 4294901760
        %2242 = vmatprep.subr.mxu0 %v2241
        %v2243 = vand.u32 %v342, 4294901760
        %2244 = vmatpush1.msra.mxu0 %v2243
        %v2245 = vand.u32 %v345, 4294901760
        %2246 = vmatprep.subr.mxu0 %v2245
        %v2247 = vand.u32 %v344, 4294901760
        %2248 = vmatpush1.msra.mxu0 %v2247
        %v2249 = vand.u32 %v347, 4294901760
        %2250 = vmatprep.subr.mxu0 %v2249
        %v2251 = vand.u32 %v346, 4294901760
        %2252 = vmatpush1.msra.mxu0 %v2251
        %v2253 = vand.u32 %v349, 4294901760
        %2254 = vmatprep.subr.mxu0 %v2253
        %v2255 = vand.u32 %v348, 4294901760
        %2256 = vmatpush1.msra.mxu0 %v2255
        %v2257 = vand.u32 %v351, 4294901760
        %2258 = vmatprep.subr.mxu0 %v2257
        %v2259 = vand.u32 %v350, 4294901760
        %2260 = vmatpush1.msra.mxu0 %v2259
        %v2261 = vand.u32 %v353, 4294901760
        %2262 = vmatprep.subr.mxu0 %v2261
        %v2263 = vand.u32 %v352, 4294901760
        %2264 = vmatpush1.msra.mxu0 %v2263
        %v2265 = vand.u32 %v355, 4294901760
        %2266 = vmatprep.subr.mxu0 %v2265
        %v2267 = vand.u32 %v354, 4294901760
        %2268 = vmatpush1.msra.mxu0 %v2267
        %v2269 = vand.u32 %v357, 4294901760
        %2270 = vmatprep.subr.mxu0 %v2269
        %v2271 = vand.u32 %v356, 4294901760
        %2272 = vmatpush1.msra.mxu0 %v2271
        %v2273 = vand.u32 %v359, 4294901760
        %2274 = vmatprep.subr.mxu0 %v2273
        %v2275 = vand.u32 %v358, 4294901760
        %2276 = vmatpush1.msra.mxu0 %v2275
        %v2277 = vand.u32 %v361, 4294901760
        %2278 = vmatprep.subr.mxu0 %v2277
        %v2279 = vand.u32 %v360, 4294901760
        %2280 = vmatpush1.msra.mxu0 %v2279
        %v2281 = vand.u32 %v363, 4294901760
        %2282 = vmatprep.subr.mxu0 %v2281
        %v2283 = vand.u32 %v362, 4294901760
        %2284 = vmatpush1.msra.mxu0 %v2283
        %v2285 = vand.u32 %v365, 4294901760
        %2286 = vmatprep.subr.mxu0 %v2285
        %v2287 = vand.u32 %v364, 4294901760
        %2288 = vmatpush1.msra.mxu0 %v2287
        %v2289 = vand.u32 %v367, 4294901760
        %2290 = vmatprep.subr.mxu0 %v2289
        %v2291 = vand.u32 %v366, 4294901760
        %2292 = vmatpush1.msra.mxu0 %v2291
        %v2293 = vand.u32 %v369, 4294901760
        %2294 = vmatprep.subr.mxu0 %v2293
        %v2295 = vand.u32 %v368, 4294901760
        %2296 = vmatpush1.msra.mxu0 %v2295
        %v2297 = vand.u32 %v371, 4294901760
        %2298 = vmatprep.subr.mxu0 %v2297
        %v2299 = vand.u32 %v370, 4294901760
        %2300 = vmatpush1.msra.mxu0 %v2299
        %v2301 = vand.u32 %v373, 4294901760
        %2302 = vmatprep.subr.mxu0 %v2301
        %v2303 = vand.u32 %v372, 4294901760
        %2304 = vmatpush1.msra.mxu0 %v2303
        %v2305 = vand.u32 %v375, 4294901760
        %2306 = vmatprep.subr.mxu0 %v2305
        %v2307 = vand.u32 %v374, 4294901760
        %2308 = vmatpush1.msra.mxu0 %v2307
        %v2309 = vand.u32 %v377, 4294901760
        %2310 = vmatprep.subr.mxu0 %v2309
        %v2311 = vand.u32 %v376, 4294901760
        %2312 = vmatpush1.msra.mxu0 %v2311
        %v2313 = vand.u32 %v251, 4294901760
        %v2314 = vsub.f32 %v251, %v2313
        %v2315 = vand.u32 %v2314, 4294901760
        %2316 = vmatprep.mubr.f32.mxu0 %v2315
        %v2317 = vand.u32 %v250, 4294901760
        %v2318 = vsub.f32 %v250, %v2317
        %v2319 = vand.u32 %v2318, 4294901760
        %2320 = vmatmul.mubr.f32.gmra.mrb[0].mxu0 %v2319
        %v2321 = vpop.f32.mrb[0].mxu0
        %v2322 = vadd.f32 %v1871, %v2321
        %v2323 = vpop.f32.mrb[0].mxu0
        %v2324 = vadd.f32 %v1873, %v2323
        %v2325 = vand.u32 %v253, 4294901760
        %v2326 = vsub.f32 %v253, %v2325
        %v2327 = vand.u32 %v2326, 4294901760
        %2328 = vmatprep.mubr.f32.mxu0 %v2327
        %v2329 = vand.u32 %v252, 4294901760
        %v2330 = vsub.f32 %v252, %v2329
        %v2331 = vand.u32 %v2330, 4294901760
        %2332 = vmatmul.mubr.f32.gmra.mrb[0].mxu0 %v2331
        %v2333 = vpop.f32.mrb[0].mxu0
        %v2334 = vadd.f32 %v1881, %v2333
        %v2335 = vpop.f32.mrb[0].mxu0
        %v2336 = vadd.f32 %v1883, %v2335
        %v2337 = vand.u32 %v255, 4294901760
        %v2338 = vsub.f32 %v255, %v2337
        %v2339 = vand.u32 %v2338, 4294901760
        %2340 = vmatprep.mubr.f32.mxu0 %v2339
        %v2341 = vand.u32 %v254, 4294901760
        %v2342 = vsub.f32 %v254, %v2341
        %v2343 = vand.u32 %v2342, 4294901760
        %2344 = vmatmul.mubr.f32.gmra.mrb[0].mxu0 %v2343
        %v2345 = vpop.f32.mrb[0].mxu0
        %v2346 = vadd.f32 %v1891, %v2345
        %v2347 = vpop.f32.mrb[0].mxu0
        %v2348 = vadd.f32 %v1893, %v2347
        %v2349 = vand.u32 %v257, 4294901760
        %v2350 = vsub.f32 %v257, %v2349
        %v2351 = vand.u32 %v2350, 4294901760
        %2352 = vmatprep.mubr.f32.mxu0 %v2351
        %v2353 = vand.u32 %v256, 4294901760
        %v2354 = vsub.f32 %v256, %v2353
        %v2355 = vand.u32 %v2354, 4294901760
        %2356 = vmatmul.mubr.f32.gmra.mrb[0].mxu0 %v2355
        %v2357 = vpop.f32.mrb[0].mxu0
        %v2358 = vadd.f32 %v1901, %v2357
        %v2359 = vpop.f32.mrb[0].mxu0
        %v2360 = vadd.f32 %v1903, %v2359
        %v2361 = vand.u32 %v259, 4294901760
        %v2362 = vsub.f32 %v259, %v2361
        %v2363 = vand.u32 %v2362, 4294901760
        %2364 = vmatprep.mubr.f32.mxu0 %v2363
        %v2365 = vand.u32 %v258, 4294901760
        %v2366 = vsub.f32 %v258, %v2365
        %v2367 = vand.u32 %v2366, 4294901760
        %2368 = vmatmul.mubr.f32.gmra.mrb[0].mxu0 %v2367
        %v2369 = vpop.f32.mrb[0].mxu0
        %v2370 = vadd.f32 %v1911, %v2369
        %v2371 = vpop.f32.mrb[0].mxu0
        %v2372 = vadd.f32 %v1913, %v2371
        %v2373 = vand.u32 %v261, 4294901760
        %v2374 = vsub.f32 %v261, %v2373
        %v2375 = vand.u32 %v2374, 4294901760
        %2376 = vmatprep.mubr.f32.mxu0 %v2375
        %v2377 = vand.u32 %v260, 4294901760
        %v2378 = vsub.f32 %v260, %v2377
        %v2379 = vand.u32 %v2378, 4294901760
        %2380 = vmatmul.mubr.f32.gmra.mrb[0].mxu0 %v2379
        %v2381 = vpop.f32.mrb[0].mxu0
        %v2382 = vadd.f32 %v1921, %v2381
        %v2383 = vpop.f32.mrb[0].mxu0
        %v2384 = vadd.f32 %v1923, %v2383
        %v2385 = vand.u32 %v263, 4294901760
        %v2386 = vsub.f32 %v263, %v2385
        %v2387 = vand.u32 %v2386, 4294901760
        %2388 = vmatprep.mubr.f32.mxu0 %v2387
        %v2389 = vand.u32 %v262, 4294901760
        %v2390 = vsub.f32 %v262, %v2389
        %v2391 = vand.u32 %v2390, 4294901760
        %2392 = vmatmul.mubr.f32.gmra.mrb[0].mxu0 %v2391
        %v2393 = vpop.f32.mrb[0].mxu0
        %v2394 = vadd.f32 %v1931, %v2393
        %v2395 = vpop.f32.mrb[0].mxu0
        %v2396 = vadd.f32 %v1933, %v2395
        %v2397 = vand.u32 %v265, 4294901760
        %v2398 = vsub.f32 %v265, %v2397
        %v2399 = vand.u32 %v2398, 4294901760
        %2400 = vmatprep.mubr.f32.mxu0 %v2399
        %v2401 = vand.u32 %v264, 4294901760
        %v2402 = vsub.f32 %v264, %v2401
        %v2403 = vand.u32 %v2402, 4294901760
        %2404 = vmatmul.mubr.f32.gmra.mrb[0].mxu0 %v2403
        %v2405 = vpop.f32.mrb[0].mxu0
        %v2406 = vadd.f32 %v1941, %v2405
        %v2407 = vpop.f32.mrb[0].mxu0
        %v2408 = vadd.f32 %v1943, %v2407
        %v2409 = vand.u32 %v267, 4294901760
        %v2410 = vsub.f32 %v267, %v2409
        %v2411 = vand.u32 %v2410, 4294901760
        %2412 = vmatprep.mubr.f32.mxu0 %v2411
        %v2413 = vand.u32 %v266, 4294901760
        %v2414 = vsub.f32 %v266, %v2413
        %v2415 = vand.u32 %v2414, 4294901760
        %2416 = vmatmul.mubr.f32.gmra.mrb[0].mxu0 %v2415
        %v2417 = vpop.f32.mrb[0].mxu0
        %v2418 = vadd.f32 %v1951, %v2417
        %v2419 = vpop.f32.mrb[0].mxu0
        %v2420 = vadd.f32 %v1953, %v2419
        %v2421 = vand.u32 %v269, 4294901760
        %v2422 = vsub.f32 %v269, %v2421
        %v2423 = vand.u32 %v2422, 4294901760
        %2424 = vmatprep.mubr.f32.mxu0 %v2423
        %v2425 = vand.u32 %v268, 4294901760
        %v2426 = vsub.f32 %v268, %v2425
        %v2427 = vand.u32 %v2426, 4294901760
        %2428 = vmatmul.mubr.f32.gmra.mrb[0].mxu0 %v2427
        %v2429 = vpop.f32.mrb[0].mxu0
        %v2430 = vadd.f32 %v1961, %v2429
        %v2431 = vpop.f32.mrb[0].mxu0
        %v2432 = vadd.f32 %v1963, %v2431
        %v2433 = vand.u32 %v271, 4294901760
        %v2434 = vsub.f32 %v271, %v2433
        %v2435 = vand.u32 %v2434, 4294901760
        %2436 = vmatprep.mubr.f32.mxu0 %v2435
        %v2437 = vand.u32 %v270, 4294901760
        %v2438 = vsub.f32 %v270, %v2437
        %v2439 = vand.u32 %v2438, 4294901760
        %2440 = vmatmul.mubr.f32.gmra.mrb[0].mxu0 %v2439
        %v2441 = vpop.f32.mrb[0].mxu0
        %v2442 = vadd.f32 %v1971, %v2441
        %v2443 = vpop.f32.mrb[0].mxu0
        %v2444 = vadd.f32 %v1973, %v2443
        %v2445 = vand.u32 %v273, 4294901760
        %v2446 = vsub.f32 %v273, %v2445
        %v2447 = vand.u32 %v2446, 4294901760
        %2448 = vmatprep.mubr.f32.mxu0 %v2447
        %v2449 = vand.u32 %v272, 4294901760
        %v2450 = vsub.f32 %v272, %v2449
        %v2451 = vand.u32 %v2450, 4294901760
        %2452 = vmatmul.mubr.f32.gmra.mrb[0].mxu0 %v2451
        %v2453 = vpop.f32.mrb[0].mxu0
        %v2454 = vadd.f32 %v1981, %v2453
        %v2455 = vpop.f32.mrb[0].mxu0
        %v2456 = vadd.f32 %v1983, %v2455
        %v2457 = vand.u32 %v275, 4294901760
        %v2458 = vsub.f32 %v275, %v2457
        %v2459 = vand.u32 %v2458, 4294901760
        %2460 = vmatprep.mubr.f32.mxu0 %v2459
        %v2461 = vand.u32 %v274, 4294901760
        %v2462 = vsub.f32 %v274, %v2461
        %v2463 = vand.u32 %v2462, 4294901760
        %2464 = vmatmul.mubr.f32.gmra.mrb[0].mxu0 %v2463
        %v2465 = vpop.f32.mrb[0].mxu0
        %v2466 = vadd.f32 %v1991, %v2465
        %v2467 = vpop.f32.mrb[0].mxu0
        %v2468 = vadd.f32 %v1993, %v2467
        %v2469 = vand.u32 %v277, 4294901760
        %v2470 = vsub.f32 %v277, %v2469
        %v2471 = vand.u32 %v2470, 4294901760
        %2472 = vmatprep.mubr.f32.mxu0 %v2471
        %v2473 = vand.u32 %v276, 4294901760
        %v2474 = vsub.f32 %v276, %v2473
        %v2475 = vand.u32 %v2474, 4294901760
        %2476 = vmatmul.mubr.f32.gmra.mrb[0].mxu0 %v2475
        %v2477 = vpop.f32.mrb[0].mxu0
        %v2478 = vadd.f32 %v2001, %v2477
        %v2479 = vpop.f32.mrb[0].mxu0
        %v2480 = vadd.f32 %v2003, %v2479
        %v2481 = vand.u32 %v279, 4294901760
        %v2482 = vsub.f32 %v279, %v2481
        %v2483 = vand.u32 %v2482, 4294901760
        %2484 = vmatprep.mubr.f32.mxu0 %v2483
        %v2485 = vand.u32 %v278, 4294901760
        %v2486 = vsub.f32 %v278, %v2485
        %v2487 = vand.u32 %v2486, 4294901760
        %2488 = vmatmul.mubr.f32.gmra.mrb[0].mxu0 %v2487
        %v2489 = vpop.f32.mrb[0].mxu0
        %v2490 = vadd.f32 %v2011, %v2489
        %v2491 = vpop.f32.mrb[0].mxu0
        %v2492 = vadd.f32 %v2013, %v2491
        %v2493 = vand.u32 %v281, 4294901760
        %v2494 = vsub.f32 %v281, %v2493
        %v2495 = vand.u32 %v2494, 4294901760
        %2496 = vmatprep.mubr.f32.mxu0 %v2495
        %v2497 = vand.u32 %v280, 4294901760
        %v2498 = vsub.f32 %v280, %v2497
        %v2499 = vand.u32 %v2498, 4294901760
        %2500 = vmatmul.mubr.f32.gmra.mrb[0].mxu0 %v2499
        %v2501 = vpop.f32.mrb[0].mxu0
        %v2502 = vadd.f32 %v2021, %v2501
        %v2503 = vpop.f32.mrb[0].mxu0
        %v2504 = vadd.f32 %v2023, %v2503
        %v2505 = vand.u32 %v283, 4294901760
        %v2506 = vsub.f32 %v283, %v2505
        %v2507 = vand.u32 %v2506, 4294901760
        %2508 = vmatprep.mubr.f32.mxu0 %v2507
        %v2509 = vand.u32 %v282, 4294901760
        %v2510 = vsub.f32 %v282, %v2509
        %v2511 = vand.u32 %v2510, 4294901760
        %2512 = vmatmul.mubr.f32.gmra.mrb[0].mxu0 %v2511
        %v2513 = vpop.f32.mrb[0].mxu0
        %v2514 = vadd.f32 %v2031, %v2513
        %v2515 = vpop.f32.mrb[0].mxu0
        %v2516 = vadd.f32 %v2033, %v2515
        %v2517 = vand.u32 %v285, 4294901760
        %v2518 = vsub.f32 %v285, %v2517
        %v2519 = vand.u32 %v2518, 4294901760
        %2520 = vmatprep.mubr.f32.mxu0 %v2519
        %v2521 = vand.u32 %v284, 4294901760
        %v2522 = vsub.f32 %v284, %v2521
        %v2523 = vand.u32 %v2522, 4294901760
        %2524 = vmatmul.mubr.f32.gmra.mrb[0].mxu0 %v2523
        %v2525 = vpop.f32.mrb[0].mxu0
        %v2526 = vadd.f32 %v2041, %v2525
        %v2527 = vpop.f32.mrb[0].mxu0
        %v2528 = vadd.f32 %v2043, %v2527
        %v2529 = vand.u32 %v287, 4294901760
        %v2530 = vsub.f32 %v287, %v2529
        %v2531 = vand.u32 %v2530, 4294901760
        %2532 = vmatprep.mubr.f32.mxu0 %v2531
        %v2533 = vand.u32 %v286, 4294901760
        %v2534 = vsub.f32 %v286, %v2533
        %v2535 = vand.u32 %v2534, 4294901760
        %2536 = vmatmul.mubr.f32.gmra.mrb[0].mxu0 %v2535
        %v2537 = vpop.f32.mrb[0].mxu0
        %v2538 = vadd.f32 %v2051, %v2537
        %v2539 = vpop.f32.mrb[0].mxu0
        %v2540 = vadd.f32 %v2053, %v2539
        %v2541 = vand.u32 %v289, 4294901760
        %v2542 = vsub.f32 %v289, %v2541
        %v2543 = vand.u32 %v2542, 4294901760
        %2544 = vmatprep.mubr.f32.mxu0 %v2543
        %v2545 = vand.u32 %v288, 4294901760
        %v2546 = vsub.f32 %v288, %v2545
        %v2547 = vand.u32 %v2546, 4294901760
        %2548 = vmatmul.mubr.f32.gmra.mrb[0].mxu0 %v2547
        %v2549 = vpop.f32.mrb[0].mxu0
        %v2550 = vadd.f32 %v2061, %v2549
        %v2551 = vpop.f32.mrb[0].mxu0
        %v2552 = vadd.f32 %v2063, %v2551
        %v2553 = vand.u32 %v291, 4294901760
        %v2554 = vsub.f32 %v291, %v2553
        %v2555 = vand.u32 %v2554, 4294901760
        %2556 = vmatprep.mubr.f32.mxu0 %v2555
        %v2557 = vand.u32 %v290, 4294901760
        %v2558 = vsub.f32 %v290, %v2557
        %v2559 = vand.u32 %v2558, 4294901760
        %2560 = vmatmul.mubr.f32.gmra.mrb[0].mxu0 %v2559
        %v2561 = vpop.f32.mrb[0].mxu0
        %v2562 = vadd.f32 %v2071, %v2561
        %v2563 = vpop.f32.mrb[0].mxu0
        %v2564 = vadd.f32 %v2073, %v2563
        %v2565 = vand.u32 %v293, 4294901760
        %v2566 = vsub.f32 %v293, %v2565
        %v2567 = vand.u32 %v2566, 4294901760
        %2568 = vmatprep.mubr.f32.mxu0 %v2567
        %v2569 = vand.u32 %v292, 4294901760
        %v2570 = vsub.f32 %v292, %v2569
        %v2571 = vand.u32 %v2570, 4294901760
        %2572 = vmatmul.mubr.f32.gmra.mrb[0].mxu0 %v2571
        %v2573 = vpop.f32.mrb[0].mxu0
        %v2574 = vadd.f32 %v2081, %v2573
        %v2575 = vpop.f32.mrb[0].mxu0
        %v2576 = vadd.f32 %v2083, %v2575
        %v2577 = vand.u32 %v295, 4294901760
        %v2578 = vsub.f32 %v295, %v2577
        %v2579 = vand.u32 %v2578, 4294901760
        %2580 = vmatprep.mubr.f32.mxu0 %v2579
        %v2581 = vand.u32 %v294, 4294901760
        %v2582 = vsub.f32 %v294, %v2581
        %v2583 = vand.u32 %v2582, 4294901760
        %2584 = vmatmul.mubr.f32.gmra.mrb[0].mxu0 %v2583
        %v2585 = vpop.f32.mrb[0].mxu0
        %v2586 = vadd.f32 %v2091, %v2585
        %v2587 = vpop.f32.mrb[0].mxu0
        %v2588 = vadd.f32 %v2093, %v2587
        %v2589 = vand.u32 %v297, 4294901760
        %v2590 = vsub.f32 %v297, %v2589
        %v2591 = vand.u32 %v2590, 4294901760
        %2592 = vmatprep.mubr.f32.mxu0 %v2591
        %v2593 = vand.u32 %v296, 4294901760
        %v2594 = vsub.f32 %v296, %v2593
        %v2595 = vand.u32 %v2594, 4294901760
        %2596 = vmatmul.mubr.f32.gmra.mrb[0].mxu0 %v2595
        %v2597 = vpop.f32.mrb[0].mxu0
        %v2598 = vadd.f32 %v2101, %v2597
        %v2599 = vpop.f32.mrb[0].mxu0
        %v2600 = vadd.f32 %v2103, %v2599
        %v2601 = vand.u32 %v299, 4294901760
        %v2602 = vsub.f32 %v299, %v2601
        %v2603 = vand.u32 %v2602, 4294901760
        %2604 = vmatprep.mubr.f32.mxu0 %v2603
        %v2605 = vand.u32 %v298, 4294901760
        %v2606 = vsub.f32 %v298, %v2605
        %v2607 = vand.u32 %v2606, 4294901760
        %2608 = vmatmul.mubr.f32.gmra.mrb[0].mxu0 %v2607
        %v2609 = vpop.f32.mrb[0].mxu0
        %v2610 = vadd.f32 %v2111, %v2609
        %v2611 = vpop.f32.mrb[0].mxu0
        %v2612 = vadd.f32 %v2113, %v2611
        %v2613 = vand.u32 %v301, 4294901760
        %v2614 = vsub.f32 %v301, %v2613
        %v2615 = vand.u32 %v2614, 4294901760
        %2616 = vmatprep.mubr.f32.mxu0 %v2615
        %v2617 = vand.u32 %v300, 4294901760
        %v2618 = vsub.f32 %v300, %v2617
        %v2619 = vand.u32 %v2618, 4294901760
        %2620 = vmatmul.mubr.f32.gmra.mrb[0].mxu0 %v2619
        %v2621 = vpop.f32.mrb[0].mxu0
        %v2622 = vadd.f32 %v2121, %v2621
        %v2623 = vpop.f32.mrb[0].mxu0
        %v2624 = vadd.f32 %v2123, %v2623
        %v2625 = vand.u32 %v303, 4294901760
        %v2626 = vsub.f32 %v303, %v2625
        %v2627 = vand.u32 %v2626, 4294901760
        %2628 = vmatprep.mubr.f32.mxu0 %v2627
        %v2629 = vand.u32 %v302, 4294901760
        %v2630 = vsub.f32 %v302, %v2629
        %v2631 = vand.u32 %v2630, 4294901760
        %2632 = vmatmul.mubr.f32.gmra.mrb[0].mxu0 %v2631
        %v2633 = vpop.f32.mrb[0].mxu0
        %v2634 = vadd.f32 %v2131, %v2633
        %v2635 = vpop.f32.mrb[0].mxu0
        %v2636 = vadd.f32 %v2133, %v2635
        %v2637 = vand.u32 %v305, 4294901760
        %v2638 = vsub.f32 %v305, %v2637
        %v2639 = vand.u32 %v2638, 4294901760
        %2640 = vmatprep.mubr.f32.mxu0 %v2639
        %v2641 = vand.u32 %v304, 4294901760
        %v2642 = vsub.f32 %v304, %v2641
        %v2643 = vand.u32 %v2642, 4294901760
        %2644 = vmatmul.mubr.f32.gmra.mrb[0].mxu0 %v2643
        %v2645 = vpop.f32.mrb[0].mxu0
        %v2646 = vadd.f32 %v2141, %v2645
        %v2647 = vpop.f32.mrb[0].mxu0
        %v2648 = vadd.f32 %v2143, %v2647
        %v2649 = vand.u32 %v307, 4294901760
        %v2650 = vsub.f32 %v307, %v2649
        %v2651 = vand.u32 %v2650, 4294901760
        %2652 = vmatprep.mubr.f32.mxu0 %v2651
        %v2653 = vand.u32 %v306, 4294901760
        %v2654 = vsub.f32 %v306, %v2653
        %v2655 = vand.u32 %v2654, 4294901760
        %2656 = vmatmul.mubr.f32.gmra.mrb[0].mxu0 %v2655
        %v2657 = vpop.f32.mrb[0].mxu0
        %v2658 = vadd.f32 %v2151, %v2657
        %v2659 = vpop.f32.mrb[0].mxu0
        %v2660 = vadd.f32 %v2153, %v2659
        %v2661 = vand.u32 %v309, 4294901760
        %v2662 = vsub.f32 %v309, %v2661
        %v2663 = vand.u32 %v2662, 4294901760
        %2664 = vmatprep.mubr.f32.mxu0 %v2663
        %v2665 = vand.u32 %v308, 4294901760
        %v2666 = vsub.f32 %v308, %v2665
        %v2667 = vand.u32 %v2666, 4294901760
        %2668 = vmatmul.mubr.f32.gmra.mrb[0].mxu0 %v2667
        %v2669 = vpop.f32.mrb[0].mxu0
        %v2670 = vadd.f32 %v2161, %v2669
        %v2671 = vpop.f32.mrb[0].mxu0
        %v2672 = vadd.f32 %v2163, %v2671
        %v2673 = vand.u32 %v311, 4294901760
        %v2674 = vsub.f32 %v311, %v2673
        %v2675 = vand.u32 %v2674, 4294901760
        %2676 = vmatprep.mubr.f32.mxu0 %v2675
        %v2677 = vand.u32 %v310, 4294901760
        %v2678 = vsub.f32 %v310, %v2677
        %v2679 = vand.u32 %v2678, 4294901760
        %2680 = vmatmul.mubr.f32.gmra.mrb[0].mxu0 %v2679
        %v2681 = vpop.f32.mrb[0].mxu0
        %v2682 = vadd.f32 %v2171, %v2681
        %v2683 = vpop.f32.mrb[0].mxu0
        %v2684 = vadd.f32 %v2173, %v2683
        %v2685 = vand.u32 %v313, 4294901760
        %v2686 = vsub.f32 %v313, %v2685
        %v2687 = vand.u32 %v2686, 4294901760
        %2688 = vmatprep.mubr.f32.mxu0 %v2687
        %v2689 = vand.u32 %v312, 4294901760
        %v2690 = vsub.f32 %v312, %v2689
        %v2691 = vand.u32 %v2690, 4294901760
        %2692 = vmatmul.mubr.f32.gmra.mrb[0].mxu0 %v2691
        %v2693 = vpop.f32.mrb[0].mxu0
        %v2694 = vadd.f32 %v2181, %v2693
        %v2695 = vpop.f32.mrb[0].mxu0
        %v2696 = vadd.f32 %v2183, %v2695
        %2697 = vdwg.mxu0
        %v2698 = vand.u32 %v315, 4294901760
        %v2699 = vsub.f32 %v315, %v2698
        %v2700 = vand.u32 %v2699, 4294901760
        %2701 = vmatprep.subr.mxu0 %v2700
        %v2702 = vand.u32 %v314, 4294901760
        %v2703 = vsub.f32 %v314, %v2702
        %v2704 = vand.u32 %v2703, 4294901760
        %2705 = vmatpush1.msra.mxu0 %v2704
        %v2706 = vand.u32 %v317, 4294901760
        %v2707 = vsub.f32 %v317, %v2706
        %v2708 = vand.u32 %v2707, 4294901760
        %2709 = vmatprep.subr.mxu0 %v2708
        %v2710 = vand.u32 %v316, 4294901760
        %v2711 = vsub.f32 %v316, %v2710
        %v2712 = vand.u32 %v2711, 4294901760
        %2713 = vmatpush1.msra.mxu0 %v2712
        %v2714 = vand.u32 %v319, 4294901760
        %v2715 = vsub.f32 %v319, %v2714
        %v2716 = vand.u32 %v2715, 4294901760
        %2717 = vmatprep.subr.mxu0 %v2716
        %v2718 = vand.u32 %v318, 4294901760
        %v2719 = vsub.f32 %v318, %v2718
        %v2720 = vand.u32 %v2719, 4294901760
        %2721 = vmatpush1.msra.mxu0 %v2720
        %v2722 = vand.u32 %v321, 4294901760
        %v2723 = vsub.f32 %v321, %v2722
        %v2724 = vand.u32 %v2723, 4294901760
        %2725 = vmatprep.subr.mxu0 %v2724
        %v2726 = vand.u32 %v320, 4294901760
        %v2727 = vsub.f32 %v320, %v2726
        %v2728 = vand.u32 %v2727, 4294901760
        %2729 = vmatpush1.msra.mxu0 %v2728
        %v2730 = vand.u32 %v323, 4294901760
        %v2731 = vsub.f32 %v323, %v2730
        %v2732 = vand.u32 %v2731, 4294901760
        %2733 = vmatprep.subr.mxu0 %v2732
        %v2734 = vand.u32 %v322, 4294901760
        %v2735 = vsub.f32 %v322, %v2734
        %v2736 = vand.u32 %v2735, 4294901760
        %2737 = vmatpush1.msra.mxu0 %v2736
        %v2738 = vand.u32 %v325, 4294901760
        %v2739 = vsub.f32 %v325, %v2738
        %v2740 = vand.u32 %v2739, 4294901760
        %2741 = vmatprep.subr.mxu0 %v2740
        %v2742 = vand.u32 %v324, 4294901760
        %v2743 = vsub.f32 %v324, %v2742
        %v2744 = vand.u32 %v2743, 4294901760
        %2745 = vmatpush1.msra.mxu0 %v2744
        %v2746 = vand.u32 %v327, 4294901760
        %v2747 = vsub.f32 %v327, %v2746
        %v2748 = vand.u32 %v2747, 4294901760
        %2749 = vmatprep.subr.mxu0 %v2748
        %v2750 = vand.u32 %v326, 4294901760
        %v2751 = vsub.f32 %v326, %v2750
        %v2752 = vand.u32 %v2751, 4294901760
        %2753 = vmatpush1.msra.mxu0 %v2752
        %v2754 = vand.u32 %v329, 4294901760
        %v2755 = vsub.f32 %v329, %v2754
        %v2756 = vand.u32 %v2755, 4294901760
        %2757 = vmatprep.subr.mxu0 %v2756
        %v2758 = vand.u32 %v328, 4294901760
        %v2759 = vsub.f32 %v328, %v2758
        %v2760 = vand.u32 %v2759, 4294901760
        %2761 = vmatpush1.msra.mxu0 %v2760
        %v2762 = vand.u32 %v331, 4294901760
        %v2763 = vsub.f32 %v331, %v2762
        %v2764 = vand.u32 %v2763, 4294901760
        %2765 = vmatprep.subr.mxu0 %v2764
        %v2766 = vand.u32 %v330, 4294901760
        %v2767 = vsub.f32 %v330, %v2766
        %v2768 = vand.u32 %v2767, 4294901760
        %2769 = vmatpush1.msra.mxu0 %v2768
        %v2770 = vand.u32 %v333, 4294901760
        %v2771 = vsub.f32 %v333, %v2770
        %v2772 = vand.u32 %v2771, 4294901760
        %2773 = vmatprep.subr.mxu0 %v2772
        %v2774 = vand.u32 %v332, 4294901760
        %v2775 = vsub.f32 %v332, %v2774
        %v2776 = vand.u32 %v2775, 4294901760
        %2777 = vmatpush1.msra.mxu0 %v2776
        %v2778 = vand.u32 %v335, 4294901760
        %v2779 = vsub.f32 %v335, %v2778
        %v2780 = vand.u32 %v2779, 4294901760
        %2781 = vmatprep.subr.mxu0 %v2780
        %v2782 = vand.u32 %v334, 4294901760
        %v2783 = vsub.f32 %v334, %v2782
        %v2784 = vand.u32 %v2783, 4294901760
        %2785 = vmatpush1.msra.mxu0 %v2784
        %v2786 = vand.u32 %v337, 4294901760
        %v2787 = vsub.f32 %v337, %v2786
        %v2788 = vand.u32 %v2787, 4294901760
        %2789 = vmatprep.subr.mxu0 %v2788
        %v2790 = vand.u32 %v336, 4294901760
        %v2791 = vsub.f32 %v336, %v2790
        %v2792 = vand.u32 %v2791, 4294901760
        %2793 = vmatpush1.msra.mxu0 %v2792
        %v2794 = vand.u32 %v339, 4294901760
        %v2795 = vsub.f32 %v339, %v2794
        %v2796 = vand.u32 %v2795, 4294901760
        %2797 = vmatprep.subr.mxu0 %v2796
        %v2798 = vand.u32 %v338, 4294901760
        %v2799 = vsub.f32 %v338, %v2798
        %v2800 = vand.u32 %v2799, 4294901760
        %2801 = vmatpush1.msra.mxu0 %v2800
        %v2802 = vand.u32 %v341, 4294901760
        %v2803 = vsub.f32 %v341, %v2802
        %v2804 = vand.u32 %v2803, 4294901760
        %2805 = vmatprep.subr.mxu0 %v2804
        %v2806 = vand.u32 %v340, 4294901760
        %v2807 = vsub.f32 %v340, %v2806
        %v2808 = vand.u32 %v2807, 4294901760
        %2809 = vmatpush1.msra.mxu0 %v2808
        %v2810 = vand.u32 %v343, 4294901760
        %v2811 = vsub.f32 %v343, %v2810
        %v2812 = vand.u32 %v2811, 4294901760
        %2813 = vmatprep.subr.mxu0 %v2812
        %v2814 = vand.u32 %v342, 4294901760
        %v2815 = vsub.f32 %v342, %v2814
        %v2816 = vand.u32 %v2815, 4294901760
        %2817 = vmatpush1.msra.mxu0 %v2816
        %v2818 = vand.u32 %v345, 4294901760
        %v2819 = vsub.f32 %v345, %v2818
        %v2820 = vand.u32 %v2819, 4294901760
        %2821 = vmatprep.subr.mxu0 %v2820
        %v2822 = vand.u32 %v344, 4294901760
        %v2823 = vsub.f32 %v344, %v2822
        %v2824 = vand.u32 %v2823, 4294901760
        %2825 = vmatpush1.msra.mxu0 %v2824
        %v2826 = vand.u32 %v347, 4294901760
        %v2827 = vsub.f32 %v347, %v2826
        %v2828 = vand.u32 %v2827, 4294901760
        %2829 = vmatprep.subr.mxu0 %v2828
        %v2830 = vand.u32 %v346, 4294901760
        %v2831 = vsub.f32 %v346, %v2830
        %v2832 = vand.u32 %v2831, 4294901760
        %2833 = vmatpush1.msra.mxu0 %v2832
        %v2834 = vand.u32 %v349, 4294901760
        %v2835 = vsub.f32 %v349, %v2834
        %v2836 = vand.u32 %v2835, 4294901760
        %2837 = vmatprep.subr.mxu0 %v2836
        %v2838 = vand.u32 %v348, 4294901760
        %v2839 = vsub.f32 %v348, %v2838
        %v2840 = vand.u32 %v2839, 4294901760
        %2841 = vmatpush1.msra.mxu0 %v2840
        %v2842 = vand.u32 %v351, 4294901760
        %v2843 = vsub.f32 %v351, %v2842
        %v2844 = vand.u32 %v2843, 4294901760
        %2845 = vmatprep.subr.mxu0 %v2844
        %v2846 = vand.u32 %v350, 4294901760
        %v2847 = vsub.f32 %v350, %v2846
        %v2848 = vand.u32 %v2847, 4294901760
        %2849 = vmatpush1.msra.mxu0 %v2848
        %v2850 = vand.u32 %v353, 4294901760
        %v2851 = vsub.f32 %v353, %v2850
        %v2852 = vand.u32 %v2851, 4294901760
        %2853 = vmatprep.subr.mxu0 %v2852
        %v2854 = vand.u32 %v352, 4294901760
        %v2855 = vsub.f32 %v352, %v2854
        %v2856 = vand.u32 %v2855, 4294901760
        %2857 = vmatpush1.msra.mxu0 %v2856
        %v2858 = vand.u32 %v355, 4294901760
        %v2859 = vsub.f32 %v355, %v2858
        %v2860 = vand.u32 %v2859, 4294901760
        %2861 = vmatprep.subr.mxu0 %v2860
        %v2862 = vand.u32 %v354, 4294901760
        %v2863 = vsub.f32 %v354, %v2862
        %v2864 = vand.u32 %v2863, 4294901760
        %2865 = vmatpush1.msra.mxu0 %v2864
        %v2866 = vand.u32 %v357, 4294901760
        %v2867 = vsub.f32 %v357, %v2866
        %v2868 = vand.u32 %v2867, 4294901760
        %2869 = vmatprep.subr.mxu0 %v2868
        %v2870 = vand.u32 %v356, 4294901760
        %v2871 = vsub.f32 %v356, %v2870
        %v2872 = vand.u32 %v2871, 4294901760
        %2873 = vmatpush1.msra.mxu0 %v2872
        %v2874 = vand.u32 %v359, 4294901760
        %v2875 = vsub.f32 %v359, %v2874
        %v2876 = vand.u32 %v2875, 4294901760
        %2877 = vmatprep.subr.mxu0 %v2876
        %v2878 = vand.u32 %v358, 4294901760
        %v2879 = vsub.f32 %v358, %v2878
        %v2880 = vand.u32 %v2879, 4294901760
        %2881 = vmatpush1.msra.mxu0 %v2880
        %v2882 = vand.u32 %v361, 4294901760
        %v2883 = vsub.f32 %v361, %v2882
        %v2884 = vand.u32 %v2883, 4294901760
        %2885 = vmatprep.subr.mxu0 %v2884
        %v2886 = vand.u32 %v360, 4294901760
        %v2887 = vsub.f32 %v360, %v2886
        %v2888 = vand.u32 %v2887, 4294901760
        %2889 = vmatpush1.msra.mxu0 %v2888
        %v2890 = vand.u32 %v363, 4294901760
        %v2891 = vsub.f32 %v363, %v2890
        %v2892 = vand.u32 %v2891, 4294901760
        %2893 = vmatprep.subr.mxu0 %v2892
        %v2894 = vand.u32 %v362, 4294901760
        %v2895 = vsub.f32 %v362, %v2894
        %v2896 = vand.u32 %v2895, 4294901760
        %2897 = vmatpush1.msra.mxu0 %v2896
        %v2898 = vand.u32 %v365, 4294901760
        %v2899 = vsub.f32 %v365, %v2898
        %v2900 = vand.u32 %v2899, 4294901760
        %2901 = vmatprep.subr.mxu0 %v2900
        %v2902 = vand.u32 %v364, 4294901760
        %v2903 = vsub.f32 %v364, %v2902
        %v2904 = vand.u32 %v2903, 4294901760
        %2905 = vmatpush1.msra.mxu0 %v2904
        %v2906 = vand.u32 %v367, 4294901760
        %v2907 = vsub.f32 %v367, %v2906
        %v2908 = vand.u32 %v2907, 4294901760
        %2909 = vmatprep.subr.mxu0 %v2908
        %v2910 = vand.u32 %v366, 4294901760
        %v2911 = vsub.f32 %v366, %v2910
        %v2912 = vand.u32 %v2911, 4294901760
        %2913 = vmatpush1.msra.mxu0 %v2912
        %v2914 = vand.u32 %v369, 4294901760
        %v2915 = vsub.f32 %v369, %v2914
        %v2916 = vand.u32 %v2915, 4294901760
        %2917 = vmatprep.subr.mxu0 %v2916
        %v2918 = vand.u32 %v368, 4294901760
        %v2919 = vsub.f32 %v368, %v2918
        %v2920 = vand.u32 %v2919, 4294901760
        %2921 = vmatpush1.msra.mxu0 %v2920
        %v2922 = vand.u32 %v371, 4294901760
        %v2923 = vsub.f32 %v371, %v2922
        %v2924 = vand.u32 %v2923, 4294901760
        %2925 = vmatprep.subr.mxu0 %v2924
        %v2926 = vand.u32 %v370, 4294901760
        %v2927 = vsub.f32 %v370, %v2926
        %v2928 = vand.u32 %v2927, 4294901760
        %2929 = vmatpush1.msra.mxu0 %v2928
        %v2930 = vand.u32 %v373, 4294901760
        %v2931 = vsub.f32 %v373, %v2930
        %v2932 = vand.u32 %v2931, 4294901760
        %2933 = vmatprep.subr.mxu0 %v2932
        %v2934 = vand.u32 %v372, 4294901760
        %v2935 = vsub.f32 %v372, %v2934
        %v2936 = vand.u32 %v2935, 4294901760
        %2937 = vmatpush1.msra.mxu0 %v2936
        %v2938 = vand.u32 %v375, 4294901760
        %v2939 = vsub.f32 %v375, %v2938
        %v2940 = vand.u32 %v2939, 4294901760
        %2941 = vmatprep.subr.mxu0 %v2940
        %v2942 = vand.u32 %v374, 4294901760
        %v2943 = vsub.f32 %v374, %v2942
        %v2944 = vand.u32 %v2943, 4294901760
        %2945 = vmatpush1.msra.mxu0 %v2944
        %v2946 = vand.u32 %v377, 4294901760
        %v2947 = vsub.f32 %v377, %v2946
        %v2948 = vand.u32 %v2947, 4294901760
        %2949 = vmatprep.subr.mxu0 %v2948
        %v2950 = vand.u32 %v376, 4294901760
        %v2951 = vsub.f32 %v376, %v2950
        %v2952 = vand.u32 %v2951, 4294901760
        %2953 = vmatpush1.msra.mxu0 %v2952
        %v2954 = vand.u32 %v251, 4294901760
        %2955 = vmatprep.mubr.f32.mxu0 %v2954
        %v2956 = vand.u32 %v250, 4294901760
        %2957 = vmatmul.mubr.f32.gmra.mrb[0].mxu0 %v2956
        %v2958 = vpop.f32.mrb[0].mxu0
        %v2959 = vadd.f32 %v2322, %v2958
        %v2960 = vpop.f32.mrb[0].mxu0
        %v2961 = vadd.f32 %v2324, %v2960
        %v2962 = vand.u32 %v253, 4294901760
        %2963 = vmatprep.mubr.f32.mxu0 %v2962
        %v2964 = vand.u32 %v252, 4294901760
        %2965 = vmatmul.mubr.f32.gmra.mrb[0].mxu0 %v2964
        %v2966 = vpop.f32.mrb[0].mxu0
        %v2967 = vadd.f32 %v2334, %v2966
        %v2968 = vpop.f32.mrb[0].mxu0
        %v2969 = vadd.f32 %v2336, %v2968
        %v2970 = vand.u32 %v255, 4294901760
        %2971 = vmatprep.mubr.f32.mxu0 %v2970
        %v2972 = vand.u32 %v254, 4294901760
        %2973 = vmatmul.mubr.f32.gmra.mrb[0].mxu0 %v2972
        %v2974 = vpop.f32.mrb[0].mxu0
        %v2975 = vadd.f32 %v2346, %v2974
        %v2976 = vpop.f32.mrb[0].mxu0
        %v2977 = vadd.f32 %v2348, %v2976
        %v2978 = vand.u32 %v257, 4294901760
        %2979 = vmatprep.mubr.f32.mxu0 %v2978
        %v2980 = vand.u32 %v256, 4294901760
        %2981 = vmatmul.mubr.f32.gmra.mrb[0].mxu0 %v2980
        %v2982 = vpop.f32.mrb[0].mxu0
        %v2983 = vadd.f32 %v2358, %v2982
        %v2984 = vpop.f32.mrb[0].mxu0
        %v2985 = vadd.f32 %v2360, %v2984
        %v2986 = vand.u32 %v259, 4294901760
        %2987 = vmatprep.mubr.f32.mxu0 %v2986
        %v2988 = vand.u32 %v258, 4294901760
        %2989 = vmatmul.mubr.f32.gmra.mrb[0].mxu0 %v2988
        %v2990 = vpop.f32.mrb[0].mxu0
        %v2991 = vadd.f32 %v2370, %v2990
        %v2992 = vpop.f32.mrb[0].mxu0
        %v2993 = vadd.f32 %v2372, %v2992
        %v2994 = vand.u32 %v261, 4294901760
        %2995 = vmatprep.mubr.f32.mxu0 %v2994
        %v2996 = vand.u32 %v260, 4294901760
        %2997 = vmatmul.mubr.f32.gmra.mrb[0].mxu0 %v2996
        %v2998 = vpop.f32.mrb[0].mxu0
        %v2999 = vadd.f32 %v2382, %v2998
        %v3000 = vpop.f32.mrb[0].mxu0
        %v3001 = vadd.f32 %v2384, %v3000
        %v3002 = vand.u32 %v263, 4294901760
        %3003 = vmatprep.mubr.f32.mxu0 %v3002
        %v3004 = vand.u32 %v262, 4294901760
        %3005 = vmatmul.mubr.f32.gmra.mrb[0].mxu0 %v3004
        %v3006 = vpop.f32.mrb[0].mxu0
        %v3007 = vadd.f32 %v2394, %v3006
        %v3008 = vpop.f32.mrb[0].mxu0
        %v3009 = vadd.f32 %v2396, %v3008
        %v3010 = vand.u32 %v265, 4294901760
        %3011 = vmatprep.mubr.f32.mxu0 %v3010
        %v3012 = vand.u32 %v264, 4294901760
        %3013 = vmatmul.mubr.f32.gmra.mrb[0].mxu0 %v3012
        %v3014 = vpop.f32.mrb[0].mxu0
        %v3015 = vadd.f32 %v2406, %v3014
        %v3016 = vpop.f32.mrb[0].mxu0
        %v3017 = vadd.f32 %v2408, %v3016
        %v3018 = vand.u32 %v267, 4294901760
        %3019 = vmatprep.mubr.f32.mxu0 %v3018
        %v3020 = vand.u32 %v266, 4294901760
        %3021 = vmatmul.mubr.f32.gmra.mrb[0].mxu0 %v3020
        %v3022 = vpop.f32.mrb[0].mxu0
        %v3023 = vadd.f32 %v2418, %v3022
        %v3024 = vpop.f32.mrb[0].mxu0
        %v3025 = vadd.f32 %v2420, %v3024
        %v3026 = vand.u32 %v269, 4294901760
        %3027 = vmatprep.mubr.f32.mxu0 %v3026
        %v3028 = vand.u32 %v268, 4294901760
        %3029 = vmatmul.mubr.f32.gmra.mrb[0].mxu0 %v3028
        %v3030 = vpop.f32.mrb[0].mxu0
        %v3031 = vadd.f32 %v2430, %v3030
        %v3032 = vpop.f32.mrb[0].mxu0
        %v3033 = vadd.f32 %v2432, %v3032
        %v3034 = vand.u32 %v271, 4294901760
        %3035 = vmatprep.mubr.f32.mxu0 %v3034
        %v3036 = vand.u32 %v270, 4294901760
        %3037 = vmatmul.mubr.f32.gmra.mrb[0].mxu0 %v3036
        %v3038 = vpop.f32.mrb[0].mxu0
        %v3039 = vadd.f32 %v2442, %v3038
        %v3040 = vpop.f32.mrb[0].mxu0
        %v3041 = vadd.f32 %v2444, %v3040
        %v3042 = vand.u32 %v273, 4294901760
        %3043 = vmatprep.mubr.f32.mxu0 %v3042
        %v3044 = vand.u32 %v272, 4294901760
        %3045 = vmatmul.mubr.f32.gmra.mrb[0].mxu0 %v3044
        %v3046 = vpop.f32.mrb[0].mxu0
        %v3047 = vadd.f32 %v2454, %v3046
        %v3048 = vpop.f32.mrb[0].mxu0
        %v3049 = vadd.f32 %v2456, %v3048
        %v3050 = vand.u32 %v275, 4294901760
        %3051 = vmatprep.mubr.f32.mxu0 %v3050
        %v3052 = vand.u32 %v274, 4294901760
        %3053 = vmatmul.mubr.f32.gmra.mrb[0].mxu0 %v3052
        %v3054 = vpop.f32.mrb[0].mxu0
        %v3055 = vadd.f32 %v2466, %v3054
        %v3056 = vpop.f32.mrb[0].mxu0
        %v3057 = vadd.f32 %v2468, %v3056
        %v3058 = vand.u32 %v277, 4294901760
        %3059 = vmatprep.mubr.f32.mxu0 %v3058
        %v3060 = vand.u32 %v276, 4294901760
        %3061 = vmatmul.mubr.f32.gmra.mrb[0].mxu0 %v3060
        %v3062 = vpop.f32.mrb[0].mxu0
        %v3063 = vadd.f32 %v2478, %v3062
        %v3064 = vpop.f32.mrb[0].mxu0
        %v3065 = vadd.f32 %v2480, %v3064
        %v3066 = vand.u32 %v279, 4294901760
        %3067 = vmatprep.mubr.f32.mxu0 %v3066
        %v3068 = vand.u32 %v278, 4294901760
        %3069 = vmatmul.mubr.f32.gmra.mrb[0].mxu0 %v3068
        %v3070 = vpop.f32.mrb[0].mxu0
        %v3071 = vadd.f32 %v2490, %v3070
        %v3072 = vpop.f32.mrb[0].mxu0
        %v3073 = vadd.f32 %v2492, %v3072
        %v3074 = vand.u32 %v281, 4294901760
        %3075 = vmatprep.mubr.f32.mxu0 %v3074
        %v3076 = vand.u32 %v280, 4294901760
        %3077 = vmatmul.mubr.f32.gmra.mrb[0].mxu0 %v3076
        %v3078 = vpop.f32.mrb[0].mxu0
        %v3079 = vadd.f32 %v2502, %v3078
        %v3080 = vpop.f32.mrb[0].mxu0
        %v3081 = vadd.f32 %v2504, %v3080
        %v3082 = vand.u32 %v283, 4294901760
        %3083 = vmatprep.mubr.f32.mxu0 %v3082
        %v3084 = vand.u32 %v282, 4294901760
        %3085 = vmatmul.mubr.f32.gmra.mrb[0].mxu0 %v3084
        %v3086 = vpop.f32.mrb[0].mxu0
        %v3087 = vadd.f32 %v2514, %v3086
        %v3088 = vpop.f32.mrb[0].mxu0
        %v3089 = vadd.f32 %v2516, %v3088
        %v3090 = vand.u32 %v285, 4294901760
        %3091 = vmatprep.mubr.f32.mxu0 %v3090
        %v3092 = vand.u32 %v284, 4294901760
        %3093 = vmatmul.mubr.f32.gmra.mrb[0].mxu0 %v3092
        %v3094 = vpop.f32.mrb[0].mxu0
        %v3095 = vadd.f32 %v2526, %v3094
        %v3096 = vpop.f32.mrb[0].mxu0
        %v3097 = vadd.f32 %v2528, %v3096
        %v3098 = vand.u32 %v287, 4294901760
        %3099 = vmatprep.mubr.f32.mxu0 %v3098
        %v3100 = vand.u32 %v286, 4294901760
        %3101 = vmatmul.mubr.f32.gmra.mrb[0].mxu0 %v3100
        %v3102 = vpop.f32.mrb[0].mxu0
        %v3103 = vadd.f32 %v2538, %v3102
        %v3104 = vpop.f32.mrb[0].mxu0
        %v3105 = vadd.f32 %v2540, %v3104
        %v3106 = vand.u32 %v289, 4294901760
        %3107 = vmatprep.mubr.f32.mxu0 %v3106
        %v3108 = vand.u32 %v288, 4294901760
        %3109 = vmatmul.mubr.f32.gmra.mrb[0].mxu0 %v3108
        %v3110 = vpop.f32.mrb[0].mxu0
        %v3111 = vadd.f32 %v2550, %v3110
        %v3112 = vpop.f32.mrb[0].mxu0
        %v3113 = vadd.f32 %v2552, %v3112
        %v3114 = vand.u32 %v291, 4294901760
        %3115 = vmatprep.mubr.f32.mxu0 %v3114
        %v3116 = vand.u32 %v290, 4294901760
        %3117 = vmatmul.mubr.f32.gmra.mrb[0].mxu0 %v3116
        %v3118 = vpop.f32.mrb[0].mxu0
        %v3119 = vadd.f32 %v2562, %v3118
        %v3120 = vpop.f32.mrb[0].mxu0
        %v3121 = vadd.f32 %v2564, %v3120
        %v3122 = vand.u32 %v293, 4294901760
        %3123 = vmatprep.mubr.f32.mxu0 %v3122
        %v3124 = vand.u32 %v292, 4294901760
        %3125 = vmatmul.mubr.f32.gmra.mrb[0].mxu0 %v3124
        %v3126 = vpop.f32.mrb[0].mxu0
        %v3127 = vadd.f32 %v2574, %v3126
        %v3128 = vpop.f32.mrb[0].mxu0
        %v3129 = vadd.f32 %v2576, %v3128
        %v3130 = vand.u32 %v295, 4294901760
        %3131 = vmatprep.mubr.f32.mxu0 %v3130
        %v3132 = vand.u32 %v294, 4294901760
        %3133 = vmatmul.mubr.f32.gmra.mrb[0].mxu0 %v3132
        %v3134 = vpop.f32.mrb[0].mxu0
        %v3135 = vadd.f32 %v2586, %v3134
        %v3136 = vpop.f32.mrb[0].mxu0
        %v3137 = vadd.f32 %v2588, %v3136
        %v3138 = vand.u32 %v297, 4294901760
        %3139 = vmatprep.mubr.f32.mxu0 %v3138
        %v3140 = vand.u32 %v296, 4294901760
        %3141 = vmatmul.mubr.f32.gmra.mrb[0].mxu0 %v3140
        %v3142 = vpop.f32.mrb[0].mxu0
        %v3143 = vadd.f32 %v2598, %v3142
        %v3144 = vpop.f32.mrb[0].mxu0
        %v3145 = vadd.f32 %v2600, %v3144
        %v3146 = vand.u32 %v299, 4294901760
        %3147 = vmatprep.mubr.f32.mxu0 %v3146
        %v3148 = vand.u32 %v298, 4294901760
        %3149 = vmatmul.mubr.f32.gmra.mrb[0].mxu0 %v3148
        %v3150 = vpop.f32.mrb[0].mxu0
        %v3151 = vadd.f32 %v2610, %v3150
        %v3152 = vpop.f32.mrb[0].mxu0
        %v3153 = vadd.f32 %v2612, %v3152
        %v3154 = vand.u32 %v301, 4294901760
        %3155 = vmatprep.mubr.f32.mxu0 %v3154
        %v3156 = vand.u32 %v300, 4294901760
        %3157 = vmatmul.mubr.f32.gmra.mrb[0].mxu0 %v3156
        %v3158 = vpop.f32.mrb[0].mxu0
        %v3159 = vadd.f32 %v2622, %v3158
        %v3160 = vpop.f32.mrb[0].mxu0
        %v3161 = vadd.f32 %v2624, %v3160
        %v3162 = vand.u32 %v303, 4294901760
        %3163 = vmatprep.mubr.f32.mxu0 %v3162
        %v3164 = vand.u32 %v302, 4294901760
        %3165 = vmatmul.mubr.f32.gmra.mrb[0].mxu0 %v3164
        %v3166 = vpop.f32.mrb[0].mxu0
        %v3167 = vadd.f32 %v2634, %v3166
        %v3168 = vpop.f32.mrb[0].mxu0
        %v3169 = vadd.f32 %v2636, %v3168
        %v3170 = vand.u32 %v305, 4294901760
        %3171 = vmatprep.mubr.f32.mxu0 %v3170
        %v3172 = vand.u32 %v304, 4294901760
        %3173 = vmatmul.mubr.f32.gmra.mrb[0].mxu0 %v3172
        %v3174 = vpop.f32.mrb[0].mxu0
        %v3175 = vadd.f32 %v2646, %v3174
        %v3176 = vpop.f32.mrb[0].mxu0
        %v3177 = vadd.f32 %v2648, %v3176
        %v3178 = vand.u32 %v307, 4294901760
        %3179 = vmatprep.mubr.f32.mxu0 %v3178
        %v3180 = vand.u32 %v306, 4294901760
        %3181 = vmatmul.mubr.f32.gmra.mrb[0].mxu0 %v3180
        %v3182 = vpop.f32.mrb[0].mxu0
        %v3183 = vadd.f32 %v2658, %v3182
        %v3184 = vpop.f32.mrb[0].mxu0
        %v3185 = vadd.f32 %v2660, %v3184
        %v3186 = vand.u32 %v309, 4294901760
        %3187 = vmatprep.mubr.f32.mxu0 %v3186
        %v3188 = vand.u32 %v308, 4294901760
        %3189 = vmatmul.mubr.f32.gmra.mrb[0].mxu0 %v3188
        %v3190 = vpop.f32.mrb[0].mxu0
        %v3191 = vadd.f32 %v2670, %v3190
        %v3192 = vpop.f32.mrb[0].mxu0
        %v3193 = vadd.f32 %v2672, %v3192
        %v3194 = vand.u32 %v311, 4294901760
        %3195 = vmatprep.mubr.f32.mxu0 %v3194
        %v3196 = vand.u32 %v310, 4294901760
        %3197 = vmatmul.mubr.f32.gmra.mrb[0].mxu0 %v3196
        %v3198 = vpop.f32.mrb[0].mxu0
        %v3199 = vadd.f32 %v2682, %v3198
        %v3200 = vpop.f32.mrb[0].mxu0
        %v3201 = vadd.f32 %v2684, %v3200
        %v3202 = vand.u32 %v313, 4294901760
        %3203 = vmatprep.mubr.f32.mxu0 %v3202
        %v3204 = vand.u32 %v312, 4294901760
        %3205 = vmatmul.mubr.f32.gmra.mrb[0].mxu0 %v3204
        %v3206 = vpop.f32.mrb[0].mxu0
        %v3207 = vadd.f32 %v2694, %v3206
        %v3208 = vpop.f32.mrb[0].mxu0
        %v3209 = vadd.f32 %v2696, %v3208
        %3210 = vdwg.mxu0
        %v3211 = vand.u32 %v315, 4294901760
        %3212 = vmatprep.subr.mxu0 %v3211
        %v3213 = vand.u32 %v314, 4294901760
        %3214 = vmatpush1.msra.mxu0 %v3213
        %v3215 = vand.u32 %v317, 4294901760
        %3216 = vmatprep.subr.mxu0 %v3215
        %v3217 = vand.u32 %v316, 4294901760
        %3218 = vmatpush1.msra.mxu0 %v3217
        %v3219 = vand.u32 %v319, 4294901760
        %3220 = vmatprep.subr.mxu0 %v3219
        %v3221 = vand.u32 %v318, 4294901760
        %3222 = vmatpush1.msra.mxu0 %v3221
        %v3223 = vand.u32 %v321, 4294901760
        %3224 = vmatprep.subr.mxu0 %v3223
        %v3225 = vand.u32 %v320, 4294901760
        %3226 = vmatpush1.msra.mxu0 %v3225
        %v3227 = vand.u32 %v323, 4294901760
        %3228 = vmatprep.subr.mxu0 %v3227
        %v3229 = vand.u32 %v322, 4294901760
        %3230 = vmatpush1.msra.mxu0 %v3229
        %v3231 = vand.u32 %v325, 4294901760
        %3232 = vmatprep.subr.mxu0 %v3231
        %v3233 = vand.u32 %v324, 4294901760
        %3234 = vmatpush1.msra.mxu0 %v3233
        %v3235 = vand.u32 %v327, 4294901760
        %3236 = vmatprep.subr.mxu0 %v3235
        %v3237 = vand.u32 %v326, 4294901760
        %3238 = vmatpush1.msra.mxu0 %v3237
        %v3239 = vand.u32 %v329, 4294901760
        %3240 = vmatprep.subr.mxu0 %v3239
        %v3241 = vand.u32 %v328, 4294901760
        %3242 = vmatpush1.msra.mxu0 %v3241
        %v3243 = vand.u32 %v331, 4294901760
        %3244 = vmatprep.subr.mxu0 %v3243
        %v3245 = vand.u32 %v330, 4294901760
        %3246 = vmatpush1.msra.mxu0 %v3245
        %v3247 = vand.u32 %v333, 4294901760
        %3248 = vmatprep.subr.mxu0 %v3247
        %v3249 = vand.u32 %v332, 4294901760
        %3250 = vmatpush1.msra.mxu0 %v3249
        %v3251 = vand.u32 %v335, 4294901760
        %3252 = vmatprep.subr.mxu0 %v3251
        %v3253 = vand.u32 %v334, 4294901760
        %3254 = vmatpush1.msra.mxu0 %v3253
        %v3255 = vand.u32 %v337, 4294901760
        %3256 = vmatprep.subr.mxu0 %v3255
        %v3257 = vand.u32 %v336, 4294901760
        %3258 = vmatpush1.msra.mxu0 %v3257
        %v3259 = vand.u32 %v339, 4294901760
        %3260 = vmatprep.subr.mxu0 %v3259
        %v3261 = vand.u32 %v338, 4294901760
        %3262 = vmatpush1.msra.mxu0 %v3261
        %v3263 = vand.u32 %v341, 4294901760
        %3264 = vmatprep.subr.mxu0 %v3263
        %v3265 = vand.u32 %v340, 4294901760
        %3266 = vmatpush1.msra.mxu0 %v3265
        %v3267 = vand.u32 %v343, 4294901760
        %3268 = vmatprep.subr.mxu0 %v3267
        %v3269 = vand.u32 %v342, 4294901760
        %3270 = vmatpush1.msra.mxu0 %v3269
        %v3271 = vand.u32 %v345, 4294901760
        %3272 = vmatprep.subr.mxu0 %v3271
        %v3273 = vand.u32 %v344, 4294901760
        %3274 = vmatpush1.msra.mxu0 %v3273
        %v3275 = vand.u32 %v347, 4294901760
        %3276 = vmatprep.subr.mxu0 %v3275
        %v3277 = vand.u32 %v346, 4294901760
        %3278 = vmatpush1.msra.mxu0 %v3277
        %v3279 = vand.u32 %v349, 4294901760
        %3280 = vmatprep.subr.mxu0 %v3279
        %v3281 = vand.u32 %v348, 4294901760
        %3282 = vmatpush1.msra.mxu0 %v3281
        %v3283 = vand.u32 %v351, 4294901760
        %3284 = vmatprep.subr.mxu0 %v3283
        %v3285 = vand.u32 %v350, 4294901760
        %3286 = vmatpush1.msra.mxu0 %v3285
        %v3287 = vand.u32 %v353, 4294901760
        %3288 = vmatprep.subr.mxu0 %v3287
        %v3289 = vand.u32 %v352, 4294901760
        %3290 = vmatpush1.msra.mxu0 %v3289
        %v3291 = vand.u32 %v355, 4294901760
        %3292 = vmatprep.subr.mxu0 %v3291
        %v3293 = vand.u32 %v354, 4294901760
        %3294 = vmatpush1.msra.mxu0 %v3293
        %v3295 = vand.u32 %v357, 4294901760
        %3296 = vmatprep.subr.mxu0 %v3295
        %v3297 = vand.u32 %v356, 4294901760
        %3298 = vmatpush1.msra.mxu0 %v3297
        %v3299 = vand.u32 %v359, 4294901760
        %3300 = vmatprep.subr.mxu0 %v3299
        %v3301 = vand.u32 %v358, 4294901760
        %3302 = vmatpush1.msra.mxu0 %v3301
        %v3303 = vand.u32 %v361, 4294901760
        %3304 = vmatprep.subr.mxu0 %v3303
        %v3305 = vand.u32 %v360, 4294901760
        %3306 = vmatpush1.msra.mxu0 %v3305
        %v3307 = vand.u32 %v363, 4294901760
        %3308 = vmatprep.subr.mxu0 %v3307
        %v3309 = vand.u32 %v362, 4294901760
        %3310 = vmatpush1.msra.mxu0 %v3309
        %v3311 = vand.u32 %v365, 4294901760
        %3312 = vmatprep.subr.mxu0 %v3311
        %v3313 = vand.u32 %v364, 4294901760
        %3314 = vmatpush1.msra.mxu0 %v3313
        %v3315 = vand.u32 %v367, 4294901760
        %3316 = vmatprep.subr.mxu0 %v3315
        %v3317 = vand.u32 %v366, 4294901760
        %3318 = vmatpush1.msra.mxu0 %v3317
        %v3319 = vand.u32 %v369, 4294901760
        %3320 = vmatprep.subr.mxu0 %v3319
        %v3321 = vand.u32 %v368, 4294901760
        %3322 = vmatpush1.msra.mxu0 %v3321
        %v3323 = vand.u32 %v371, 4294901760
        %3324 = vmatprep.subr.mxu0 %v3323
        %v3325 = vand.u32 %v370, 4294901760
        %3326 = vmatpush1.msra.mxu0 %v3325
        %v3327 = vand.u32 %v373, 4294901760
        %3328 = vmatprep.subr.mxu0 %v3327
        %v3329 = vand.u32 %v372, 4294901760
        %3330 = vmatpush1.msra.mxu0 %v3329
        %v3331 = vand.u32 %v375, 4294901760
        %3332 = vmatprep.subr.mxu0 %v3331
        %v3333 = vand.u32 %v374, 4294901760
        %3334 = vmatpush1.msra.mxu0 %v3333
        %v3335 = vand.u32 %v377, 4294901760
        %3336 = vmatprep.subr.mxu0 %v3335
        %v3337 = vand.u32 %v376, 4294901760
        %3338 = vmatpush1.msra.mxu0 %v3337
        %v3339 = vand.u32 %v251, 4294901760
        %3340 = vmatprep.mubr.f32.mxu0 %v3339
        %v3341 = vand.u32 %v250, 4294901760
        %3342 = vmatmul.mubr.f32.gmra.mrb[0].mxu0 %v3341
        %v3343 = vpop.f32.mrb[0].mxu0
        %v3344 = vadd.f32 %v2959, %v3343
        %v3345 = vpop.f32.mrb[0].mxu0
        %v3346 = vadd.f32 %v2961, %v3345
        %v3347 = vand.u32 %v253, 4294901760
        %3348 = vmatprep.mubr.f32.mxu0 %v3347
        %v3349 = vand.u32 %v252, 4294901760
        %3350 = vmatmul.mubr.f32.gmra.mrb[0].mxu0 %v3349
        %v3351 = vpop.f32.mrb[0].mxu0
        %v3352 = vadd.f32 %v2967, %v3351
        %v3353 = vpop.f32.mrb[0].mxu0
        %v3354 = vadd.f32 %v2969, %v3353
        %v3355 = vand.u32 %v255, 4294901760
        %3356 = vmatprep.mubr.f32.mxu0 %v3355
        %v3357 = vand.u32 %v254, 4294901760
        %3358 = vmatmul.mubr.f32.gmra.mrb[0].mxu0 %v3357
        %v3359 = vpop.f32.mrb[0].mxu0
        %v3360 = vadd.f32 %v2975, %v3359
        %v3361 = vpop.f32.mrb[0].mxu0
        %v3362 = vadd.f32 %v2977, %v3361
        %v3363 = vand.u32 %v257, 4294901760
        %3364 = vmatprep.mubr.f32.mxu0 %v3363
        %v3365 = vand.u32 %v256, 4294901760
        %3366 = vmatmul.mubr.f32.gmra.mrb[0].mxu0 %v3365
        %v3367 = vpop.f32.mrb[0].mxu0
        %v3368 = vadd.f32 %v2983, %v3367
        %v3369 = vpop.f32.mrb[0].mxu0
        %v3370 = vadd.f32 %v2985, %v3369
        %v3371 = vand.u32 %v259, 4294901760
        %3372 = vmatprep.mubr.f32.mxu0 %v3371
        %v3373 = vand.u32 %v258, 4294901760
        %3374 = vmatmul.mubr.f32.gmra.mrb[0].mxu0 %v3373
        %v3375 = vpop.f32.mrb[0].mxu0
        %v3376 = vadd.f32 %v2991, %v3375
        %v3377 = vpop.f32.mrb[0].mxu0
        %v3378 = vadd.f32 %v2993, %v3377
        %v3379 = vand.u32 %v261, 4294901760
        %3380 = vmatprep.mubr.f32.mxu0 %v3379
        %v3381 = vand.u32 %v260, 4294901760
        %3382 = vmatmul.mubr.f32.gmra.mrb[0].mxu0 %v3381
        %v3383 = vpop.f32.mrb[0].mxu0
        %v3384 = vadd.f32 %v2999, %v3383
        %v3385 = vpop.f32.mrb[0].mxu0
        %v3386 = vadd.f32 %v3001, %v3385
        %v3387 = vand.u32 %v263, 4294901760
        %3388 = vmatprep.mubr.f32.mxu0 %v3387
        %v3389 = vand.u32 %v262, 4294901760
        %3390 = vmatmul.mubr.f32.gmra.mrb[0].mxu0 %v3389
        %v3391 = vpop.f32.mrb[0].mxu0
        %v3392 = vadd.f32 %v3007, %v3391
        %v3393 = vpop.f32.mrb[0].mxu0
        %v3394 = vadd.f32 %v3009, %v3393
        %v3395 = vand.u32 %v265, 4294901760
        %3396 = vmatprep.mubr.f32.mxu0 %v3395
        %v3397 = vand.u32 %v264, 4294901760
        %3398 = vmatmul.mubr.f32.gmra.mrb[0].mxu0 %v3397
        %v3399 = vpop.f32.mrb[0].mxu0
        %v3400 = vadd.f32 %v3015, %v3399
        %v3401 = vpop.f32.mrb[0].mxu0
        %v3402 = vadd.f32 %v3017, %v3401
        %v3403 = vand.u32 %v267, 4294901760
        %3404 = vmatprep.mubr.f32.mxu0 %v3403
        %v3405 = vand.u32 %v266, 4294901760
        %3406 = vmatmul.mubr.f32.gmra.mrb[0].mxu0 %v3405
        %v3407 = vpop.f32.mrb[0].mxu0
        %v3408 = vadd.f32 %v3023, %v3407
        %v3409 = vpop.f32.mrb[0].mxu0
        %v3410 = vadd.f32 %v3025, %v3409
        %v3411 = vand.u32 %v269, 4294901760
        %3412 = vmatprep.mubr.f32.mxu0 %v3411
        %v3413 = vand.u32 %v268, 4294901760
        %3414 = vmatmul.mubr.f32.gmra.mrb[0].mxu0 %v3413
        %v3415 = vpop.f32.mrb[0].mxu0
        %v3416 = vadd.f32 %v3031, %v3415
        %v3417 = vpop.f32.mrb[0].mxu0
        %v3418 = vadd.f32 %v3033, %v3417
        %v3419 = vand.u32 %v271, 4294901760
        %3420 = vmatprep.mubr.f32.mxu0 %v3419
        %v3421 = vand.u32 %v270, 4294901760
        %3422 = vmatmul.mubr.f32.gmra.mrb[0].mxu0 %v3421
        %v3423 = vpop.f32.mrb[0].mxu0
        %v3424 = vadd.f32 %v3039, %v3423
        %v3425 = vpop.f32.mrb[0].mxu0
        %v3426 = vadd.f32 %v3041, %v3425
        %v3427 = vand.u32 %v273, 4294901760
        %3428 = vmatprep.mubr.f32.mxu0 %v3427
        %v3429 = vand.u32 %v272, 4294901760
        %3430 = vmatmul.mubr.f32.gmra.mrb[0].mxu0 %v3429
        %v3431 = vpop.f32.mrb[0].mxu0
        %v3432 = vadd.f32 %v3047, %v3431
        %v3433 = vpop.f32.mrb[0].mxu0
        %v3434 = vadd.f32 %v3049, %v3433
        %v3435 = vand.u32 %v275, 4294901760
        %3436 = vmatprep.mubr.f32.mxu0 %v3435
        %v3437 = vand.u32 %v274, 4294901760
        %3438 = vmatmul.mubr.f32.gmra.mrb[0].mxu0 %v3437
        %v3439 = vpop.f32.mrb[0].mxu0
        %v3440 = vadd.f32 %v3055, %v3439
        %v3441 = vpop.f32.mrb[0].mxu0
        %v3442 = vadd.f32 %v3057, %v3441
        %v3443 = vand.u32 %v277, 4294901760
        %3444 = vmatprep.mubr.f32.mxu0 %v3443
        %v3445 = vand.u32 %v276, 4294901760
        %3446 = vmatmul.mubr.f32.gmra.mrb[0].mxu0 %v3445
        %v3447 = vpop.f32.mrb[0].mxu0
        %v3448 = vadd.f32 %v3063, %v3447
        %v3449 = vpop.f32.mrb[0].mxu0
        %v3450 = vadd.f32 %v3065, %v3449
        %v3451 = vand.u32 %v279, 4294901760
        %3452 = vmatprep.mubr.f32.mxu0 %v3451
        %v3453 = vand.u32 %v278, 4294901760
        %3454 = vmatmul.mubr.f32.gmra.mrb[0].mxu0 %v3453
        %v3455 = vpop.f32.mrb[0].mxu0
        %v3456 = vadd.f32 %v3071, %v3455
        %v3457 = vpop.f32.mrb[0].mxu0
        %v3458 = vadd.f32 %v3073, %v3457
        %v3459 = vand.u32 %v281, 4294901760
        %3460 = vmatprep.mubr.f32.mxu0 %v3459
        %v3461 = vand.u32 %v280, 4294901760
        %3462 = vmatmul.mubr.f32.gmra.mrb[0].mxu0 %v3461
        %v3463 = vpop.f32.mrb[0].mxu0
        %v3464 = vadd.f32 %v3079, %v3463
        %v3465 = vpop.f32.mrb[0].mxu0
        %v3466 = vadd.f32 %v3081, %v3465
        %v3467 = vand.u32 %v283, 4294901760
        %3468 = vmatprep.mubr.f32.mxu0 %v3467
        %v3469 = vand.u32 %v282, 4294901760
        %3470 = vmatmul.mubr.f32.gmra.mrb[0].mxu0 %v3469
        %v3471 = vpop.f32.mrb[0].mxu0
        %v3472 = vadd.f32 %v3087, %v3471
        %v3473 = vpop.f32.mrb[0].mxu0
        %v3474 = vadd.f32 %v3089, %v3473
        %v3475 = vand.u32 %v285, 4294901760
        %3476 = vmatprep.mubr.f32.mxu0 %v3475
        %v3477 = vand.u32 %v284, 4294901760
        %3478 = vmatmul.mubr.f32.gmra.mrb[0].mxu0 %v3477
        %v3479 = vpop.f32.mrb[0].mxu0
        %v3480 = vadd.f32 %v3095, %v3479
        %v3481 = vpop.f32.mrb[0].mxu0
        %v3482 = vadd.f32 %v3097, %v3481
        %v3483 = vand.u32 %v287, 4294901760
        %3484 = vmatprep.mubr.f32.mxu0 %v3483
        %v3485 = vand.u32 %v286, 4294901760
        %3486 = vmatmul.mubr.f32.gmra.mrb[0].mxu0 %v3485
        %v3487 = vpop.f32.mrb[0].mxu0
        %v3488 = vadd.f32 %v3103, %v3487
        %v3489 = vpop.f32.mrb[0].mxu0
        %v3490 = vadd.f32 %v3105, %v3489
        %v3491 = vand.u32 %v289, 4294901760
        %3492 = vmatprep.mubr.f32.mxu0 %v3491
        %v3493 = vand.u32 %v288, 4294901760
        %3494 = vmatmul.mubr.f32.gmra.mrb[0].mxu0 %v3493
        %v3495 = vpop.f32.mrb[0].mxu0
        %v3496 = vadd.f32 %v3111, %v3495
        %v3497 = vpop.f32.mrb[0].mxu0
        %v3498 = vadd.f32 %v3113, %v3497
        %v3499 = vand.u32 %v291, 4294901760
        %3500 = vmatprep.mubr.f32.mxu0 %v3499
        %v3501 = vand.u32 %v290, 4294901760
        %3502 = vmatmul.mubr.f32.gmra.mrb[0].mxu0 %v3501
        %v3503 = vpop.f32.mrb[0].mxu0
        %v3504 = vadd.f32 %v3119, %v3503
        %v3505 = vpop.f32.mrb[0].mxu0
        %v3506 = vadd.f32 %v3121, %v3505
        %v3507 = vand.u32 %v293, 4294901760
        %3508 = vmatprep.mubr.f32.mxu0 %v3507
        %v3509 = vand.u32 %v292, 4294901760
        %3510 = vmatmul.mubr.f32.gmra.mrb[0].mxu0 %v3509
        %v3511 = vpop.f32.mrb[0].mxu0
        %v3512 = vadd.f32 %v3127, %v3511
        %v3513 = vpop.f32.mrb[0].mxu0
        %v3514 = vadd.f32 %v3129, %v3513
        %v3515 = vand.u32 %v295, 4294901760
        %3516 = vmatprep.mubr.f32.mxu0 %v3515
        %v3517 = vand.u32 %v294, 4294901760
        %3518 = vmatmul.mubr.f32.gmra.mrb[0].mxu0 %v3517
        %v3519 = vpop.f32.mrb[0].mxu0
        %v3520 = vadd.f32 %v3135, %v3519
        %v3521 = vpop.f32.mrb[0].mxu0
        %v3522 = vadd.f32 %v3137, %v3521
        %v3523 = vand.u32 %v297, 4294901760
        %3524 = vmatprep.mubr.f32.mxu0 %v3523
        %v3525 = vand.u32 %v296, 4294901760
        %3526 = vmatmul.mubr.f32.gmra.mrb[0].mxu0 %v3525
        %v3527 = vpop.f32.mrb[0].mxu0
        %v3528 = vadd.f32 %v3143, %v3527
        %v3529 = vpop.f32.mrb[0].mxu0
        %v3530 = vadd.f32 %v3145, %v3529
        %v3531 = vand.u32 %v299, 4294901760
        %3532 = vmatprep.mubr.f32.mxu0 %v3531
        %v3533 = vand.u32 %v298, 4294901760
        %3534 = vmatmul.mubr.f32.gmra.mrb[0].mxu0 %v3533
        %v3535 = vpop.f32.mrb[0].mxu0
        %v3536 = vadd.f32 %v3151, %v3535
        %v3537 = vpop.f32.mrb[0].mxu0
        %v3538 = vadd.f32 %v3153, %v3537
        %v3539 = vand.u32 %v301, 4294901760
        %3540 = vmatprep.mubr.f32.mxu0 %v3539
        %v3541 = vand.u32 %v300, 4294901760
        %3542 = vmatmul.mubr.f32.gmra.mrb[0].mxu0 %v3541
        %v3543 = vpop.f32.mrb[0].mxu0
        %v3544 = vadd.f32 %v3159, %v3543
        %v3545 = vpop.f32.mrb[0].mxu0
        %v3546 = vadd.f32 %v3161, %v3545
        %v3547 = vand.u32 %v303, 4294901760
        %3548 = vmatprep.mubr.f32.mxu0 %v3547
        %v3549 = vand.u32 %v302, 4294901760
        %3550 = vmatmul.mubr.f32.gmra.mrb[0].mxu0 %v3549
        %v3551 = vpop.f32.mrb[0].mxu0
        %v3552 = vadd.f32 %v3167, %v3551
        %v3553 = vpop.f32.mrb[0].mxu0
        %v3554 = vadd.f32 %v3169, %v3553
        %v3555 = vand.u32 %v305, 4294901760
        %3556 = vmatprep.mubr.f32.mxu0 %v3555
        %v3557 = vand.u32 %v304, 4294901760
        %3558 = vmatmul.mubr.f32.gmra.mrb[0].mxu0 %v3557
        %v3559 = vpop.f32.mrb[0].mxu0
        %v3560 = vadd.f32 %v3175, %v3559
        %v3561 = vpop.f32.mrb[0].mxu0
        %v3562 = vadd.f32 %v3177, %v3561
        %v3563 = vand.u32 %v307, 4294901760
        %3564 = vmatprep.mubr.f32.mxu0 %v3563
        %v3565 = vand.u32 %v306, 4294901760
        %3566 = vmatmul.mubr.f32.gmra.mrb[0].mxu0 %v3565
        %v3567 = vpop.f32.mrb[0].mxu0
        %v3568 = vadd.f32 %v3183, %v3567
        %v3569 = vpop.f32.mrb[0].mxu0
        %v3570 = vadd.f32 %v3185, %v3569
        %v3571 = vand.u32 %v309, 4294901760
        %3572 = vmatprep.mubr.f32.mxu0 %v3571
        %v3573 = vand.u32 %v308, 4294901760
        %3574 = vmatmul.mubr.f32.gmra.mrb[0].mxu0 %v3573
        %v3575 = vpop.f32.mrb[0].mxu0
        %v3576 = vadd.f32 %v3191, %v3575
        %v3577 = vpop.f32.mrb[0].mxu0
        %v3578 = vadd.f32 %v3193, %v3577
        %v3579 = vand.u32 %v311, 4294901760
        %3580 = vmatprep.mubr.f32.mxu0 %v3579
        %v3581 = vand.u32 %v310, 4294901760
        %3582 = vmatmul.mubr.f32.gmra.mrb[0].mxu0 %v3581
        %v3583 = vpop.f32.mrb[0].mxu0
        %v3584 = vadd.f32 %v3199, %v3583
        %v3585 = vpop.f32.mrb[0].mxu0
        %v3586 = vadd.f32 %v3201, %v3585
        %v3587 = vand.u32 %v313, 4294901760
        %3588 = vmatprep.mubr.f32.mxu0 %v3587
        %v3589 = vand.u32 %v312, 4294901760
        %3590 = vmatmul.mubr.f32.gmra.mrb[0].mxu0 %v3589
        %v3591 = vpop.f32.mrb[0].mxu0
        %v3592 = vadd.f32 %v3207, %v3591
        %v3593 = vpop.f32.mrb[0].mxu0
        %v3594 = vadd.f32 %v3209, %v3593
        %3595 = vdwg.mxu0
        %3596 = vst [vmem:[%s240] sm:$0xff] %v3344
        %3597 = vst [vmem:[%s240 + $0x8] sm:$0xff] %v3346
        %3598 = vst [vmem:[%s240 + $0x10] sm:$0xff] %v3352
        %3599 = vst [vmem:[%s240 + $0x18] sm:$0xff] %v3354
        %3600 = vst [vmem:[%s240 + $0x20] sm:$0xff] %v3360
        %3601 = vst [vmem:[%s240 + $0x28] sm:$0xff] %v3362
        %3602 = vst [vmem:[%s240 + $0x30] sm:$0xff] %v3368
        %3603 = vst [vmem:[%s240 + $0x38] sm:$0xff] %v3370
        %3604 = vst [vmem:[%s240 + $0x40] sm:$0xff] %v3376
        %3605 = vst [vmem:[%s240 + $0x48] sm:$0xff] %v3378
        %3606 = vst [vmem:[%s240 + $0x50] sm:$0xff] %v3384
        %3607 = vst [vmem:[%s240 + $0x58] sm:$0xff] %v3386
        %3608 = vst [vmem:[%s240 + $0x60] sm:$0xff] %v3392
        %3609 = vst [vmem:[%s240 + $0x68] sm:$0xff] %v3394
        %3610 = vst [vmem:[%s240 + $0x70] sm:$0xff] %v3400
        %3611 = vst [vmem:[%s240 + $0x78] sm:$0xff] %v3402
        %3612 = vst [vmem:[%s240 + $0x80] sm:$0xff] %v3408
        %3613 = vst [vmem:[%s240 + $0x88] sm:$0xff] %v3410
        %3614 = vst [vmem:[%s240 + $0x90] sm:$0xff] %v3416
        %3615 = vst [vmem:[%s240 + $0x98] sm:$0xff] %v3418
        %3616 = vst [vmem:[%s240 + $0xa0] sm:$0xff] %v3424
        %3617 = vst [vmem:[%s240 + $0xa8] sm:$0xff] %v3426
        %3618 = vst [vmem:[%s240 + $0xb0] sm:$0xff] %v3432
        %3619 = vst [vmem:[%s240 + $0xb8] sm:$0xff] %v3434
        %3620 = vst [vmem:[%s240 + $0xc0] sm:$0xff] %v3440
        %3621 = vst [vmem:[%s240 + $0xc8] sm:$0xff] %v3442
        %3622 = vst [vmem:[%s240 + $0xd0] sm:$0xff] %v3448
        %3623 = vst [vmem:[%s240 + $0xd8] sm:$0xff] %v3450
        %3624 = vst [vmem:[%s240 + $0xe0] sm:$0xff] %v3456
        %3625 = vst [vmem:[%s240 + $0xe8] sm:$0xff] %v3458
        %3626 = vst [vmem:[%s240 + $0xf0] sm:$0xff] %v3464
        %3627 = vst [vmem:[%s240 + $0xf8] sm:$0xff] %v3466
        %3628 = vst [vmem:[%s240 + $0x100] sm:$0xff] %v3472
        %3629 = vst [vmem:[%s240 + $0x108] sm:$0xff] %v3474
        %3630 = vst [vmem:[%s240 + $0x110] sm:$0xff] %v3480
        %3631 = vst [vmem:[%s240 + $0x118] sm:$0xff] %v3482
        %3632 = vst [vmem:[%s240 + $0x120] sm:$0xff] %v3488
        %3633 = vst [vmem:[%s240 + $0x128] sm:$0xff] %v3490
        %3634 = vst [vmem:[%s240 + $0x130] sm:$0xff] %v3496
        %3635 = vst [vmem:[%s240 + $0x138] sm:$0xff] %v3498
        %3636 = vst [vmem:[%s240 + $0x140] sm:$0xff] %v3504
        %3637 = vst [vmem:[%s240 + $0x148] sm:$0xff] %v3506
        %3638 = vst [vmem:[%s240 + $0x150] sm:$0xff] %v3512
        %3639 = vst [vmem:[%s240 + $0x158] sm:$0xff] %v3514
        %3640 = vst [vmem:[%s240 + $0x160] sm:$0xff] %v3520
        %3641 = vst [vmem:[%s240 + $0x168] sm:$0xff] %v3522
        %3642 = vst [vmem:[%s240 + $0x170] sm:$0xff] %v3528
        %3643 = vst [vmem:[%s240 + $0x178] sm:$0xff] %v3530
        %3644 = vst [vmem:[%s240 + $0x180] sm:$0xff] %v3536
        %3645 = vst [vmem:[%s240 + $0x188] sm:$0xff] %v3538
        %3646 = vst [vmem:[%s240 + $0x190] sm:$0xff] %v3544
        %3647 = vst [vmem:[%s240 + $0x198] sm:$0xff] %v3546
        %3648 = vst [vmem:[%s240 + $0x1a0] sm:$0xff] %v3552
        %3649 = vst [vmem:[%s240 + $0x1a8] sm:$0xff] %v3554
        %3650 = vst [vmem:[%s240 + $0x1b0] sm:$0xff] %v3560
        %3651 = vst [vmem:[%s240 + $0x1b8] sm:$0xff] %v3562
        %3652 = vst [vmem:[%s240 + $0x1c0] sm:$0xff] %v3568
        %3653 = vst [vmem:[%s240 + $0x1c8] sm:$0xff] %v3570
        %3654 = vst [vmem:[%s240 + $0x1d0] sm:$0xff] %v3576
        %3655 = vst [vmem:[%s240 + $0x1d8] sm:$0xff] %v3578
        %3656 = vst [vmem:[%s240 + $0x1e0] sm:$0xff] %v3584
        %3657 = vst [vmem:[%s240 + $0x1e8] sm:$0xff] %v3586
        %3658 = vst [vmem:[%s240 + $0x1f0] sm:$0xff] %v3592
        %3659 = vst [vmem:[%s240 + $0x1f8] sm:$0xff] %v3594
        %s3660 = sand.u32 %s121, 1
        %s3661 = scalar_lea.sflag [#allocation4], %s3660
        %s3662 = sand.u32 %s121, 1
        %s3663 = smul.addr %s3662, 512
        %s3664 = scalar_lea.vmem [#allocation7], %s3663
        // Predicated region
        $region41: #{tpu_custom_call.1} parent=31 // pred_check
          %p3665 = pneg %p131
        $region42: #{tpu_custom_call.1} parent=31 // pred_check_branch
          %3667 = sbr.rel (%p3665) target = $region44
        $region43: #{tpu_custom_call.1} parent=31 // pred_region
          %s3668 = smul.u32 32, %s25
          %s3669 = smul.u32 2, %s26
          %s3671 = ssub.s32 8192, 8192
          %3672 = vsyncadd %s3661, %s3671
          %s3673 = smul.addr %s3668, 4
          %s3674 = sadd.s32 %s3669, %s3673
          %s3675 = smul.addr %s3674, 128
          %s3676 = scalar_lea.hbm %s3, %s3675
          %s3677 = sshll.u32 %s3664, 4
          %s3678 = int_to_ptr.vmem [resolvable:$true] %s3677
          %3683 = dma.vmem_to_hbm [thread:$0]  %s3678, 8192, %s3676, %s3661, 256, 512, 16
        $region44: #{tpu_custom_call.1} parent=31 // pred_fallthru
          _
      $region32: #{tpu_custom_call.1} parent=5 // pred_fallthru
        _
      %p3684 = scmp.le.s32.totalorder 2, %s16
      // Predicated region
      $region45: #{tpu_custom_call.1} parent=5 // pred_check
        %p3685 = pneg %p3684
      $region46: #{tpu_custom_call.1} parent=5 // pred_check_branch
        %3687 = sbr.rel (%p3685) target = $region48
      $region47: #{tpu_custom_call.1} parent=5 // pred_region
        %s3688 = ssub.s32 %s16, 2
        // Predicated region
        $region49: #{tpu_custom_call.1} parent=47 // pred_check
          %p3689 = pneg %p137
        $region50: #{tpu_custom_call.1} parent=47 // pred_check_branch
          %3691 = sbr.rel (%p3689) target = $region52
        $region51: #{tpu_custom_call.1} parent=47 // pred_region
          %s3692 = sand.u32 %s122, 1
          %s3693 = scalar_lea.sflag [#allocation4], %s3692
          %s3694 = sand.u32 %s122, 1
          %s3695 = smul.addr %s3694, 512
          %s3696 = scalar_lea.vmem [#allocation7], %s3695
          %3697 = dma.done %s3693, 8192
        $region52: #{tpu_custom_call.1} parent=47 // pred_fallthru
          _
      $region48: #{tpu_custom_call.1} parent=5 // pred_fallthru
        _
    $region6: #{tpu_custom_call.1} parent=1 // loop_footer
      %s20 = sadd.s32 1, %s16
    $region7: #{tpu_custom_call.1} parent=1 // loop_footer_branch
      %15 = sbr.rel target = $region3
    $region8: #{tpu_custom_call.1} parent=1 // loop_exit
      _
    %3698 = vsyncpa [#allocation3], 1
    %s3699 = scalar_lea.sflag [#allocation3], 1
    %3700 = vsyncpa %s3699, 1
    %3701 = vsyncpa [#allocation6], 1
    %s3702 = scalar_lea.sflag [#allocation6], 1
    %3703 = vsyncpa %s3702, 1
    %3704 = vsyncpa [#allocation4], 1
    %s3705 = scalar_lea.sflag [#allocation4], 1
    %3706 = vsyncpa %s3705, 1

</llo_original>
